<compile_context>
chip_gen: v6e
topology: v6e:2x2x1
jax: 0.10.0
libtpu: 0.0.40
codegen_flags: <defaults>
</compile_context>

<pallas_src>
import jax
import jax.numpy as jnp
from jax.experimental import pallas as pl
from jax.experimental.pallas import tpu as pltpu


# ---- static problem configuration (matches the PyTorch module defaults) ----
B = 2          # batch
T = 8          # sequence length
EMBED = 50     # word2vec embedding dim
H = 64         # LSTM hidden size
NOUT = 2       # classifier outputs

BP = 8         # batch padded to one full sublane tile
DP = 64        # embedding dim padded to 64 lanes
G = 8 * H      # 512: fused gate width [i(2H)|f(2H)|o(2H)|g(2H)], each 2H = [fwd|bwd]
ROWS = 2 * H   # every packed weight block is 128 rows tall

OFF_IH0, OFF_HH0, OFF_IH1, OFF_HH1, OFF_FC = (k * ROWS for k in range(5))
W_ROWS = 5 * ROWS


# ------------------------------- kernel ------------------------------------ #

def _lstm_step(gin, h, c, whh_ref, c_mask=None):
    """One fused (fwd+bwd) LSTM step on the interleaved gate layout.

    gin: (BP, 8H) f32 hoisted gate inputs (x @ W_ih + b).
    h, c: (BP, 2H) f32 carried state, lanes [0:H] = fwd, [H:2H] = bwd.
    whh_ref: (2H, 8H) bf16 block-interleaved recurrent weights (ref view).
    c_mask: optional (BP, 2H) multiplier applied to c_prev (layer-1 trick).
    """
    f32 = jnp.float32
    gates = gin + jnp.dot(h.astype(jnp.bfloat16), whh_ref[...],
                          preferred_element_type=f32)
    # logistic(x) = 0.5 * tanh(0.5 x) + 0.5 : one EUP op instead of exp + div.
    s = 0.5 * jnp.tanh(0.5 * gates[:, :6 * H]) + 0.5
    i = s[:, 0:2 * H]
    f = s[:, 2 * H:4 * H]
    o = s[:, 4 * H:6 * H]
    g = jnp.tanh(gates[:, 6 * H:])
    if c_mask is not None:
        c = c * c_mask
    c = f * c + i * g
    h = o * jnp.tanh(c)
    return h, c


def _rnn_kernel(ids_ref, emb_ref, w_ref, b_ref, out_ref,
                x_scr, gx_scr, y0_scr):
    """ids_ref: (B*T,) int32 in SMEM. emb_ref: (vocab_pad, DP) f32.
    w_ref: (640, 512) bf16 packed weights. b_ref: (8, 512) f32 packed biases.
    out_ref: (BP, NOUT) f32."""
    f32 = jnp.float32
    bf16 = jnp.bfloat16

    # ---- in-kernel embedding gather: build the time-doubled x slab --------
    # Row-block t holds [emb(x[t]) | emb(x[T-1-t])] so fwd and bwd gate inputs
    # for loop step t live in the same rows of one hoisted projection slab.
    x_scr[...] = jnp.zeros_like(x_scr)
    for t in range(T):
        tb = T - 1 - t
        for b in range(B):
            row = emb_ref[pl.ds(ids_ref[b * T + t], 1), :]          # (1, DP)
            x_scr[t * BP + b:t * BP + b + 1, 0:DP] = row
            x_scr[tb * BP + b:tb * BP + b + 1, DP:2 * DP] = row

    # ---- layer 0: one hoisted input projection for both directions --------
    gx_scr[...] = jnp.dot(x_scr[...].astype(bf16),
                          w_ref[OFF_IH0:OFF_IH0 + ROWS, :],
                          preferred_element_type=f32) + b_ref[0:1, :]

    whh0 = w_ref.at[OFF_HH0:OFF_HH0 + ROWS, :]
    h = jnp.zeros((BP, 2 * H), f32)
    c = jnp.zeros((BP, 2 * H), f32)
    for t in range(T):
        h, c = _lstm_step(gx_scr[t * BP:(t + 1) * BP, :], h, c, whh0)
        # h = [h_fwd(t) | h_bwd(T-1-t)] -> scatter into the layer-0 output slab
        tb = T - 1 - t
        y0_scr[t * BP:(t + 1) * BP, 0:H] = h[:, 0:H]
        y0_scr[tb * BP:(tb + 1) * BP, H:2 * H] = h[:, H:2 * H]

    # TODO(synk): inter-layer dropout (p=0.5) skipped -- eval()/inference semantics.

    # ---- layer 1: hoisted projection; both gate halves read the same y0[t].
    # Only t = T-1's bwd half is ever consumed (single bwd step from zero state).
    gx_scr[...] = jnp.dot(y0_scr[...].astype(bf16),
                          w_ref[OFF_IH1:OFF_IH1 + ROWS, :],
                          preferred_element_type=f32) + b_ref[1:2, :]

    # c_mask zeroes the bwd half of the carried cell state every step, so the
    # bwd half of h is always "one step from zero state on y0[t]".  After the
    # last step it is exactly output[:, -1, H:].  (W_hh bwd blocks are zero, so
    # the stale bwd h never leaks into the gates either.)
    lane = jax.lax.broadcasted_iota(jnp.int32, (BP, 2 * H), 1)
    c_mask = (lane < H).astype(f32)

    whh1 = w_ref.at[OFF_HH1:OFF_HH1 + ROWS, :]
    h = jnp.zeros((BP, 2 * H), f32)
    c = jnp.zeros((BP, 2 * H), f32)
    for t in range(T):
        h, c = _lstm_step(gx_scr[t * BP:(t + 1) * BP, :], h, c, whh1,
                          c_mask=c_mask)

    # ---- FC epilogue: h is already [h1_fwd_last | h1_bwd_last] -------------
    logits = jnp.dot(h.astype(bf16), w_ref[OFF_FC:OFF_FC + ROWS, :],
                     preferred_element_type=f32) + b_ref[2:3, :]
    out_ref[...] = logits[:, :NOUT]


# ------------------------------ JAX wrapper -------------------------------- #

@jax.jit
def rnn_forward(token_ids, prepared):
    """Reproduces RNN.forward: embedding -> 2-layer biLSTM -> fc(output[:, -1, :])."""
    assert token_ids.shape == (B, T), token_ids.shape
    ids = token_ids.reshape(-1).astype(jnp.int32)                 # (B*T,) b-major

    smem = pl.BlockSpec(memory_space=pltpu.MemorySpace.SMEM)
    vmem = pl.BlockSpec(memory_space=pltpu.MemorySpace.VMEM)

    out = pl.pallas_call(
        _rnn_kernel,
        out_shape=jax.ShapeDtypeStruct((BP, NOUT), jnp.float32),
        in_specs=[smem, vmem, vmem, vmem],
        out_specs=vmem,
        scratch_shapes=[
            pltpu.VMEM((T * BP, 2 * DP), jnp.float32),   # time-doubled x slab
            pltpu.VMEM((T * BP, G), jnp.float32),        # hoisted gate inputs
            pltpu.VMEM((T * BP, 2 * H), jnp.float32),    # layer-0 output y0
        ],
        cost_estimate=pl.CostEstimate(flops=34_000_000,
                                      transcendentals=100_000,
                                      bytes_accessed=1_500_000),
    )(ids, prepared["emb"], prepared["w"], prepared["b"])
    return out[:B]


# --------------------------- parameters & prep ----------------------------- #

def init_params(key, vocab_size=100, embed_dim=EMBED, hidden_size=H, num_layers=2):
    """Random parameters in PyTorch nn.LSTM / nn.Linear layout."""
    keys = jax.random.split(key, 4 + num_layers * 8)
    ki = iter(keys)

    def rnd(shape, scale=0.1):
        return (scale * jax.random.normal(next(ki), shape)).astype(jnp.float32)

    params = {"embedding": rnd((vocab_size, embed_dim), 1.0), "lstm": []}
    for layer in range(num_layers):
        d_in = embed_dim if layer == 0 else 2 * hidden_size
        layer_p = {}
        for direction in ("fwd", "bwd"):
            layer_p[direction] = dict(
                weight_ih=rnd((4 * hidden_size, d_in)),
                weight_hh=rnd((4 * hidden_size, hidden_size)),
                bias_ih=rnd((4 * hidden_size,)),
                bias_hh=rnd((4 * hidden_size,)),
            )
        params["lstm"].append(layer_p)
    params["fc_w"] = rnd((NOUT, 2 * hidden_size))   # nn.Linear weight (out, in)
    params["fc_b"] = rnd((NOUT,))
    return params


def _reorder_gates(a, axis=0):
    """PyTorch gate order (i, f, g, o) -> kernel order (i, f, o, g)."""
    i, f, g, o = jnp.split(a, 4, axis=axis)
    return jnp.concatenate([i, f, o, g], axis=axis)


def _interleave(wf, wb):
    """wf/wb: (K, 4H) with gate cols (i,f,o,g) -> (K, 8H) with per-gate
    [fwd | bwd] interleaving: [i_f,i_b, f_f,f_b, o_f,o_b, g_f,g_b]."""
    blocks = []
    for k in range(4):
        blocks.append(wf[:, k * H:(k + 1) * H])
        blocks.append(wb[:, k * H:(k + 1) * H])
    return jnp.concatenate(blocks, axis=1)


def prepare_params(params):
    """PyTorch-layout params -> one bf16 weight slab, one f32 bias slab, and a
    zero-padded f32 embedding table (gate axis reordered to (i,f,o,g), fwd/bwd
    interleaved per gate, biases summed)."""
    l0f, l0b = params["lstm"][0]["fwd"], params["lstm"][0]["bwd"]
    l1f, l1b = params["lstm"][1]["fwd"], params["lstm"][1]["bwd"]

    def wihT(p, pad_rows=None):
        w = _reorder_gates(p["weight_ih"]).T                 # (Din, 4H)
        if pad_rows is not None:
            w = jnp.pad(w, ((0, pad_rows - w.shape[0]), (0, 0)))
        return w

    def whhT(p):
        return _reorder_gates(p["weight_hh"]).T              # (H, 4H)

    def bias(p):
        return _reorder_gates(p["bias_ih"] + p["bias_hh"]).reshape(1, -1)

    zH = jnp.zeros((H, 4 * H), jnp.float32)
    zDP = jnp.zeros((DP, 4 * H), jnp.float32)
    z2H = jnp.zeros((2 * H, 4 * H), jnp.float32)

    # layer-0 input proj acts on the doubled x slab [x_t | x_{T-1-t}]
    w_ih0 = _interleave(jnp.concatenate([wihT(l0f, DP), zDP], 0),
                        jnp.concatenate([zDP, wihT(l0b, DP)], 0))
    # layer-0 recurrence acts on carried [h_f | h_b]
    w_hh0 = _interleave(jnp.concatenate([whhT(l0f), zH], 0),
                        jnp.concatenate([zH, whhT(l0b)], 0))
    # layer-1 input proj: both halves read the same y0[t]
    w_ih1 = _interleave(wihT(l1f), wihT(l1b))
    # layer-1 recurrence: only the fwd half recurs; bwd half is a single step
    w_hh1 = _interleave(jnp.concatenate([whhT(l1f), zH], 0), z2H)
    # fc block, padded to the slab width
    w_fc = jnp.zeros((2 * H, G), jnp.float32).at[:, :NOUT].set(params["fc_w"].T)

    w_slab = jnp.concatenate([w_ih0, w_hh0, w_ih1, w_hh1, w_fc],
                             axis=0).astype(jnp.bfloat16)
    assert w_slab.shape == (W_ROWS, G), w_slab.shape

    b_slab = jnp.zeros((8, G), jnp.float32)
    b_slab = b_slab.at[0:1, :].set(_interleave(bias(l0f), bias(l0b)))
    b_slab = b_slab.at[1:2, :].set(_interleave(bias(l1f), bias(l1b)))
    b_slab = b_slab.at[2, :NOUT].set(params["fc_b"])

    emb = params["embedding"]
    emb = jnp.pad(emb, ((0, (-emb.shape[0]) % 8),
                        (0, DP - emb.shape[1]))).astype(jnp.float32)

    return {"emb": emb, "w": w_slab, "b": b_slab}


if __name__ == "__main__":
    key = jax.random.PRNGKey(0)
    k_param, k_tok = jax.random.split(key)

    vocab_size = 100
    params = init_params(k_param, vocab_size=vocab_size)
    prepared = prepare_params(params)
    token_ids = jax.random.randint(k_tok, (B, T), 0, vocab_size, dtype=jnp.int32)

    out = rnn_forward(token_ids, prepared)
    jax.block_until_ready(out)
    assert out.shape == (B, NOUT), out.shape
    print("KERNEL_OK")
</pallas_src>

<mosaic_0001>
module attributes {stable_mosaic.version = 11 : i64} {
  func.func @_rnn_kernel(%arg0: memref<16xi32, #tpu.memory_space<smem>>, %arg1: memref<104x64xf32, #tpu.memory_space<vmem>>, %arg2: memref<640x512xbf16, #tpu.memory_space<vmem>>, %arg3: memref<8x512xf32, #tpu.memory_space<vmem>>, %arg4: memref<8x2xf32, #tpu.memory_space<vmem>>, %arg5: memref<64x128xf32, #tpu.memory_space<vmem>>, %arg6: memref<64x512xf32, #tpu.memory_space<vmem>>, %arg7: memref<64x128xf32, #tpu.memory_space<vmem>>) attributes {dimension_semantics = [], scalar_prefetch = 0 : i64, scratch_operands = 3 : i64, tpu.core_type = #tpu.core_type<tc>} {
    %cst = arith.constant 0.000000e+00 : f32
    %0 = vector.broadcast %cst : f32 to vector<64x128xf32>
    %c0 = arith.constant 0 : index
    %c0_0 = arith.constant 0 : index
    %1 = vector.load %arg5[%c0, %c0_0] : memref<64x128xf32, #tpu.memory_space<vmem>>, vector<64x128xf32>
    tpu.vector_store %arg5[%c0, %c0_0], %0 {strides = array<i32>} : memref<64x128xf32, #tpu.memory_space<vmem>>, vector<64x128xf32>,
    %c0_1 = arith.constant 0 : index
    %2 = memref.load %arg0[%c0_1] : memref<16xi32, #tpu.memory_space<smem>>
    %3 = arith.index_cast %2 : i32 to index
    %c0_2 = arith.constant 0 : index
    %4 = vector.load %arg1[%3, %c0_2] : memref<104x64xf32, #tpu.memory_space<vmem>>, vector<1x64xf32>
    %c0_3 = arith.constant 0 : index
    %c0_4 = arith.constant 0 : index
    %5 = vector.load %arg5[%c0_3, %c0_4] : memref<64x128xf32, #tpu.memory_space<vmem>>, vector<1x64xf32>
    tpu.vector_store %arg5[%c0_3, %c0_4], %4 {strides = array<i32>} : memref<64x128xf32, #tpu.memory_space<vmem>>, vector<1x64xf32>,
    %c56 = arith.constant 56 : index
    %c64 = arith.constant 64 : index
    %6 = vector.load %arg5[%c56, %c64] : memref<64x128xf32, #tpu.memory_space<vmem>>, vector<1x64xf32>
    tpu.vector_store %arg5[%c56, %c64], %4 {strides = array<i32>} : memref<64x128xf32, #tpu.memory_space<vmem>>, vector<1x64xf32>,
    %c8 = arith.constant 8 : index
    %7 = memref.load %arg0[%c8] : memref<16xi32, #tpu.memory_space<smem>>
    %8 = arith.index_cast %7 : i32 to index
    %c0_5 = arith.constant 0 : index
    %9 = vector.load %arg1[%8, %c0_5] : memref<104x64xf32, #tpu.memory_space<vmem>>, vector<1x64xf32>
    %c1 = arith.constant 1 : index
    %c0_6 = arith.constant 0 : index
    %10 = vector.load %arg5[%c1, %c0_6] : memref<64x128xf32, #tpu.memory_space<vmem>>, vector<1x64xf32>
    tpu.vector_store %arg5[%c1, %c0_6], %9 {strides = array<i32>} : memref<64x128xf32, #tpu.memory_space<vmem>>, vector<1x64xf32>,
    %c57 = arith.constant 57 : index
    %c64_7 = arith.constant 64 : index
    %11 = vector.load %arg5[%c57, %c64_7] : memref<64x128xf32, #tpu.memory_space<vmem>>, vector<1x64xf32>
    tpu.vector_store %arg5[%c57, %c64_7], %9 {strides = array<i32>} : memref<64x128xf32, #tpu.memory_space<vmem>>, vector<1x64xf32>,
    %c1_8 = arith.constant 1 : index
    %12 = memref.load %arg0[%c1_8] : memref<16xi32, #tpu.memory_space<smem>>
    %13 = arith.index_cast %12 : i32 to index
    %c0_9 = arith.constant 0 : index
    %14 = vector.load %arg1[%13, %c0_9] : memref<104x64xf32, #tpu.memory_space<vmem>>, vector<1x64xf32>
    %c8_10 = arith.constant 8 : index
    %c0_11 = arith.constant 0 : index
    %15 = vector.load %arg5[%c8_10, %c0_11] : memref<64x128xf32, #tpu.memory_space<vmem>>, vector<1x64xf32>
    tpu.vector_store %arg5[%c8_10, %c0_11], %14 {strides = array<i32>} : memref<64x128xf32, #tpu.memory_space<vmem>>, vector<1x64xf32>,
    %c48 = arith.constant 48 : index
    %c64_12 = arith.constant 64 : index
    %16 = vector.load %arg5[%c48, %c64_12] : memref<64x128xf32, #tpu.memory_space<vmem>>, vector<1x64xf32>
    tpu.vector_store %arg5[%c48, %c64_12], %14 {strides = array<i32>} : memref<64x128xf32, #tpu.memory_space<vmem>>, vector<1x64xf32>,
    %c9 = arith.constant 9 : index
    %17 = memref.load %arg0[%c9] : memref<16xi32, #tpu.memory_space<smem>>
    %18 = arith.index_cast %17 : i32 to index
    %c0_13 = arith.constant 0 : index
    %19 = vector.load %arg1[%18, %c0_13] : memref<104x64xf32, #tpu.memory_space<vmem>>, vector<1x64xf32>
    %c9_14 = arith.constant 9 : index
    %c0_15 = arith.constant 0 : index
    %20 = vector.load %arg5[%c9_14, %c0_15] : memref<64x128xf32, #tpu.memory_space<vmem>>, vector<1x64xf32>
    tpu.vector_store %arg5[%c9_14, %c0_15], %19 {strides = array<i32>} : memref<64x128xf32, #tpu.memory_space<vmem>>, vector<1x64xf32>,
    %c49 = arith.constant 49 : index
    %c64_16 = arith.constant 64 : index
    %21 = vector.load %arg5[%c49, %c64_16] : memref<64x128xf32, #tpu.memory_space<vmem>>, vector<1x64xf32>
    tpu.vector_store %arg5[%c49, %c64_16], %19 {strides = array<i32>} : memref<64x128xf32, #tpu.memory_space<vmem>>, vector<1x64xf32>,
    %c2 = arith.constant 2 : index
    %22 = memref.load %arg0[%c2] : memref<16xi32, #tpu.memory_space<smem>>
    %23 = arith.index_cast %22 : i32 to index
    %c0_17 = arith.constant 0 : index
    %24 = vector.load %arg1[%23, %c0_17] : memref<104x64xf32, #tpu.memory_space<vmem>>, vector<1x64xf32>
    %c16 = arith.constant 16 : index
    %c0_18 = arith.constant 0 : index
    %25 = vector.load %arg5[%c16, %c0_18] : memref<64x128xf32, #tpu.memory_space<vmem>>, vector<1x64xf32>
    tpu.vector_store %arg5[%c16, %c0_18], %24 {strides = array<i32>} : memref<64x128xf32, #tpu.memory_space<vmem>>, vector<1x64xf32>,
    %c40 = arith.constant 40 : index
    %c64_19 = arith.constant 64 : index
    %26 = vector.load %arg5[%c40, %c64_19] : memref<64x128xf32, #tpu.memory_space<vmem>>, vector<1x64xf32>
    tpu.vector_store %arg5[%c40, %c64_19], %24 {strides = array<i32>} : memref<64x128xf32, #tpu.memory_space<vmem>>, vector<1x64xf32>,
    %c10 = arith.constant 10 : index
    %27 = memref.load %arg0[%c10] : memref<16xi32, #tpu.memory_space<smem>>
    %28 = arith.index_cast %27 : i32 to index
    %c0_20 = arith.constant 0 : index
    %29 = vector.load %arg1[%28, %c0_20] : memref<104x64xf32, #tpu.memory_space<vmem>>, vector<1x64xf32>
    %c17 = arith.constant 17 : index
    %c0_21 = arith.constant 0 : index
    %30 = vector.load %arg5[%c17, %c0_21] : memref<64x128xf32, #tpu.memory_space<vmem>>, vector<1x64xf32>
    tpu.vector_store %arg5[%c17, %c0_21], %29 {strides = array<i32>} : memref<64x128xf32, #tpu.memory_space<vmem>>, vector<1x64xf32>,
    %c41 = arith.constant 41 : index
    %c64_22 = arith.constant 64 : index
    %31 = vector.load %arg5[%c41, %c64_22] : memref<64x128xf32, #tpu.memory_space<vmem>>, vector<1x64xf32>
    tpu.vector_store %arg5[%c41, %c64_22], %29 {strides = array<i32>} : memref<64x128xf32, #tpu.memory_space<vmem>>, vector<1x64xf32>,
    %c3 = arith.constant 3 : index
    %32 = memref.load %arg0[%c3] : memref<16xi32, #tpu.memory_space<smem>>
    %33 = arith.index_cast %32 : i32 to index
    %c0_23 = arith.constant 0 : index
    %34 = vector.load %arg1[%33, %c0_23] : memref<104x64xf32, #tpu.memory_space<vmem>>, vector<1x64xf32>
    %c24 = arith.constant 24 : index
    %c0_24 = arith.constant 0 : index
    %35 = vector.load %arg5[%c24, %c0_24] : memref<64x128xf32, #tpu.memory_space<vmem>>, vector<1x64xf32>
    tpu.vector_store %arg5[%c24, %c0_24], %34 {strides = array<i32>} : memref<64x128xf32, #tpu.memory_space<vmem>>, vector<1x64xf32>,
    %c32 = arith.constant 32 : index
    %c64_25 = arith.constant 64 : index
    %36 = vector.load %arg5[%c32, %c64_25] : memref<64x128xf32, #tpu.memory_space<vmem>>, vector<1x64xf32>
    tpu.vector_store %arg5[%c32, %c64_25], %34 {strides = array<i32>} : memref<64x128xf32, #tpu.memory_space<vmem>>, vector<1x64xf32>,
    %c11 = arith.constant 11 : index
    %37 = memref.load %arg0[%c11] : memref<16xi32, #tpu.memory_space<smem>>
    %38 = arith.index_cast %37 : i32 to index
    %c0_26 = arith.constant 0 : index
    %39 = vector.load %arg1[%38, %c0_26] : memref<104x64xf32, #tpu.memory_space<vmem>>, vector<1x64xf32>
    %c25 = arith.constant 25 : index
    %c0_27 = arith.constant 0 : index
    %40 = vector.load %arg5[%c25, %c0_27] : memref<64x128xf32, #tpu.memory_space<vmem>>, vector<1x64xf32>
    tpu.vector_store %arg5[%c25, %c0_27], %39 {strides = array<i32>} : memref<64x128xf32, #tpu.memory_space<vmem>>, vector<1x64xf32>,
    %c33 = arith.constant 33 : index
    %c64_28 = arith.constant 64 : index
    %41 = vector.load %arg5[%c33, %c64_28] : memref<64x128xf32, #tpu.memory_space<vmem>>, vector<1x64xf32>
    tpu.vector_store %arg5[%c33, %c64_28], %39 {strides = array<i32>} : memref<64x128xf32, #tpu.memory_space<vmem>>, vector<1x64xf32>,
    %c4 = arith.constant 4 : index
    %42 = memref.load %arg0[%c4] : memref<16xi32, #tpu.memory_space<smem>>
    %43 = arith.index_cast %42 : i32 to index
    %c0_29 = arith.constant 0 : index
    %44 = vector.load %arg1[%43, %c0_29] : memref<104x64xf32, #tpu.memory_space<vmem>>, vector<1x64xf32>
    %c32_30 = arith.constant 32 : index
    %c0_31 = arith.constant 0 : index
    %45 = vector.load %arg5[%c32_30, %c0_31] : memref<64x128xf32, #tpu.memory_space<vmem>>, vector<1x64xf32>
    tpu.vector_store %arg5[%c32_30, %c0_31], %44 {strides = array<i32>} : memref<64x128xf32, #tpu.memory_space<vmem>>, vector<1x64xf32>,
    %c24_32 = arith.constant 24 : index
    %c64_33 = arith.constant 64 : index
    %46 = vector.load %arg5[%c24_32, %c64_33] : memref<64x128xf32, #tpu.memory_space<vmem>>, vector<1x64xf32>
    tpu.vector_store %arg5[%c24_32, %c64_33], %44 {strides = array<i32>} : memref<64x128xf32, #tpu.memory_space<vmem>>, vector<1x64xf32>,
    %c12 = arith.constant 12 : index
    %47 = memref.load %arg0[%c12] : memref<16xi32, #tpu.memory_space<smem>>
    %48 = arith.index_cast %47 : i32 to index
    %c0_34 = arith.constant 0 : index
    %49 = vector.load %arg1[%48, %c0_34] : memref<104x64xf32, #tpu.memory_space<vmem>>, vector<1x64xf32>
    %c33_35 = arith.constant 33 : index
    %c0_36 = arith.constant 0 : index
    %50 = vector.load %arg5[%c33_35, %c0_36] : memref<64x128xf32, #tpu.memory_space<vmem>>, vector<1x64xf32>
    tpu.vector_store %arg5[%c33_35, %c0_36], %49 {strides = array<i32>} : memref<64x128xf32, #tpu.memory_space<vmem>>, vector<1x64xf32>,
    %c25_37 = arith.constant 25 : index
    %c64_38 = arith.constant 64 : index
    %51 = vector.load %arg5[%c25_37, %c64_38] : memref<64x128xf32, #tpu.memory_space<vmem>>, vector<1x64xf32>
    tpu.vector_store %arg5[%c25_37, %c64_38], %49 {strides = array<i32>} : memref<64x128xf32, #tpu.memory_space<vmem>>, vector<1x64xf32>,
    %c5 = arith.constant 5 : index
    %52 = memref.load %arg0[%c5] : memref<16xi32, #tpu.memory_space<smem>>
    %53 = arith.index_cast %52 : i32 to index
    %c0_39 = arith.constant 0 : index
    %54 = vector.load %arg1[%53, %c0_39] : memref<104x64xf32, #tpu.memory_space<vmem>>, vector<1x64xf32>
    %c40_40 = arith.constant 40 : index
    %c0_41 = arith.constant 0 : index
    %55 = vector.load %arg5[%c40_40, %c0_41] : memref<64x128xf32, #tpu.memory_space<vmem>>, vector<1x64xf32>
    tpu.vector_store %arg5[%c40_40, %c0_41], %54 {strides = array<i32>} : memref<64x128xf32, #tpu.memory_space<vmem>>, vector<1x64xf32>,
    %c16_42 = arith.constant 16 : index
    %c64_43 = arith.constant 64 : index
    %56 = vector.load %arg5[%c16_42, %c64_43] : memref<64x128xf32, #tpu.memory_space<vmem>>, vector<1x64xf32>
    tpu.vector_store %arg5[%c16_42, %c64_43], %54 {strides = array<i32>} : memref<64x128xf32, #tpu.memory_space<vmem>>, vector<1x64xf32>,
    %c13 = arith.constant 13 : index
    %57 = memref.load %arg0[%c13] : memref<16xi32, #tpu.memory_space<smem>>
    %58 = arith.index_cast %57 : i32 to index
    %c0_44 = arith.constant 0 : index
    %59 = vector.load %arg1[%58, %c0_44] : memref<104x64xf32, #tpu.memory_space<vmem>>, vector<1x64xf32>
    %c41_45 = arith.constant 41 : index
    %c0_46 = arith.constant 0 : index
    %60 = vector.load %arg5[%c41_45, %c0_46] : memref<64x128xf32, #tpu.memory_space<vmem>>, vector<1x64xf32>
    tpu.vector_store %arg5[%c41_45, %c0_46], %59 {strides = array<i32>} : memref<64x128xf32, #tpu.memory_space<vmem>>, vector<1x64xf32>,
    %c17_47 = arith.constant 17 : index
    %c64_48 = arith.constant 64 : index
    %61 = vector.load %arg5[%c17_47, %c64_48] : memref<64x128xf32, #tpu.memory_space<vmem>>, vector<1x64xf32>
    tpu.vector_store %arg5[%c17_47, %c64_48], %59 {strides = array<i32>} : memref<64x128xf32, #tpu.memory_space<vmem>>, vector<1x64xf32>,
    %c6 = arith.constant 6 : index
    %62 = memref.load %arg0[%c6] : memref<16xi32, #tpu.memory_space<smem>>
    %63 = arith.index_cast %62 : i32 to index
    %c0_49 = arith.constant 0 : index
    %64 = vector.load %arg1[%63, %c0_49] : memref<104x64xf32, #tpu.memory_space<vmem>>, vector<1x64xf32>
    %c48_50 = arith.constant 48 : index
    %c0_51 = arith.constant 0 : index
    %65 = vector.load %arg5[%c48_50, %c0_51] : memref<64x128xf32, #tpu.memory_space<vmem>>, vector<1x64xf32>
    tpu.vector_store %arg5[%c48_50, %c0_51], %64 {strides = array<i32>} : memref<64x128xf32, #tpu.memory_space<vmem>>, vector<1x64xf32>,
    %c8_52 = arith.constant 8 : index
    %c64_53 = arith.constant 64 : index
    %66 = vector.load %arg5[%c8_52, %c64_53] : memref<64x128xf32, #tpu.memory_space<vmem>>, vector<1x64xf32>
    tpu.vector_store %arg5[%c8_52, %c64_53], %64 {strides = array<i32>} : memref<64x128xf32, #tpu.memory_space<vmem>>, vector<1x64xf32>,
    %c14 = arith.constant 14 : index
    %67 = memref.load %arg0[%c14] : memref<16xi32, #tpu.memory_space<smem>>
    %68 = arith.index_cast %67 : i32 to index
    %c0_54 = arith.constant 0 : index
    %69 = vector.load %arg1[%68, %c0_54] : memref<104x64xf32, #tpu.memory_space<vmem>>, vector<1x64xf32>
    %c49_55 = arith.constant 49 : index
    %c0_56 = arith.constant 0 : index
    %70 = vector.load %arg5[%c49_55, %c0_56] : memref<64x128xf32, #tpu.memory_space<vmem>>, vector<1x64xf32>
    tpu.vector_store %arg5[%c49_55, %c0_56], %69 {strides = array<i32>} : memref<64x128xf32, #tpu.memory_space<vmem>>, vector<1x64xf32>,
    %c9_57 = arith.constant 9 : index
    %c64_58 = arith.constant 64 : index
    %71 = vector.load %arg5[%c9_57, %c64_58] : memref<64x128xf32, #tpu.memory_space<vmem>>, vector<1x64xf32>
    tpu.vector_store %arg5[%c9_57, %c64_58], %69 {strides = array<i32>} : memref<64x128xf32, #tpu.memory_space<vmem>>, vector<1x64xf32>,
    %c7 = arith.constant 7 : index
    %72 = memref.load %arg0[%c7] : memref<16xi32, #tpu.memory_space<smem>>
    %73 = arith.index_cast %72 : i32 to index
    %c0_59 = arith.constant 0 : index
    %74 = vector.load %arg1[%73, %c0_59] : memref<104x64xf32, #tpu.memory_space<vmem>>, vector<1x64xf32>
    %c56_60 = arith.constant 56 : index
    %c0_61 = arith.constant 0 : index
    %75 = vector.load %arg5[%c56_60, %c0_61] : memref<64x128xf32, #tpu.memory_space<vmem>>, vector<1x64xf32>
    tpu.vector_store %arg5[%c56_60, %c0_61], %74 {strides = array<i32>} : memref<64x128xf32, #tpu.memory_space<vmem>>, vector<1x64xf32>,
    %c0_62 = arith.constant 0 : index
    %c64_63 = arith.constant 64 : index
    %76 = vector.load %arg5[%c0_62, %c64_63] : memref<64x128xf32, #tpu.memory_space<vmem>>, vector<1x64xf32>
    tpu.vector_store %arg5[%c0_62, %c64_63], %74 {strides = array<i32>} : memref<64x128xf32, #tpu.memory_space<vmem>>, vector<1x64xf32>,
    %c15 = arith.constant 15 : index
    %77 = memref.load %arg0[%c15] : memref<16xi32, #tpu.memory_space<smem>>
    %78 = arith.index_cast %77 : i32 to index
    %c0_64 = arith.constant 0 : index
    %79 = vector.load %arg1[%78, %c0_64] : memref<104x64xf32, #tpu.memory_space<vmem>>, vector<1x64xf32>
    %c57_65 = arith.constant 57 : index
    %c0_66 = arith.constant 0 : index
    %80 = vector.load %arg5[%c57_65, %c0_66] : memref<64x128xf32, #tpu.memory_space<vmem>>, vector<1x64xf32>
    tpu.vector_store %arg5[%c57_65, %c0_66], %79 {strides = array<i32>} : memref<64x128xf32, #tpu.memory_space<vmem>>, vector<1x64xf32>,
    %c1_67 = arith.constant 1 : index
    %c64_68 = arith.constant 64 : index
    %81 = vector.load %arg5[%c1_67, %c64_68] : memref<64x128xf32, #tpu.memory_space<vmem>>, vector<1x64xf32>
    tpu.vector_store %arg5[%c1_67, %c64_68], %79 {strides = array<i32>} : memref<64x128xf32, #tpu.memory_space<vmem>>, vector<1x64xf32>,
    %c0_69 = arith.constant 0 : index
    %c0_70 = arith.constant 0 : index
    %82 = vector.load %arg5[%c0_69, %c0_70] : memref<64x128xf32, #tpu.memory_space<vmem>>, vector<64x128xf32>
    %83 = arith.truncf %82 : vector<64x128xf32> to vector<64x128xbf16>
    %c0_71 = arith.constant 0 : index
    %c0_72 = arith.constant 0 : index
    %84 = vector.load %arg2[%c0_71, %c0_72] : memref<640x512xbf16, #tpu.memory_space<vmem>>, vector<128x512xbf16>
    %cst_73 = arith.constant dense<0.000000e+00> : vector<64x512xf32>
    %85 = tpu.matmul %83, %84, %cst_73 {dimension_numbers = #tpu.dot_dimension_numbers<[1], [0], [0], [1], [0, 0, 1, 1], [], []>} : vector<64x128xbf16>, vector<128x512xbf16>, vector<64x512xf32> -> vector<64x512xf32>
    %c0_74 = arith.constant 0 : index
    %c0_75 = arith.constant 0 : index
    %86 = vector.load %arg3[%c0_74, %c0_75] : memref<8x512xf32, #tpu.memory_space<vmem>>, vector<1x512xf32>
    %87 = vector.broadcast %86 : vector<1x512xf32> to vector<64x512xf32>
    %88 = arith.addf %85, %87 : vector<64x512xf32>
    %c0_76 = arith.constant 0 : index
    %c0_77 = arith.constant 0 : index
    %89 = vector.load %arg6[%c0_76, %c0_77] : memref<64x512xf32, #tpu.memory_space<vmem>>, vector<64x512xf32>
    tpu.vector_store %arg6[%c0_76, %c0_77], %88 {strides = array<i32>} : memref<64x512xf32, #tpu.memory_space<vmem>>, vector<64x512xf32>,
    %cst_78 = arith.constant 0.000000e+00 : f32
    %90 = vector.broadcast %cst_78 : f32 to vector<8x128xf32>
    %cst_79 = arith.constant 0.000000e+00 : f32
    %91 = vector.broadcast %cst_79 : f32 to vector<8x128xf32>
    %c0_80 = arith.constant 0 : index
    %c0_81 = arith.constant 0 : index
    %92 = vector.load %arg6[%c0_80, %c0_81] : memref<64x512xf32, #tpu.memory_space<vmem>>, vector<8x512xf32>
    %93 = arith.truncf %90 : vector<8x128xf32> to vector<8x128xbf16>
    %c128 = arith.constant 128 : index
    %c0_82 = arith.constant 0 : index
    %94 = vector.load %arg2[%c128, %c0_82] : memref<640x512xbf16, #tpu.memory_space<vmem>>, vector<128x512xbf16>
    %cst_83 = arith.constant dense<0.000000e+00> : vector<8x512xf32>
    %95 = tpu.matmul %93, %94, %cst_83 {dimension_numbers = #tpu.dot_dimension_numbers<[1], [0], [0], [1], [0, 0, 1, 1], [], []>} : vector<8x128xbf16>, vector<128x512xbf16>, vector<8x512xf32> -> vector<8x512xf32>
    %96 = arith.addf %92, %95 : vector<8x512xf32>
    %97 = vector.extract_strided_slice %96 {offsets = [0, 0], sizes = [8, 384], strides = [1, 1]} : vector<8x512xf32> to vector<8x384xf32>
    %cst_84 = arith.constant 5.000000e-01 : f32
    %98 = vector.broadcast %cst_84 : f32 to vector<8x384xf32>
    %99 = arith.mulf %98, %97 : vector<8x384xf32>
    %100 = math.tanh %99 : vector<8x384xf32>
    %cst_85 = arith.constant 5.000000e-01 : f32
    %101 = vector.broadcast %cst_85 : f32 to vector<8x384xf32>
    %102 = arith.mulf %101, %100 : vector<8x384xf32>
    %cst_86 = arith.constant 5.000000e-01 : f32
    %103 = vector.broadcast %cst_86 : f32 to vector<8x384xf32>
    %104 = arith.addf %102, %103 : vector<8x384xf32>
    %105 = vector.extract_strided_slice %104 {offsets = [0, 0], sizes = [8, 128], strides = [1, 1]} : vector<8x384xf32> to vector<8x128xf32>
    %106 = vector.extract_strided_slice %104 {offsets = [0, 128], sizes = [8, 128], strides = [1, 1]} : vector<8x384xf32> to vector<8x128xf32>
    %107 = vector.extract_strided_slice %104 {offsets = [0, 256], sizes = [8, 128], strides = [1, 1]} : vector<8x384xf32> to vector<8x128xf32>
    %108 = vector.extract_strided_slice %96 {offsets = [0, 384], sizes = [8, 128], strides = [1, 1]} : vector<8x512xf32> to vector<8x128xf32>
    %109 = math.tanh %108 : vector<8x128xf32>
    %110 = arith.mulf %106, %91 : vector<8x128xf32>
    %111 = arith.mulf %105, %109 : vector<8x128xf32>
    %112 = arith.addf %110, %111 : vector<8x128xf32>
    %113 = math.tanh %112 : vector<8x128xf32>
    %114 = arith.mulf %107, %113 : vector<8x128xf32>
    %115 = vector.extract_strided_slice %114 {offsets = [0, 0], sizes = [8, 64], strides = [1, 1]} : vector<8x128xf32> to vector<8x64xf32>
    %c0_87 = arith.constant 0 : index
    %c0_88 = arith.constant 0 : index
    %116 = vector.load %arg7[%c0_87, %c0_88] : memref<64x128xf32, #tpu.memory_space<vmem>>, vector<8x64xf32>
    tpu.vector_store %arg7[%c0_87, %c0_88], %115 {strides = array<i32>} : memref<64x128xf32, #tpu.memory_space<vmem>>, vector<8x64xf32>,
    %117 = vector.extract_strided_slice %114 {offsets = [0, 64], sizes = [8, 64], strides = [1, 1]} : vector<8x128xf32> to vector<8x64xf32>
    %c56_89 = arith.constant 56 : index
    %c64_90 = arith.constant 64 : index
    %118 = vector.load %arg7[%c56_89, %c64_90] : memref<64x128xf32, #tpu.memory_space<vmem>>, vector<8x64xf32>
    tpu.vector_store %arg7[%c56_89, %c64_90], %117 {strides = array<i32>} : memref<64x128xf32, #tpu.memory_space<vmem>>, vector<8x64xf32>,
    %c8_91 = arith.constant 8 : index
    %c0_92 = arith.constant 0 : index
    %119 = vector.load %arg6[%c8_91, %c0_92] : memref<64x512xf32, #tpu.memory_space<vmem>>, vector<8x512xf32>
    %120 = arith.truncf %114 : vector<8x128xf32> to vector<8x128xbf16>
    %c128_93 = arith.constant 128 : index
    %c0_94 = arith.constant 0 : index
    %121 = vector.load %arg2[%c128_93, %c0_94] : memref<640x512xbf16, #tpu.memory_space<vmem>>, vector<128x512xbf16>
    %cst_95 = arith.constant dense<0.000000e+00> : vector<8x512xf32>
    %122 = tpu.matmul %120, %121, %cst_95 {dimension_numbers = #tpu.dot_dimension_numbers<[1], [0], [0], [1], [0, 0, 1, 1], [], []>} : vector<8x128xbf16>, vector<128x512xbf16>, vector<8x512xf32> -> vector<8x512xf32>
    %123 = arith.addf %119, %122 : vector<8x512xf32>
    %124 = vector.extract_strided_slice %123 {offsets = [0, 0], sizes = [8, 384], strides = [1, 1]} : vector<8x512xf32> to vector<8x384xf32>
    %cst_96 = arith.constant 5.000000e-01 : f32
    %125 = vector.broadcast %cst_96 : f32 to vector<8x384xf32>
    %126 = arith.mulf %125, %124 : vector<8x384xf32>
    %127 = math.tanh %126 : vector<8x384xf32>
    %cst_97 = arith.constant 5.000000e-01 : f32
    %128 = vector.broadcast %cst_97 : f32 to vector<8x384xf32>
    %129 = arith.mulf %128, %127 : vector<8x384xf32>
    %cst_98 = arith.constant 5.000000e-01 : f32
    %130 = vector.broadcast %cst_98 : f32 to vector<8x384xf32>
    %131 = arith.addf %129, %130 : vector<8x384xf32>
    %132 = vector.extract_strided_slice %131 {offsets = [0, 0], sizes = [8, 128], strides = [1, 1]} : vector<8x384xf32> to vector<8x128xf32>
    %133 = vector.extract_strided_slice %131 {offsets = [0, 128], sizes = [8, 128], strides = [1, 1]} : vector<8x384xf32> to vector<8x128xf32>
    %134 = vector.extract_strided_slice %131 {offsets = [0, 256], sizes = [8, 128], strides = [1, 1]} : vector<8x384xf32> to vector<8x128xf32>
    %135 = vector.extract_strided_slice %123 {offsets = [0, 384], sizes = [8, 128], strides = [1, 1]} : vector<8x512xf32> to vector<8x128xf32>
    %136 = math.tanh %135 : vector<8x128xf32>
    %137 = arith.mulf %133, %112 : vector<8x128xf32>
    %138 = arith.mulf %132, %136 : vector<8x128xf32>
    %139 = arith.addf %137, %138 : vector<8x128xf32>
    %140 = math.tanh %139 : vector<8x128xf32>
    %141 = arith.mulf %134, %140 : vector<8x128xf32>
    %142 = vector.extract_strided_slice %141 {offsets = [0, 0], sizes = [8, 64], strides = [1, 1]} : vector<8x128xf32> to vector<8x64xf32>
    %c8_99 = arith.constant 8 : index
    %c0_100 = arith.constant 0 : index
    %143 = vector.load %arg7[%c8_99, %c0_100] : memref<64x128xf32, #tpu.memory_space<vmem>>, vector<8x64xf32>
    tpu.vector_store %arg7[%c8_99, %c0_100], %142 {strides = array<i32>} : memref<64x128xf32, #tpu.memory_space<vmem>>, vector<8x64xf32>,
    %144 = vector.extract_strided_slice %141 {offsets = [0, 64], sizes = [8, 64], strides = [1, 1]} : vector<8x128xf32> to vector<8x64xf32>
    %c48_101 = arith.constant 48 : index
    %c64_102 = arith.constant 64 : index
    %145 = vector.load %arg7[%c48_101, %c64_102] : memref<64x128xf32, #tpu.memory_space<vmem>>, vector<8x64xf32>
    tpu.vector_store %arg7[%c48_101, %c64_102], %144 {strides = array<i32>} : memref<64x128xf32, #tpu.memory_space<vmem>>, vector<8x64xf32>,
    %c16_103 = arith.constant 16 : index
    %c0_104 = arith.constant 0 : index
    %146 = vector.load %arg6[%c16_103, %c0_104] : memref<64x512xf32, #tpu.memory_space<vmem>>, vector<8x512xf32>
    %147 = arith.truncf %141 : vector<8x128xf32> to vector<8x128xbf16>
    %c128_105 = arith.constant 128 : index
    %c0_106 = arith.constant 0 : index
    %148 = vector.load %arg2[%c128_105, %c0_106] : memref<640x512xbf16, #tpu.memory_space<vmem>>, vector<128x512xbf16>
    %cst_107 = arith.constant dense<0.000000e+00> : vector<8x512xf32>
    %149 = tpu.matmul %147, %148, %cst_107 {dimension_numbers = #tpu.dot_dimension_numbers<[1], [0], [0], [1], [0, 0, 1, 1], [], []>} : vector<8x128xbf16>, vector<128x512xbf16>, vector<8x512xf32> -> vector<8x512xf32>
    %150 = arith.addf %146, %149 : vector<8x512xf32>
    %151 = vector.extract_strided_slice %150 {offsets = [0, 0], sizes = [8, 384], strides = [1, 1]} : vector<8x512xf32> to vector<8x384xf32>
    %cst_108 = arith.constant 5.000000e-01 : f32
    %152 = vector.broadcast %cst_108 : f32 to vector<8x384xf32>
    %153 = arith.mulf %152, %151 : vector<8x384xf32>
    %154 = math.tanh %153 : vector<8x384xf32>
    %cst_109 = arith.constant 5.000000e-01 : f32
    %155 = vector.broadcast %cst_109 : f32 to vector<8x384xf32>
    %156 = arith.mulf %155, %154 : vector<8x384xf32>
    %cst_110 = arith.constant 5.000000e-01 : f32
    %157 = vector.broadcast %cst_110 : f32 to vector<8x384xf32>
    %158 = arith.addf %156, %157 : vector<8x384xf32>
    %159 = vector.extract_strided_slice %158 {offsets = [0, 0], sizes = [8, 128], strides = [1, 1]} : vector<8x384xf32> to vector<8x128xf32>
    %160 = vector.extract_strided_slice %158 {offsets = [0, 128], sizes = [8, 128], strides = [1, 1]} : vector<8x384xf32> to vector<8x128xf32>
    %161 = vector.extract_strided_slice %158 {offsets = [0, 256], sizes = [8, 128], strides = [1, 1]} : vector<8x384xf32> to vector<8x128xf32>
    %162 = vector.extract_strided_slice %150 {offsets = [0, 384], sizes = [8, 128], strides = [1, 1]} : vector<8x512xf32> to vector<8x128xf32>
    %163 = math.tanh %162 : vector<8x128xf32>
    %164 = arith.mulf %160, %139 : vector<8x128xf32>
    %165 = arith.mulf %159, %163 : vector<8x128xf32>
    %166 = arith.addf %164, %165 : vector<8x128xf32>
    %167 = math.tanh %166 : vector<8x128xf32>
    %168 = arith.mulf %161, %167 : vector<8x128xf32>
    %169 = vector.extract_strided_slice %168 {offsets = [0, 0], sizes = [8, 64], strides = [1, 1]} : vector<8x128xf32> to vector<8x64xf32>
    %c16_111 = arith.constant 16 : index
    %c0_112 = arith.constant 0 : index
    %170 = vector.load %arg7[%c16_111, %c0_112] : memref<64x128xf32, #tpu.memory_space<vmem>>, vector<8x64xf32>
    tpu.vector_store %arg7[%c16_111, %c0_112], %169 {strides = array<i32>} : memref<64x128xf32, #tpu.memory_space<vmem>>, vector<8x64xf32>,
    %171 = vector.extract_strided_slice %168 {offsets = [0, 64], sizes = [8, 64], strides = [1, 1]} : vector<8x128xf32> to vector<8x64xf32>
    %c40_113 = arith.constant 40 : index
    %c64_114 = arith.constant 64 : index
    %172 = vector.load %arg7[%c40_113, %c64_114] : memref<64x128xf32, #tpu.memory_space<vmem>>, vector<8x64xf32>
    tpu.vector_store %arg7[%c40_113, %c64_114], %171 {strides = array<i32>} : memref<64x128xf32, #tpu.memory_space<vmem>>, vector<8x64xf32>,
    %c24_115 = arith.constant 24 : index
    %c0_116 = arith.constant 0 : index
    %173 = vector.load %arg6[%c24_115, %c0_116] : memref<64x512xf32, #tpu.memory_space<vmem>>, vector<8x512xf32>
    %174 = arith.truncf %168 : vector<8x128xf32> to vector<8x128xbf16>
    %c128_117 = arith.constant 128 : index
    %c0_118 = arith.constant 0 : index
    %175 = vector.load %arg2[%c128_117, %c0_118] : memref<640x512xbf16, #tpu.memory_space<vmem>>, vector<128x512xbf16>
    %cst_119 = arith.constant dense<0.000000e+00> : vector<8x512xf32>
    %176 = tpu.matmul %174, %175, %cst_119 {dimension_numbers = #tpu.dot_dimension_numbers<[1], [0], [0], [1], [0, 0, 1, 1], [], []>} : vector<8x128xbf16>, vector<128x512xbf16>, vector<8x512xf32> -> vector<8x512xf32>
    %177 = arith.addf %173, %176 : vector<8x512xf32>
    %178 = vector.extract_strided_slice %177 {offsets = [0, 0], sizes = [8, 384], strides = [1, 1]} : vector<8x512xf32> to vector<8x384xf32>
    %cst_120 = arith.constant 5.000000e-01 : f32
    %179 = vector.broadcast %cst_120 : f32 to vector<8x384xf32>
    %180 = arith.mulf %179, %178 : vector<8x384xf32>
    %181 = math.tanh %180 : vector<8x384xf32>
    %cst_121 = arith.constant 5.000000e-01 : f32
    %182 = vector.broadcast %cst_121 : f32 to vector<8x384xf32>
    %183 = arith.mulf %182, %181 : vector<8x384xf32>
    %cst_122 = arith.constant 5.000000e-01 : f32
    %184 = vector.broadcast %cst_122 : f32 to vector<8x384xf32>
    %185 = arith.addf %183, %184 : vector<8x384xf32>
    %186 = vector.extract_strided_slice %185 {offsets = [0, 0], sizes = [8, 128], strides = [1, 1]} : vector<8x384xf32> to vector<8x128xf32>
    %187 = vector.extract_strided_slice %185 {offsets = [0, 128], sizes = [8, 128], strides = [1, 1]} : vector<8x384xf32> to vector<8x128xf32>
    %188 = vector.extract_strided_slice %185 {offsets = [0, 256], sizes = [8, 128], strides = [1, 1]} : vector<8x384xf32> to vector<8x128xf32>
    %189 = vector.extract_strided_slice %177 {offsets = [0, 384], sizes = [8, 128], strides = [1, 1]} : vector<8x512xf32> to vector<8x128xf32>
    %190 = math.tanh %189 : vector<8x128xf32>
    %191 = arith.mulf %187, %166 : vector<8x128xf32>
    %192 = arith.mulf %186, %190 : vector<8x128xf32>
    %193 = arith.addf %191, %192 : vector<8x128xf32>
    %194 = math.tanh %193 : vector<8x128xf32>
    %195 = arith.mulf %188, %194 : vector<8x128xf32>
    %196 = vector.extract_strided_slice %195 {offsets = [0, 0], sizes = [8, 64], strides = [1, 1]} : vector<8x128xf32> to vector<8x64xf32>
    %c24_123 = arith.constant 24 : index
    %c0_124 = arith.constant 0 : index
    %197 = vector.load %arg7[%c24_123, %c0_124] : memref<64x128xf32, #tpu.memory_space<vmem>>, vector<8x64xf32>
    tpu.vector_store %arg7[%c24_123, %c0_124], %196 {strides = array<i32>} : memref<64x128xf32, #tpu.memory_space<vmem>>, vector<8x64xf32>,
    %198 = vector.extract_strided_slice %195 {offsets = [0, 64], sizes = [8, 64], strides = [1, 1]} : vector<8x128xf32> to vector<8x64xf32>
    %c32_125 = arith.constant 32 : index
    %c64_126 = arith.constant 64 : index
    %199 = vector.load %arg7[%c32_125, %c64_126] : memref<64x128xf32, #tpu.memory_space<vmem>>, vector<8x64xf32>
    tpu.vector_store %arg7[%c32_125, %c64_126], %198 {strides = array<i32>} : memref<64x128xf32, #tpu.memory_space<vmem>>, vector<8x64xf32>,
    %c32_127 = arith.constant 32 : index
    %c0_128 = arith.constant 0 : index
    %200 = vector.load %arg6[%c32_127, %c0_128] : memref<64x512xf32, #tpu.memory_space<vmem>>, vector<8x512xf32>
    %201 = arith.truncf %195 : vector<8x128xf32> to vector<8x128xbf16>
    %c128_129 = arith.constant 128 : index
    %c0_130 = arith.constant 0 : index
    %202 = vector.load %arg2[%c128_129, %c0_130] : memref<640x512xbf16, #tpu.memory_space<vmem>>, vector<128x512xbf16>
    %cst_131 = arith.constant dense<0.000000e+00> : vector<8x512xf32>
    %203 = tpu.matmul %201, %202, %cst_131 {dimension_numbers = #tpu.dot_dimension_numbers<[1], [0], [0], [1], [0, 0, 1, 1], [], []>} : vector<8x128xbf16>, vector<128x512xbf16>, vector<8x512xf32> -> vector<8x512xf32>
    %204 = arith.addf %200, %203 : vector<8x512xf32>
    %205 = vector.extract_strided_slice %204 {offsets = [0, 0], sizes = [8, 384], strides = [1, 1]} : vector<8x512xf32> to vector<8x384xf32>
    %cst_132 = arith.constant 5.000000e-01 : f32
    %206 = vector.broadcast %cst_132 : f32 to vector<8x384xf32>
    %207 = arith.mulf %206, %205 : vector<8x384xf32>
    %208 = math.tanh %207 : vector<8x384xf32>
    %cst_133 = arith.constant 5.000000e-01 : f32
    %209 = vector.broadcast %cst_133 : f32 to vector<8x384xf32>
    %210 = arith.mulf %209, %208 : vector<8x384xf32>
    %cst_134 = arith.constant 5.000000e-01 : f32
    %211 = vector.broadcast %cst_134 : f32 to vector<8x384xf32>
    %212 = arith.addf %210, %211 : vector<8x384xf32>
    %213 = vector.extract_strided_slice %212 {offsets = [0, 0], sizes = [8, 128], strides = [1, 1]} : vector<8x384xf32> to vector<8x128xf32>
    %214 = vector.extract_strided_slice %212 {offsets = [0, 128], sizes = [8, 128], strides = [1, 1]} : vector<8x384xf32> to vector<8x128xf32>
    %215 = vector.extract_strided_slice %212 {offsets = [0, 256], sizes = [8, 128], strides = [1, 1]} : vector<8x384xf32> to vector<8x128xf32>
    %216 = vector.extract_strided_slice %204 {offsets = [0, 384], sizes = [8, 128], strides = [1, 1]} : vector<8x512xf32> to vector<8x128xf32>
    %217 = math.tanh %216 : vector<8x128xf32>
    %218 = arith.mulf %214, %193 : vector<8x128xf32>
    %219 = arith.mulf %213, %217 : vector<8x128xf32>
    %220 = arith.addf %218, %219 : vector<8x128xf32>
    %221 = math.tanh %220 : vector<8x128xf32>
    %222 = arith.mulf %215, %221 : vector<8x128xf32>
    %223 = vector.extract_strided_slice %222 {offsets = [0, 0], sizes = [8, 64], strides = [1, 1]} : vector<8x128xf32> to vector<8x64xf32>
    %c32_135 = arith.constant 32 : index
    %c0_136 = arith.constant 0 : index
    %224 = vector.load %arg7[%c32_135, %c0_136] : memref<64x128xf32, #tpu.memory_space<vmem>>, vector<8x64xf32>
    tpu.vector_store %arg7[%c32_135, %c0_136], %223 {strides = array<i32>} : memref<64x128xf32, #tpu.memory_space<vmem>>, vector<8x64xf32>,
    %225 = vector.extract_strided_slice %222 {offsets = [0, 64], sizes = [8, 64], strides = [1, 1]} : vector<8x128xf32> to vector<8x64xf32>
    %c24_137 = arith.constant 24 : index
    %c64_138 = arith.constant 64 : index
    %226 = vector.load %arg7[%c24_137, %c64_138] : memref<64x128xf32, #tpu.memory_space<vmem>>, vector<8x64xf32>
    tpu.vector_store %arg7[%c24_137, %c64_138], %225 {strides = array<i32>} : memref<64x128xf32, #tpu.memory_space<vmem>>, vector<8x64xf32>,
    %c40_139 = arith.constant 40 : index
    %c0_140 = arith.constant 0 : index
    %227 = vector.load %arg6[%c40_139, %c0_140] : memref<64x512xf32, #tpu.memory_space<vmem>>, vector<8x512xf32>
    %228 = arith.truncf %222 : vector<8x128xf32> to vector<8x128xbf16>
    %c128_141 = arith.constant 128 : index
    %c0_142 = arith.constant 0 : index
    %229 = vector.load %arg2[%c128_141, %c0_142] : memref<640x512xbf16, #tpu.memory_space<vmem>>, vector<128x512xbf16>
    %cst_143 = arith.constant dense<0.000000e+00> : vector<8x512xf32>
    %230 = tpu.matmul %228, %229, %cst_143 {dimension_numbers = #tpu.dot_dimension_numbers<[1], [0], [0], [1], [0, 0, 1, 1], [], []>} : vector<8x128xbf16>, vector<128x512xbf16>, vector<8x512xf32> -> vector<8x512xf32>
    %231 = arith.addf %227, %230 : vector<8x512xf32>
    %232 = vector.extract_strided_slice %231 {offsets = [0, 0], sizes = [8, 384], strides = [1, 1]} : vector<8x512xf32> to vector<8x384xf32>
    %cst_144 = arith.constant 5.000000e-01 : f32
    %233 = vector.broadcast %cst_144 : f32 to vector<8x384xf32>
    %234 = arith.mulf %233, %232 : vector<8x384xf32>
    %235 = math.tanh %234 : vector<8x384xf32>
    %cst_145 = arith.constant 5.000000e-01 : f32
    %236 = vector.broadcast %cst_145 : f32 to vector<8x384xf32>
    %237 = arith.mulf %236, %235 : vector<8x384xf32>
    %cst_146 = arith.constant 5.000000e-01 : f32
    %238 = vector.broadcast %cst_146 : f32 to vector<8x384xf32>
    %239 = arith.addf %237, %238 : vector<8x384xf32>
    %240 = vector.extract_strided_slice %239 {offsets = [0, 0], sizes = [8, 128], strides = [1, 1]} : vector<8x384xf32> to vector<8x128xf32>
    %241 = vector.extract_strided_slice %239 {offsets = [0, 128], sizes = [8, 128], strides = [1, 1]} : vector<8x384xf32> to vector<8x128xf32>
    %242 = vector.extract_strided_slice %239 {offsets = [0, 256], sizes = [8, 128], strides = [1, 1]} : vector<8x384xf32> to vector<8x128xf32>
    %243 = vector.extract_strided_slice %231 {offsets = [0, 384], sizes = [8, 128], strides = [1, 1]} : vector<8x512xf32> to vector<8x128xf32>
    %244 = math.tanh %243 : vector<8x128xf32>
    %245 = arith.mulf %241, %220 : vector<8x128xf32>
    %246 = arith.mulf %240, %244 : vector<8x128xf32>
    %247 = arith.addf %245, %246 : vector<8x128xf32>
    %248 = math.tanh %247 : vector<8x128xf32>
    %249 = arith.mulf %242, %248 : vector<8x128xf32>
    %250 = vector.extract_strided_slice %249 {offsets = [0, 0], sizes = [8, 64], strides = [1, 1]} : vector<8x128xf32> to vector<8x64xf32>
    %c40_147 = arith.constant 40 : index
    %c0_148 = arith.constant 0 : index
    %251 = vector.load %arg7[%c40_147, %c0_148] : memref<64x128xf32, #tpu.memory_space<vmem>>, vector<8x64xf32>
    tpu.vector_store %arg7[%c40_147, %c0_148], %250 {strides = array<i32>} : memref<64x128xf32, #tpu.memory_space<vmem>>, vector<8x64xf32>,
    %252 = vector.extract_strided_slice %249 {offsets = [0, 64], sizes = [8, 64], strides = [1, 1]} : vector<8x128xf32> to vector<8x64xf32>
    %c16_149 = arith.constant 16 : index
    %c64_150 = arith.constant 64 : index
    %253 = vector.load %arg7[%c16_149, %c64_150] : memref<64x128xf32, #tpu.memory_space<vmem>>, vector<8x64xf32>
    tpu.vector_store %arg7[%c16_149, %c64_150], %252 {strides = array<i32>} : memref<64x128xf32, #tpu.memory_space<vmem>>, vector<8x64xf32>,
    %c48_151 = arith.constant 48 : index
    %c0_152 = arith.constant 0 : index
    %254 = vector.load %arg6[%c48_151, %c0_152] : memref<64x512xf32, #tpu.memory_space<vmem>>, vector<8x512xf32>
    %255 = arith.truncf %249 : vector<8x128xf32> to vector<8x128xbf16>
    %c128_153 = arith.constant 128 : index
    %c0_154 = arith.constant 0 : index
    %256 = vector.load %arg2[%c128_153, %c0_154] : memref<640x512xbf16, #tpu.memory_space<vmem>>, vector<128x512xbf16>
    %cst_155 = arith.constant dense<0.000000e+00> : vector<8x512xf32>
    %257 = tpu.matmul %255, %256, %cst_155 {dimension_numbers = #tpu.dot_dimension_numbers<[1], [0], [0], [1], [0, 0, 1, 1], [], []>} : vector<8x128xbf16>, vector<128x512xbf16>, vector<8x512xf32> -> vector<8x512xf32>
    %258 = arith.addf %254, %257 : vector<8x512xf32>
    %259 = vector.extract_strided_slice %258 {offsets = [0, 0], sizes = [8, 384], strides = [1, 1]} : vector<8x512xf32> to vector<8x384xf32>
    %cst_156 = arith.constant 5.000000e-01 : f32
    %260 = vector.broadcast %cst_156 : f32 to vector<8x384xf32>
    %261 = arith.mulf %260, %259 : vector<8x384xf32>
    %262 = math.tanh %261 : vector<8x384xf32>
    %cst_157 = arith.constant 5.000000e-01 : f32
    %263 = vector.broadcast %cst_157 : f32 to vector<8x384xf32>
    %264 = arith.mulf %263, %262 : vector<8x384xf32>
    %cst_158 = arith.constant 5.000000e-01 : f32
    %265 = vector.broadcast %cst_158 : f32 to vector<8x384xf32>
    %266 = arith.addf %264, %265 : vector<8x384xf32>
    %267 = vector.extract_strided_slice %266 {offsets = [0, 0], sizes = [8, 128], strides = [1, 1]} : vector<8x384xf32> to vector<8x128xf32>
    %268 = vector.extract_strided_slice %266 {offsets = [0, 128], sizes = [8, 128], strides = [1, 1]} : vector<8x384xf32> to vector<8x128xf32>
    %269 = vector.extract_strided_slice %266 {offsets = [0, 256], sizes = [8, 128], strides = [1, 1]} : vector<8x384xf32> to vector<8x128xf32>
    %270 = vector.extract_strided_slice %258 {offsets = [0, 384], sizes = [8, 128], strides = [1, 1]} : vector<8x512xf32> to vector<8x128xf32>
    %271 = math.tanh %270 : vector<8x128xf32>
    %272 = arith.mulf %268, %247 : vector<8x128xf32>
    %273 = arith.mulf %267, %271 : vector<8x128xf32>
    %274 = arith.addf %272, %273 : vector<8x128xf32>
    %275 = math.tanh %274 : vector<8x128xf32>
    %276 = arith.mulf %269, %275 : vector<8x128xf32>
    %277 = vector.extract_strided_slice %276 {offsets = [0, 0], sizes = [8, 64], strides = [1, 1]} : vector<8x128xf32> to vector<8x64xf32>
    %c48_159 = arith.constant 48 : index
    %c0_160 = arith.constant 0 : index
    %278 = vector.load %arg7[%c48_159, %c0_160] : memref<64x128xf32, #tpu.memory_space<vmem>>, vector<8x64xf32>
    tpu.vector_store %arg7[%c48_159, %c0_160], %277 {strides = array<i32>} : memref<64x128xf32, #tpu.memory_space<vmem>>, vector<8x64xf32>,
    %279 = vector.extract_strided_slice %276 {offsets = [0, 64], sizes = [8, 64], strides = [1, 1]} : vector<8x128xf32> to vector<8x64xf32>
    %c8_161 = arith.constant 8 : index
    %c64_162 = arith.constant 64 : index
    %280 = vector.load %arg7[%c8_161, %c64_162] : memref<64x128xf32, #tpu.memory_space<vmem>>, vector<8x64xf32>
    tpu.vector_store %arg7[%c8_161, %c64_162], %279 {strides = array<i32>} : memref<64x128xf32, #tpu.memory_space<vmem>>, vector<8x64xf32>,
    %c56_163 = arith.constant 56 : index
    %c0_164 = arith.constant 0 : index
    %281 = vector.load %arg6[%c56_163, %c0_164] : memref<64x512xf32, #tpu.memory_space<vmem>>, vector<8x512xf32>
    %282 = arith.truncf %276 : vector<8x128xf32> to vector<8x128xbf16>
    %c128_165 = arith.constant 128 : index
    %c0_166 = arith.constant 0 : index
    %283 = vector.load %arg2[%c128_165, %c0_166] : memref<640x512xbf16, #tpu.memory_space<vmem>>, vector<128x512xbf16>
    %cst_167 = arith.constant dense<0.000000e+00> : vector<8x512xf32>
    %284 = tpu.matmul %282, %283, %cst_167 {dimension_numbers = #tpu.dot_dimension_numbers<[1], [0], [0], [1], [0, 0, 1, 1], [], []>} : vector<8x128xbf16>, vector<128x512xbf16>, vector<8x512xf32> -> vector<8x512xf32>
    %285 = arith.addf %281, %284 : vector<8x512xf32>
    %286 = vector.extract_strided_slice %285 {offsets = [0, 0], sizes = [8, 384], strides = [1, 1]} : vector<8x512xf32> to vector<8x384xf32>
    %cst_168 = arith.constant 5.000000e-01 : f32
    %287 = vector.broadcast %cst_168 : f32 to vector<8x384xf32>
    %288 = arith.mulf %287, %286 : vector<8x384xf32>
    %289 = math.tanh %288 : vector<8x384xf32>
    %cst_169 = arith.constant 5.000000e-01 : f32
    %290 = vector.broadcast %cst_169 : f32 to vector<8x384xf32>
    %291 = arith.mulf %290, %289 : vector<8x384xf32>
    %cst_170 = arith.constant 5.000000e-01 : f32
    %292 = vector.broadcast %cst_170 : f32 to vector<8x384xf32>
    %293 = arith.addf %291, %292 : vector<8x384xf32>
    %294 = vector.extract_strided_slice %293 {offsets = [0, 0], sizes = [8, 128], strides = [1, 1]} : vector<8x384xf32> to vector<8x128xf32>
    %295 = vector.extract_strided_slice %293 {offsets = [0, 128], sizes = [8, 128], strides = [1, 1]} : vector<8x384xf32> to vector<8x128xf32>
    %296 = vector.extract_strided_slice %293 {offsets = [0, 256], sizes = [8, 128], strides = [1, 1]} : vector<8x384xf32> to vector<8x128xf32>
    %297 = vector.extract_strided_slice %285 {offsets = [0, 384], sizes = [8, 128], strides = [1, 1]} : vector<8x512xf32> to vector<8x128xf32>
    %298 = math.tanh %297 : vector<8x128xf32>
    %299 = arith.mulf %295, %274 : vector<8x128xf32>
    %300 = arith.mulf %294, %298 : vector<8x128xf32>
    %301 = arith.addf %299, %300 : vector<8x128xf32>
    %302 = math.tanh %301 : vector<8x128xf32>
    %303 = arith.mulf %296, %302 : vector<8x128xf32>
    %304 = vector.extract_strided_slice %303 {offsets = [0, 0], sizes = [8, 64], strides = [1, 1]} : vector<8x128xf32> to vector<8x64xf32>
    %c56_171 = arith.constant 56 : index
    %c0_172 = arith.constant 0 : index
    %305 = vector.load %arg7[%c56_171, %c0_172] : memref<64x128xf32, #tpu.memory_space<vmem>>, vector<8x64xf32>
    tpu.vector_store %arg7[%c56_171, %c0_172], %304 {strides = array<i32>} : memref<64x128xf32, #tpu.memory_space<vmem>>, vector<8x64xf32>,
    %306 = vector.extract_strided_slice %303 {offsets = [0, 64], sizes = [8, 64], strides = [1, 1]} : vector<8x128xf32> to vector<8x64xf32>
    %c0_173 = arith.constant 0 : index
    %c64_174 = arith.constant 64 : index
    %307 = vector.load %arg7[%c0_173, %c64_174] : memref<64x128xf32, #tpu.memory_space<vmem>>, vector<8x64xf32>
    tpu.vector_store %arg7[%c0_173, %c64_174], %306 {strides = array<i32>} : memref<64x128xf32, #tpu.memory_space<vmem>>, vector<8x64xf32>,
    %c0_175 = arith.constant 0 : index
    %c0_176 = arith.constant 0 : index
    %308 = vector.load %arg7[%c0_175, %c0_176] : memref<64x128xf32, #tpu.memory_space<vmem>>, vector<64x128xf32>
    %309 = arith.truncf %308 : vector<64x128xf32> to vector<64x128xbf16>
    %c256 = arith.constant 256 : index
    %c0_177 = arith.constant 0 : index
    %310 = vector.load %arg2[%c256, %c0_177] : memref<640x512xbf16, #tpu.memory_space<vmem>>, vector<128x512xbf16>
    %cst_178 = arith.constant dense<0.000000e+00> : vector<64x512xf32>
    %311 = tpu.matmul %309, %310, %cst_178 {dimension_numbers = #tpu.dot_dimension_numbers<[1], [0], [0], [1], [0, 0, 1, 1], [], []>} : vector<64x128xbf16>, vector<128x512xbf16>, vector<64x512xf32> -> vector<64x512xf32>
    %c1_179 = arith.constant 1 : index
    %c0_180 = arith.constant 0 : index
    %312 = vector.load %arg3[%c1_179, %c0_180] : memref<8x512xf32, #tpu.memory_space<vmem>>, vector<1x512xf32>
    %313 = vector.broadcast %312 : vector<1x512xf32> to vector<64x512xf32>
    %314 = arith.addf %311, %313 : vector<64x512xf32>
    %c0_181 = arith.constant 0 : index
    %c0_182 = arith.constant 0 : index
    %315 = vector.load %arg6[%c0_181, %c0_182] : memref<64x512xf32, #tpu.memory_space<vmem>>, vector<64x512xf32>
    tpu.vector_store %arg6[%c0_181, %c0_182], %314 {strides = array<i32>} : memref<64x512xf32, #tpu.memory_space<vmem>>, vector<64x512xf32>,
    %316 = tpu.iota {dimensions = array<i32: 1>} : vector<8x128xi32>
    %c64_i32 = arith.constant 64 : i32
    %317 = vector.broadcast %c64_i32 : i32 to vector<8x128xi32>
    %318 = arith.cmpi slt, %316, %317 : vector<8x128xi32>
    %319 = arith.extui %318 : vector<8x128xi1> to vector<8x128xi32>
    %320 = arith.sitofp %319 : vector<8x128xi32> to vector<8x128xf32>
    %cst_183 = arith.constant 0.000000e+00 : f32
    %321 = vector.broadcast %cst_183 : f32 to vector<8x128xf32>
    %cst_184 = arith.constant 0.000000e+00 : f32
    %322 = vector.broadcast %cst_184 : f32 to vector<8x128xf32>
    %c0_185 = arith.constant 0 : index
    %c0_186 = arith.constant 0 : index
    %323 = vector.load %arg6[%c0_185, %c0_186] : memref<64x512xf32, #tpu.memory_space<vmem>>, vector<8x512xf32>
    %324 = arith.truncf %321 : vector<8x128xf32> to vector<8x128xbf16>
    %c384 = arith.constant 384 : index
    %c0_187 = arith.constant 0 : index
    %325 = vector.load %arg2[%c384, %c0_187] : memref<640x512xbf16, #tpu.memory_space<vmem>>, vector<128x512xbf16>
    %cst_188 = arith.constant dense<0.000000e+00> : vector<8x512xf32>
    %326 = tpu.matmul %324, %325, %cst_188 {dimension_numbers = #tpu.dot_dimension_numbers<[1], [0], [0], [1], [0, 0, 1, 1], [], []>} : vector<8x128xbf16>, vector<128x512xbf16>, vector<8x512xf32> -> vector<8x512xf32>
    %327 = arith.addf %323, %326 : vector<8x512xf32>
    %328 = vector.extract_strided_slice %327 {offsets = [0, 0], sizes = [8, 384], strides = [1, 1]} : vector<8x512xf32> to vector<8x384xf32>
    %cst_189 = arith.constant 5.000000e-01 : f32
    %329 = vector.broadcast %cst_189 : f32 to vector<8x384xf32>
    %330 = arith.mulf %329, %328 : vector<8x384xf32>
    %331 = math.tanh %330 : vector<8x384xf32>
    %cst_190 = arith.constant 5.000000e-01 : f32
    %332 = vector.broadcast %cst_190 : f32 to vector<8x384xf32>
    %333 = arith.mulf %332, %331 : vector<8x384xf32>
    %cst_191 = arith.constant 5.000000e-01 : f32
    %334 = vector.broadcast %cst_191 : f32 to vector<8x384xf32>
    %335 = arith.addf %333, %334 : vector<8x384xf32>
    %336 = vector.extract_strided_slice %335 {offsets = [0, 0], sizes = [8, 128], strides = [1, 1]} : vector<8x384xf32> to vector<8x128xf32>
    %337 = vector.extract_strided_slice %335 {offsets = [0, 128], sizes = [8, 128], strides = [1, 1]} : vector<8x384xf32> to vector<8x128xf32>
    %338 = vector.extract_strided_slice %335 {offsets = [0, 256], sizes = [8, 128], strides = [1, 1]} : vector<8x384xf32> to vector<8x128xf32>
    %339 = vector.extract_strided_slice %327 {offsets = [0, 384], sizes = [8, 128], strides = [1, 1]} : vector<8x512xf32> to vector<8x128xf32>
    %340 = math.tanh %339 : vector<8x128xf32>
    %341 = arith.mulf %322, %320 : vector<8x128xf32>
    %342 = arith.mulf %337, %341 : vector<8x128xf32>
    %343 = arith.mulf %336, %340 : vector<8x128xf32>
    %344 = arith.addf %342, %343 : vector<8x128xf32>
    %345 = math.tanh %344 : vector<8x128xf32>
    %346 = arith.mulf %338, %345 : vector<8x128xf32>
    %c8_192 = arith.constant 8 : index
    %c0_193 = arith.constant 0 : index
    %347 = vector.load %arg6[%c8_192, %c0_193] : memref<64x512xf32, #tpu.memory_space<vmem>>, vector<8x512xf32>
    %348 = arith.truncf %346 : vector<8x128xf32> to vector<8x128xbf16>
    %c384_194 = arith.constant 384 : index
    %c0_195 = arith.constant 0 : index
    %349 = vector.load %arg2[%c384_194, %c0_195] : memref<640x512xbf16, #tpu.memory_space<vmem>>, vector<128x512xbf16>
    %cst_196 = arith.constant dense<0.000000e+00> : vector<8x512xf32>
    %350 = tpu.matmul %348, %349, %cst_196 {dimension_numbers = #tpu.dot_dimension_numbers<[1], [0], [0], [1], [0, 0, 1, 1], [], []>} : vector<8x128xbf16>, vector<128x512xbf16>, vector<8x512xf32> -> vector<8x512xf32>
    %351 = arith.addf %347, %350 : vector<8x512xf32>
    %352 = vector.extract_strided_slice %351 {offsets = [0, 0], sizes = [8, 384], strides = [1, 1]} : vector<8x512xf32> to vector<8x384xf32>
    %cst_197 = arith.constant 5.000000e-01 : f32
    %353 = vector.broadcast %cst_197 : f32 to vector<8x384xf32>
    %354 = arith.mulf %353, %352 : vector<8x384xf32>
    %355 = math.tanh %354 : vector<8x384xf32>
    %cst_198 = arith.constant 5.000000e-01 : f32
    %356 = vector.broadcast %cst_198 : f32 to vector<8x384xf32>
    %357 = arith.mulf %356, %355 : vector<8x384xf32>
    %cst_199 = arith.constant 5.000000e-01 : f32
    %358 = vector.broadcast %cst_199 : f32 to vector<8x384xf32>
    %359 = arith.addf %357, %358 : vector<8x384xf32>
    %360 = vector.extract_strided_slice %359 {offsets = [0, 0], sizes = [8, 128], strides = [1, 1]} : vector<8x384xf32> to vector<8x128xf32>
    %361 = vector.extract_strided_slice %359 {offsets = [0, 128], sizes = [8, 128], strides = [1, 1]} : vector<8x384xf32> to vector<8x128xf32>
    %362 = vector.extract_strided_slice %359 {offsets = [0, 256], sizes = [8, 128], strides = [1, 1]} : vector<8x384xf32> to vector<8x128xf32>
    %363 = vector.extract_strided_slice %351 {offsets = [0, 384], sizes = [8, 128], strides = [1, 1]} : vector<8x512xf32> to vector<8x128xf32>
    %364 = math.tanh %363 : vector<8x128xf32>
    %365 = arith.mulf %344, %320 : vector<8x128xf32>
    %366 = arith.mulf %361, %365 : vector<8x128xf32>
    %367 = arith.mulf %360, %364 : vector<8x128xf32>
    %368 = arith.addf %366, %367 : vector<8x128xf32>
    %369 = math.tanh %368 : vector<8x128xf32>
    %370 = arith.mulf %362, %369 : vector<8x128xf32>
    %c16_200 = arith.constant 16 : index
    %c0_201 = arith.constant 0 : index
    %371 = vector.load %arg6[%c16_200, %c0_201] : memref<64x512xf32, #tpu.memory_space<vmem>>, vector<8x512xf32>
    %372 = arith.truncf %370 : vector<8x128xf32> to vector<8x128xbf16>
    %c384_202 = arith.constant 384 : index
    %c0_203 = arith.constant 0 : index
    %373 = vector.load %arg2[%c384_202, %c0_203] : memref<640x512xbf16, #tpu.memory_space<vmem>>, vector<128x512xbf16>
    %cst_204 = arith.constant dense<0.000000e+00> : vector<8x512xf32>
    %374 = tpu.matmul %372, %373, %cst_204 {dimension_numbers = #tpu.dot_dimension_numbers<[1], [0], [0], [1], [0, 0, 1, 1], [], []>} : vector<8x128xbf16>, vector<128x512xbf16>, vector<8x512xf32> -> vector<8x512xf32>
    %375 = arith.addf %371, %374 : vector<8x512xf32>
    %376 = vector.extract_strided_slice %375 {offsets = [0, 0], sizes = [8, 384], strides = [1, 1]} : vector<8x512xf32> to vector<8x384xf32>
    %cst_205 = arith.constant 5.000000e-01 : f32
    %377 = vector.broadcast %cst_205 : f32 to vector<8x384xf32>
    %378 = arith.mulf %377, %376 : vector<8x384xf32>
    %379 = math.tanh %378 : vector<8x384xf32>
    %cst_206 = arith.constant 5.000000e-01 : f32
    %380 = vector.broadcast %cst_206 : f32 to vector<8x384xf32>
    %381 = arith.mulf %380, %379 : vector<8x384xf32>
    %cst_207 = arith.constant 5.000000e-01 : f32
    %382 = vector.broadcast %cst_207 : f32 to vector<8x384xf32>
    %383 = arith.addf %381, %382 : vector<8x384xf32>
    %384 = vector.extract_strided_slice %383 {offsets = [0, 0], sizes = [8, 128], strides = [1, 1]} : vector<8x384xf32> to vector<8x128xf32>
    %385 = vector.extract_strided_slice %383 {offsets = [0, 128], sizes = [8, 128], strides = [1, 1]} : vector<8x384xf32> to vector<8x128xf32>
    %386 = vector.extract_strided_slice %383 {offsets = [0, 256], sizes = [8, 128], strides = [1, 1]} : vector<8x384xf32> to vector<8x128xf32>
    %387 = vector.extract_strided_slice %375 {offsets = [0, 384], sizes = [8, 128], strides = [1, 1]} : vector<8x512xf32> to vector<8x128xf32>
    %388 = math.tanh %387 : vector<8x128xf32>
    %389 = arith.mulf %368, %320 : vector<8x128xf32>
    %390 = arith.mulf %385, %389 : vector<8x128xf32>
    %391 = arith.mulf %384, %388 : vector<8x128xf32>
    %392 = arith.addf %390, %391 : vector<8x128xf32>
    %393 = math.tanh %392 : vector<8x128xf32>
    %394 = arith.mulf %386, %393 : vector<8x128xf32>
    %c24_208 = arith.constant 24 : index
    %c0_209 = arith.constant 0 : index
    %395 = vector.load %arg6[%c24_208, %c0_209] : memref<64x512xf32, #tpu.memory_space<vmem>>, vector<8x512xf32>
    %396 = arith.truncf %394 : vector<8x128xf32> to vector<8x128xbf16>
    %c384_210 = arith.constant 384 : index
    %c0_211 = arith.constant 0 : index
    %397 = vector.load %arg2[%c384_210, %c0_211] : memref<640x512xbf16, #tpu.memory_space<vmem>>, vector<128x512xbf16>
    %cst_212 = arith.constant dense<0.000000e+00> : vector<8x512xf32>
    %398 = tpu.matmul %396, %397, %cst_212 {dimension_numbers = #tpu.dot_dimension_numbers<[1], [0], [0], [1], [0, 0, 1, 1], [], []>} : vector<8x128xbf16>, vector<128x512xbf16>, vector<8x512xf32> -> vector<8x512xf32>
    %399 = arith.addf %395, %398 : vector<8x512xf32>
    %400 = vector.extract_strided_slice %399 {offsets = [0, 0], sizes = [8, 384], strides = [1, 1]} : vector<8x512xf32> to vector<8x384xf32>
    %cst_213 = arith.constant 5.000000e-01 : f32
    %401 = vector.broadcast %cst_213 : f32 to vector<8x384xf32>
    %402 = arith.mulf %401, %400 : vector<8x384xf32>
    %403 = math.tanh %402 : vector<8x384xf32>
    %cst_214 = arith.constant 5.000000e-01 : f32
    %404 = vector.broadcast %cst_214 : f32 to vector<8x384xf32>
    %405 = arith.mulf %404, %403 : vector<8x384xf32>
    %cst_215 = arith.constant 5.000000e-01 : f32
    %406 = vector.broadcast %cst_215 : f32 to vector<8x384xf32>
    %407 = arith.addf %405, %406 : vector<8x384xf32>
    %408 = vector.extract_strided_slice %407 {offsets = [0, 0], sizes = [8, 128], strides = [1, 1]} : vector<8x384xf32> to vector<8x128xf32>
    %409 = vector.extract_strided_slice %407 {offsets = [0, 128], sizes = [8, 128], strides = [1, 1]} : vector<8x384xf32> to vector<8x128xf32>
    %410 = vector.extract_strided_slice %407 {offsets = [0, 256], sizes = [8, 128], strides = [1, 1]} : vector<8x384xf32> to vector<8x128xf32>
    %411 = vector.extract_strided_slice %399 {offsets = [0, 384], sizes = [8, 128], strides = [1, 1]} : vector<8x512xf32> to vector<8x128xf32>
    %412 = math.tanh %411 : vector<8x128xf32>
    %413 = arith.mulf %392, %320 : vector<8x128xf32>
    %414 = arith.mulf %409, %413 : vector<8x128xf32>
    %415 = arith.mulf %408, %412 : vector<8x128xf32>
    %416 = arith.addf %414, %415 : vector<8x128xf32>
    %417 = math.tanh %416 : vector<8x128xf32>
    %418 = arith.mulf %410, %417 : vector<8x128xf32>
    %c32_216 = arith.constant 32 : index
    %c0_217 = arith.constant 0 : index
    %419 = vector.load %arg6[%c32_216, %c0_217] : memref<64x512xf32, #tpu.memory_space<vmem>>, vector<8x512xf32>
    %420 = arith.truncf %418 : vector<8x128xf32> to vector<8x128xbf16>
    %c384_218 = arith.constant 384 : index
    %c0_219 = arith.constant 0 : index
    %421 = vector.load %arg2[%c384_218, %c0_219] : memref<640x512xbf16, #tpu.memory_space<vmem>>, vector<128x512xbf16>
    %cst_220 = arith.constant dense<0.000000e+00> : vector<8x512xf32>
    %422 = tpu.matmul %420, %421, %cst_220 {dimension_numbers = #tpu.dot_dimension_numbers<[1], [0], [0], [1], [0, 0, 1, 1], [], []>} : vector<8x128xbf16>, vector<128x512xbf16>, vector<8x512xf32> -> vector<8x512xf32>
    %423 = arith.addf %419, %422 : vector<8x512xf32>
    %424 = vector.extract_strided_slice %423 {offsets = [0, 0], sizes = [8, 384], strides = [1, 1]} : vector<8x512xf32> to vector<8x384xf32>
    %cst_221 = arith.constant 5.000000e-01 : f32
    %425 = vector.broadcast %cst_221 : f32 to vector<8x384xf32>
    %426 = arith.mulf %425, %424 : vector<8x384xf32>
    %427 = math.tanh %426 : vector<8x384xf32>
    %cst_222 = arith.constant 5.000000e-01 : f32
    %428 = vector.broadcast %cst_222 : f32 to vector<8x384xf32>
    %429 = arith.mulf %428, %427 : vector<8x384xf32>
    %cst_223 = arith.constant 5.000000e-01 : f32
    %430 = vector.broadcast %cst_223 : f32 to vector<8x384xf32>
    %431 = arith.addf %429, %430 : vector<8x384xf32>
    %432 = vector.extract_strided_slice %431 {offsets = [0, 0], sizes = [8, 128], strides = [1, 1]} : vector<8x384xf32> to vector<8x128xf32>
    %433 = vector.extract_strided_slice %431 {offsets = [0, 128], sizes = [8, 128], strides = [1, 1]} : vector<8x384xf32> to vector<8x128xf32>
    %434 = vector.extract_strided_slice %431 {offsets = [0, 256], sizes = [8, 128], strides = [1, 1]} : vector<8x384xf32> to vector<8x128xf32>
    %435 = vector.extract_strided_slice %423 {offsets = [0, 384], sizes = [8, 128], strides = [1, 1]} : vector<8x512xf32> to vector<8x128xf32>
    %436 = math.tanh %435 : vector<8x128xf32>
    %437 = arith.mulf %416, %320 : vector<8x128xf32>
    %438 = arith.mulf %433, %437 : vector<8x128xf32>
    %439 = arith.mulf %432, %436 : vector<8x128xf32>
    %440 = arith.addf %438, %439 : vector<8x128xf32>
    %441 = math.tanh %440 : vector<8x128xf32>
    %442 = arith.mulf %434, %441 : vector<8x128xf32>
    %c40_224 = arith.constant 40 : index
    %c0_225 = arith.constant 0 : index
    %443 = vector.load %arg6[%c40_224, %c0_225] : memref<64x512xf32, #tpu.memory_space<vmem>>, vector<8x512xf32>
    %444 = arith.truncf %442 : vector<8x128xf32> to vector<8x128xbf16>
    %c384_226 = arith.constant 384 : index
    %c0_227 = arith.constant 0 : index
    %445 = vector.load %arg2[%c384_226, %c0_227] : memref<640x512xbf16, #tpu.memory_space<vmem>>, vector<128x512xbf16>
    %cst_228 = arith.constant dense<0.000000e+00> : vector<8x512xf32>
    %446 = tpu.matmul %444, %445, %cst_228 {dimension_numbers = #tpu.dot_dimension_numbers<[1], [0], [0], [1], [0, 0, 1, 1], [], []>} : vector<8x128xbf16>, vector<128x512xbf16>, vector<8x512xf32> -> vector<8x512xf32>
    %447 = arith.addf %443, %446 : vector<8x512xf32>
    %448 = vector.extract_strided_slice %447 {offsets = [0, 0], sizes = [8, 384], strides = [1, 1]} : vector<8x512xf32> to vector<8x384xf32>
    %cst_229 = arith.constant 5.000000e-01 : f32
    %449 = vector.broadcast %cst_229 : f32 to vector<8x384xf32>
    %450 = arith.mulf %449, %448 : vector<8x384xf32>
    %451 = math.tanh %450 : vector<8x384xf32>
    %cst_230 = arith.constant 5.000000e-01 : f32
    %452 = vector.broadcast %cst_230 : f32 to vector<8x384xf32>
    %453 = arith.mulf %452, %451 : vector<8x384xf32>
    %cst_231 = arith.constant 5.000000e-01 : f32
    %454 = vector.broadcast %cst_231 : f32 to vector<8x384xf32>
    %455 = arith.addf %453, %454 : vector<8x384xf32>
    %456 = vector.extract_strided_slice %455 {offsets = [0, 0], sizes = [8, 128], strides = [1, 1]} : vector<8x384xf32> to vector<8x128xf32>
    %457 = vector.extract_strided_slice %455 {offsets = [0, 128], sizes = [8, 128], strides = [1, 1]} : vector<8x384xf32> to vector<8x128xf32>
    %458 = vector.extract_strided_slice %455 {offsets = [0, 256], sizes = [8, 128], strides = [1, 1]} : vector<8x384xf32> to vector<8x128xf32>
    %459 = vector.extract_strided_slice %447 {offsets = [0, 384], sizes = [8, 128], strides = [1, 1]} : vector<8x512xf32> to vector<8x128xf32>
    %460 = math.tanh %459 : vector<8x128xf32>
    %461 = arith.mulf %440, %320 : vector<8x128xf32>
    %462 = arith.mulf %457, %461 : vector<8x128xf32>
    %463 = arith.mulf %456, %460 : vector<8x128xf32>
    %464 = arith.addf %462, %463 : vector<8x128xf32>
    %465 = math.tanh %464 : vector<8x128xf32>
    %466 = arith.mulf %458, %465 : vector<8x128xf32>
    %c48_232 = arith.constant 48 : index
    %c0_233 = arith.constant 0 : index
    %467 = vector.load %arg6[%c48_232, %c0_233] : memref<64x512xf32, #tpu.memory_space<vmem>>, vector<8x512xf32>
    %468 = arith.truncf %466 : vector<8x128xf32> to vector<8x128xbf16>
    %c384_234 = arith.constant 384 : index
    %c0_235 = arith.constant 0 : index
    %469 = vector.load %arg2[%c384_234, %c0_235] : memref<640x512xbf16, #tpu.memory_space<vmem>>, vector<128x512xbf16>
    %cst_236 = arith.constant dense<0.000000e+00> : vector<8x512xf32>
    %470 = tpu.matmul %468, %469, %cst_236 {dimension_numbers = #tpu.dot_dimension_numbers<[1], [0], [0], [1], [0, 0, 1, 1], [], []>} : vector<8x128xbf16>, vector<128x512xbf16>, vector<8x512xf32> -> vector<8x512xf32>
    %471 = arith.addf %467, %470 : vector<8x512xf32>
    %472 = vector.extract_strided_slice %471 {offsets = [0, 0], sizes = [8, 384], strides = [1, 1]} : vector<8x512xf32> to vector<8x384xf32>
    %cst_237 = arith.constant 5.000000e-01 : f32
    %473 = vector.broadcast %cst_237 : f32 to vector<8x384xf32>
    %474 = arith.mulf %473, %472 : vector<8x384xf32>
    %475 = math.tanh %474 : vector<8x384xf32>
    %cst_238 = arith.constant 5.000000e-01 : f32
    %476 = vector.broadcast %cst_238 : f32 to vector<8x384xf32>
    %477 = arith.mulf %476, %475 : vector<8x384xf32>
    %cst_239 = arith.constant 5.000000e-01 : f32
    %478 = vector.broadcast %cst_239 : f32 to vector<8x384xf32>
    %479 = arith.addf %477, %478 : vector<8x384xf32>
    %480 = vector.extract_strided_slice %479 {offsets = [0, 0], sizes = [8, 128], strides = [1, 1]} : vector<8x384xf32> to vector<8x128xf32>
    %481 = vector.extract_strided_slice %479 {offsets = [0, 128], sizes = [8, 128], strides = [1, 1]} : vector<8x384xf32> to vector<8x128xf32>
    %482 = vector.extract_strided_slice %479 {offsets = [0, 256], sizes = [8, 128], strides = [1, 1]} : vector<8x384xf32> to vector<8x128xf32>
    %483 = vector.extract_strided_slice %471 {offsets = [0, 384], sizes = [8, 128], strides = [1, 1]} : vector<8x512xf32> to vector<8x128xf32>
    %484 = math.tanh %483 : vector<8x128xf32>
    %485 = arith.mulf %464, %320 : vector<8x128xf32>
    %486 = arith.mulf %481, %485 : vector<8x128xf32>
    %487 = arith.mulf %480, %484 : vector<8x128xf32>
    %488 = arith.addf %486, %487 : vector<8x128xf32>
    %489 = math.tanh %488 : vector<8x128xf32>
    %490 = arith.mulf %482, %489 : vector<8x128xf32>
    %c56_240 = arith.constant 56 : index
    %c0_241 = arith.constant 0 : index
    %491 = vector.load %arg6[%c56_240, %c0_241] : memref<64x512xf32, #tpu.memory_space<vmem>>, vector<8x512xf32>
    %492 = arith.truncf %490 : vector<8x128xf32> to vector<8x128xbf16>
    %c384_242 = arith.constant 384 : index
    %c0_243 = arith.constant 0 : index
    %493 = vector.load %arg2[%c384_242, %c0_243] : memref<640x512xbf16, #tpu.memory_space<vmem>>, vector<128x512xbf16>
    %cst_244 = arith.constant dense<0.000000e+00> : vector<8x512xf32>
    %494 = tpu.matmul %492, %493, %cst_244 {dimension_numbers = #tpu.dot_dimension_numbers<[1], [0], [0], [1], [0, 0, 1, 1], [], []>} : vector<8x128xbf16>, vector<128x512xbf16>, vector<8x512xf32> -> vector<8x512xf32>
    %495 = arith.addf %491, %494 : vector<8x512xf32>
    %496 = vector.extract_strided_slice %495 {offsets = [0, 0], sizes = [8, 384], strides = [1, 1]} : vector<8x512xf32> to vector<8x384xf32>
    %cst_245 = arith.constant 5.000000e-01 : f32
    %497 = vector.broadcast %cst_245 : f32 to vector<8x384xf32>
    %498 = arith.mulf %497, %496 : vector<8x384xf32>
    %499 = math.tanh %498 : vector<8x384xf32>
    %cst_246 = arith.constant 5.000000e-01 : f32
    %500 = vector.broadcast %cst_246 : f32 to vector<8x384xf32>
    %501 = arith.mulf %500, %499 : vector<8x384xf32>
    %cst_247 = arith.constant 5.000000e-01 : f32
    %502 = vector.broadcast %cst_247 : f32 to vector<8x384xf32>
    %503 = arith.addf %501, %502 : vector<8x384xf32>
    %504 = vector.extract_strided_slice %503 {offsets = [0, 0], sizes = [8, 128], strides = [1, 1]} : vector<8x384xf32> to vector<8x128xf32>
    %505 = vector.extract_strided_slice %503 {offsets = [0, 128], sizes = [8, 128], strides = [1, 1]} : vector<8x384xf32> to vector<8x128xf32>
    %506 = vector.extract_strided_slice %503 {offsets = [0, 256], sizes = [8, 128], strides = [1, 1]} : vector<8x384xf32> to vector<8x128xf32>
    %507 = vector.extract_strided_slice %495 {offsets = [0, 384], sizes = [8, 128], strides = [1, 1]} : vector<8x512xf32> to vector<8x128xf32>
    %508 = math.tanh %507 : vector<8x128xf32>
    %509 = arith.mulf %488, %320 : vector<8x128xf32>
    %510 = arith.mulf %505, %509 : vector<8x128xf32>
    %511 = arith.mulf %504, %508 : vector<8x128xf32>
    %512 = arith.addf %510, %511 : vector<8x128xf32>
    %513 = math.tanh %512 : vector<8x128xf32>
    %514 = arith.mulf %506, %513 : vector<8x128xf32>
    %515 = arith.truncf %514 : vector<8x128xf32> to vector<8x128xbf16>
    %c512 = arith.constant 512 : index
    %c0_248 = arith.constant 0 : index
    %516 = vector.load %arg2[%c512, %c0_248] : memref<640x512xbf16, #tpu.memory_space<vmem>>, vector<128x512xbf16>
    %cst_249 = arith.constant dense<0.000000e+00> : vector<8x512xf32>
    %517 = tpu.matmul %515, %516, %cst_249 {dimension_numbers = #tpu.dot_dimension_numbers<[1], [0], [0], [1], [0, 0, 1, 1], [], []>} : vector<8x128xbf16>, vector<128x512xbf16>, vector<8x512xf32> -> vector<8x512xf32>
    %c2_250 = arith.constant 2 : index
    %c0_251 = arith.constant 0 : index
    %518 = vector.load %arg3[%c2_250, %c0_251] : memref<8x512xf32, #tpu.memory_space<vmem>>, vector<1x512xf32>
    %519 = vector.broadcast %518 : vector<1x512xf32> to vector<8x512xf32>
    %520 = arith.addf %517, %519 : vector<8x512xf32>
    %521 = vector.extract_strided_slice %520 {offsets = [0, 0], sizes = [8, 2], strides = [1, 1]} : vector<8x512xf32> to vector<8x2xf32>
    %c0_252 = arith.constant 0 : index
    %c0_253 = arith.constant 0 : index
    %522 = vector.load %arg4[%c0_252, %c0_253] : memref<8x2xf32, #tpu.memory_space<vmem>>, vector<8x2xf32>
    tpu.vector_store %arg4[%c0_252, %c0_253], %521 {strides = array<i32>} : memref<8x2xf32, #tpu.memory_space<vmem>>, vector<8x2xf32>,
    return
  }
}

</mosaic_0001>

<llo_original>
// kernel: rnn_forward.1
$region0: #{rnn_forward.1}
  #allocation0 [shape = 'u32[]', space=smem, size = 0x4, offset = 0x4, fixed_abs, tag = 'smem constant byte address 0x4 - core index']
  #allocation1 [shape = 'u32[144,128]{1,0:T(1,128)}', space=vmem, size = 0x12000, scoped, tag = 'internal scratch']
  #allocation2 [shape = 'f32[64,128]{1,0:T(8,128)}', space=vmem, size = 0x8000, scoped, tag = 'scratch operand']
  #allocation3 [shape = 'f32[64,512]{1,0:T(8,128)}', space=vmem, size = 0x20000, scoped, tag = 'scratch operand']
  #allocation4 [shape = 'f32[64,128]{1,0:T(8,128)}', space=vmem, size = 0x8000, scoped, tag = 'scratch operand']
  %s0 = inlined_call_operand.vmem [shape: s32[16], index: 0, kind: input, shape index: {}]
  %s1 = inlined_call_operand.vmem [shape: f32[104,64], index: 1, kind: input, shape index: {}]
  %s2 = inlined_call_operand.hbm [shape: bf16[640,512], index: 2, kind: input, shape index: {}]
  %s3 = inlined_call_operand.vmem [shape: f32[8,512], index: 3, kind: input, shape index: {}]
  %s4 = inlined_call_operand.vmem [shape: f32[8,2], index: 4, kind: output, shape index: {}]
  %s5 = sld [smem:[#allocation0]]
  $region34: #{rnn_forward.1} parent=0
    _
  %s7 = ssub.s32 1, %s5
  %s8 = scalar_select 0, %s7, %s5
  $region1: #{rnn_forward.1} parent=0
    #allocation5 [shape = 'u8[512]{0}', space=smem, size = 0x200, scoped, tag = 'input window, operand 0, single buffered']
    #allocation6 [shape = 's32[1]{0}', space=sflag, size = 0x4, scoped, tag = 'scoped memory for rnn_forward.1']
    #allocation7 [shape = 's32[1]{0}', space=sflag, size = 0x4, scoped, tag = 'scoped memory for rnn_forward.1']
    #allocation8 [shape = 'u8[655360]{0}', space=vmem, size = 0xa0000, scoped, tag = 'input window, operand 2, single buffered']
    %9 = vsyncpa [#allocation7], 0
    %10 = vsyncpa [#allocation6], 0
    // Predicated region
    $region2: #{rnn_forward.1} parent=1 // pred_check
      _
    $region3: #{rnn_forward.1} parent=1 // pred_check_branch
      %12 = sbr.rel (0) target = $region5
    $region4: #{rnn_forward.1} parent=1 // pred_region
      %s14 = ssub.s32 16, 16
      %15 = vsyncadd [#allocation7], %s14
      %s17 = sshll.u32 %s0, 4
      %s18 = int_to_ptr.vmem [resolvable:$true] %s17
      %20 = dma.vmem_to_smem %s18, 16, [#allocation5], [#allocation7]
    $region5: #{rnn_forward.1} parent=1 // pred_fallthru
      _
    // Predicated region
    $region6: #{rnn_forward.1} parent=1 // pred_check
      _
    $region7: #{rnn_forward.1} parent=1 // pred_check_branch
      %22 = sbr.rel (0) target = $region9
    $region8: #{rnn_forward.1} parent=1 // pred_region
      _
    $region9: #{rnn_forward.1} parent=1 // pred_fallthru
      _
    // Predicated region
    $region10: #{rnn_forward.1} parent=1 // pred_check
      _
    $region11: #{rnn_forward.1} parent=1 // pred_check_branch
      %24 = sbr.rel (0) target = $region13
    $region12: #{rnn_forward.1} parent=1 // pred_region
      %s26 = ssub.s32 20480, 20480
      %27 = vsyncadd [#allocation6], %s26
      %s28 = sshll.u32 [#allocation8], 4
      %s29 = int_to_ptr.vmem [resolvable:$true] %s28
      %34 = dma.hbm_to_vmem [thread:$0]  %s2, 20480, %s29, [#allocation6], 256, 256, 16
    $region13: #{rnn_forward.1} parent=1 // pred_fallthru
      _
    // Predicated region
    $region14: #{rnn_forward.1} parent=1 // pred_check
      _
    $region15: #{rnn_forward.1} parent=1 // pred_check_branch
      %36 = sbr.rel (0) target = $region17
    $region16: #{rnn_forward.1} parent=1 // pred_region
      _
    $region17: #{rnn_forward.1} parent=1 // pred_fallthru
      _
    // Predicated region
    $region18: #{rnn_forward.1} parent=1 // pred_check
      _
    $region19: #{rnn_forward.1} parent=1 // pred_check_branch
      %38 = sbr.rel (0) target = $region21
    $region20: #{rnn_forward.1} parent=1 // pred_region
      %39 = dma.done [#allocation7], 16
    $region21: #{rnn_forward.1} parent=1 // pred_fallthru
      _
    // Predicated region
    $region22: #{rnn_forward.1} parent=1 // pred_check
      _
    $region23: #{rnn_forward.1} parent=1 // pred_check_branch
      %41 = sbr.rel (0) target = $region25
    $region24: #{rnn_forward.1} parent=1 // pred_region
      %42 = dma.done [#allocation6], 20480
    $region25: #{rnn_forward.1} parent=1 // pred_fallthru
      _
    %43 = sfence
    %45 = vst [vmem:[#allocation2] sm:$0xff] 0.0
    %46 = vst [vmem:[#allocation2 + $0x8] sm:$0xff] 0.0
    %47 = vst [vmem:[#allocation2 + $0x10] sm:$0xff] 0.0
    %48 = vst [vmem:[#allocation2 + $0x18] sm:$0xff] 0.0
    %49 = vst [vmem:[#allocation2 + $0x20] sm:$0xff] 0.0
    %50 = vst [vmem:[#allocation2 + $0x28] sm:$0xff] 0.0
    %51 = vst [vmem:[#allocation2 + $0x30] sm:$0xff] 0.0
    %52 = vst [vmem:[#allocation2 + $0x38] sm:$0xff] 0.0
    %s53 = sld [smem:[#allocation5]]
    %s54 = scalar_lea.vmem %s1, %s53
    %v55 = vld [vmem:[%s54] sm:$0x1]
    %vm56 = vcmask 516096
    %57 = vst.msk [vmem:[#allocation2] sm:$0x1] %vm56, %v55
    %59 = vrot.lane.b32.xlu0 %v55, 64
    %v60 = vpop.permute.xlu0 %59
    %vm62 = vcmask 1040896
    %63 = vst.msk [vmem:[#allocation2 + $0x38] sm:$0x1] %vm62, %v60
    %s64 = sld [smem:[#allocation5 + $0x8]]
    %s65 = scalar_lea.vmem %s1, %s64
    %v66 = vld [vmem:[%s65] sm:$0x1]
    %67 = vst.msk [vmem:[#allocation2 + $0x1] sm:$0x1] %vm56, %v66
    %69 = vrot.lane.b32.xlu0 %v66, 64
    %v70 = vpop.permute.xlu0 %69
    %72 = vst.msk [vmem:[#allocation2 + $0x39] sm:$0x1] %vm62, %v70
    %s73 = sld [smem:[#allocation5 + $0x1]]
    %s74 = scalar_lea.vmem %s1, %s73
    %v75 = vld [vmem:[%s74] sm:$0x1]
    %76 = vst.msk [vmem:[#allocation2 + $0x8] sm:$0x1] %vm56, %v75
    %78 = vrot.lane.b32.xlu0 %v75, 64
    %v79 = vpop.permute.xlu0 %78
    %81 = vst.msk [vmem:[#allocation2 + $0x30] sm:$0x1] %vm62, %v79
    %s82 = sld [smem:[#allocation5 + $0x9]]
    %s83 = scalar_lea.vmem %s1, %s82
    %v84 = vld [vmem:[%s83] sm:$0x1]
    %85 = vst.msk [vmem:[#allocation2 + $0x9] sm:$0x1] %vm56, %v84
    %87 = vrot.lane.b32.xlu0 %v84, 64
    %v88 = vpop.permute.xlu0 %87
    %90 = vst.msk [vmem:[#allocation2 + $0x31] sm:$0x1] %vm62, %v88
    %s91 = sld [smem:[#allocation5 + $0x2]]
    %s92 = scalar_lea.vmem %s1, %s91
    %v93 = vld [vmem:[%s92] sm:$0x1]
    %94 = vst.msk [vmem:[#allocation2 + $0x10] sm:$0x1] %vm56, %v93
    %96 = vrot.lane.b32.xlu0 %v93, 64
    %v97 = vpop.permute.xlu0 %96
    %99 = vst.msk [vmem:[#allocation2 + $0x28] sm:$0x1] %vm62, %v97
    %s100 = sld [smem:[#allocation5 + $0xa]]
    %s101 = scalar_lea.vmem %s1, %s100
    %v102 = vld [vmem:[%s101] sm:$0x1]
    %103 = vst.msk [vmem:[#allocation2 + $0x11] sm:$0x1] %vm56, %v102
    %105 = vrot.lane.b32.xlu0 %v102, 64
    %v106 = vpop.permute.xlu0 %105
    %108 = vst.msk [vmem:[#allocation2 + $0x29] sm:$0x1] %vm62, %v106
    %s109 = sld [smem:[#allocation5 + $0x3]]
    %s110 = scalar_lea.vmem %s1, %s109
    %v111 = vld [vmem:[%s110] sm:$0x1]
    %112 = vst.msk [vmem:[#allocation2 + $0x18] sm:$0x1] %vm56, %v111
    %114 = vrot.lane.b32.xlu0 %v111, 64
    %v115 = vpop.permute.xlu0 %114
    %117 = vst.msk [vmem:[#allocation2 + $0x20] sm:$0x1] %vm62, %v115
    %s118 = sld [smem:[#allocation5 + $0xb]]
    %s119 = scalar_lea.vmem %s1, %s118
    %v120 = vld [vmem:[%s119] sm:$0x1]
    %121 = vst.msk [vmem:[#allocation2 + $0x19] sm:$0x1] %vm56, %v120
    %123 = vrot.lane.b32.xlu0 %v120, 64
    %v124 = vpop.permute.xlu0 %123
    %126 = vst.msk [vmem:[#allocation2 + $0x21] sm:$0x1] %vm62, %v124
    %s127 = sld [smem:[#allocation5 + $0x4]]
    %s128 = scalar_lea.vmem %s1, %s127
    %v129 = vld [vmem:[%s128] sm:$0x1]
    %130 = vst.msk [vmem:[#allocation2 + $0x20] sm:$0x1] %vm56, %v129
    %132 = vrot.lane.b32.xlu0 %v129, 64
    %v133 = vpop.permute.xlu0 %132
    %135 = vst.msk [vmem:[#allocation2 + $0x18] sm:$0x1] %vm62, %v133
    %s136 = sld [smem:[#allocation5 + $0xc]]
    %s137 = scalar_lea.vmem %s1, %s136
    %v138 = vld [vmem:[%s137] sm:$0x1]
    %139 = vst.msk [vmem:[#allocation2 + $0x21] sm:$0x1] %vm56, %v138
    %141 = vrot.lane.b32.xlu0 %v138, 64
    %v142 = vpop.permute.xlu0 %141
    %144 = vst.msk [vmem:[#allocation2 + $0x19] sm:$0x1] %vm62, %v142
    %s145 = sld [smem:[#allocation5 + $0x5]]
    %s146 = scalar_lea.vmem %s1, %s145
    %v147 = vld [vmem:[%s146] sm:$0x1]
    %148 = vst.msk [vmem:[#allocation2 + $0x28] sm:$0x1] %vm56, %v147
    %150 = vrot.lane.b32.xlu0 %v147, 64
    %v151 = vpop.permute.xlu0 %150
    %153 = vst.msk [vmem:[#allocation2 + $0x10] sm:$0x1] %vm62, %v151
    %s154 = sld [smem:[#allocation5 + $0xd]]
    %s155 = scalar_lea.vmem %s1, %s154
    %v156 = vld [vmem:[%s155] sm:$0x1]
    %157 = vst.msk [vmem:[#allocation2 + $0x29] sm:$0x1] %vm56, %v156
    %159 = vrot.lane.b32.xlu0 %v156, 64
    %v160 = vpop.permute.xlu0 %159
    %162 = vst.msk [vmem:[#allocation2 + $0x11] sm:$0x1] %vm62, %v160
    %s163 = sld [smem:[#allocation5 + $0x6]]
    %s164 = scalar_lea.vmem %s1, %s163
    %v165 = vld [vmem:[%s164] sm:$0x1]
    %166 = vst.msk [vmem:[#allocation2 + $0x30] sm:$0x1] %vm56, %v165
    %168 = vrot.lane.b32.xlu0 %v165, 64
    %v169 = vpop.permute.xlu0 %168
    %171 = vst.msk [vmem:[#allocation2 + $0x8] sm:$0x1] %vm62, %v169
    %s172 = sld [smem:[#allocation5 + $0xe]]
    %s173 = scalar_lea.vmem %s1, %s172
    %v174 = vld [vmem:[%s173] sm:$0x1]
    %175 = vst.msk [vmem:[#allocation2 + $0x31] sm:$0x1] %vm56, %v174
    %177 = vrot.lane.b32.xlu0 %v174, 64
    %v178 = vpop.permute.xlu0 %177
    %180 = vst.msk [vmem:[#allocation2 + $0x9] sm:$0x1] %vm62, %v178
    %s181 = sld [smem:[#allocation5 + $0x7]]
    %s182 = scalar_lea.vmem %s1, %s181
    %v183 = vld [vmem:[%s182] sm:$0x1]
    %184 = vst.msk [vmem:[#allocation2 + $0x38] sm:$0x1] %vm56, %v183
    %186 = vrot.lane.b32.xlu0 %v183, 64
    %v187 = vpop.permute.xlu0 %186
    %189 = vst.msk [vmem:[#allocation2] sm:$0x1] %vm62, %v187
    %s190 = sld [smem:[#allocation5 + $0xf]]
    %s191 = scalar_lea.vmem %s1, %s190
    %v192 = vld [vmem:[%s191] sm:$0x1]
    %193 = vst.msk [vmem:[#allocation2 + $0x39] sm:$0x1] %vm56, %v192
    %195 = vrot.lane.b32.xlu0 %v192, 64
    %v196 = vpop.permute.xlu0 %195
    %198 = vst.msk [vmem:[#allocation2 + $0x1] sm:$0x1] %vm62, %v196
    %v199 = vld [vmem:[#allocation2] sm:$0xff]
    %v200 = vld [vmem:[#allocation2 + $0x8] sm:$0xff]
    %v201 = vld [vmem:[#allocation2 + $0x10] sm:$0xff]
    %v202 = vld [vmem:[#allocation2 + $0x18] sm:$0xff]
    %v203 = vld [vmem:[#allocation2 + $0x20] sm:$0xff]
    %v204 = vld [vmem:[#allocation2 + $0x28] sm:$0xff]
    %v205 = vld [vmem:[#allocation2 + $0x30] sm:$0xff]
    %v206 = vld [vmem:[#allocation2 + $0x38] sm:$0xff]
    %v207 = vpack.c.bf16 %v200, %v199
    %v208 = vpack.c.bf16 %v202, %v201
    %v209 = vpack.c.bf16 %v204, %v203
    %v210 = vpack.c.bf16 %v206, %v205
    %v211 = vld [vmem:[#allocation8] sm:$0xff]
    %v212 = vld [vmem:[#allocation8 + $0x8] sm:$0xff]
    %v213 = vld [vmem:[#allocation8 + $0x10] sm:$0xff]
    %v214 = vld [vmem:[#allocation8 + $0x18] sm:$0xff]
    %v215 = vld [vmem:[#allocation8 + $0x20] sm:$0xff]
    %v216 = vld [vmem:[#allocation8 + $0x28] sm:$0xff]
    %v217 = vld [vmem:[#allocation8 + $0x30] sm:$0xff]
    %v218 = vld [vmem:[#allocation8 + $0x38] sm:$0xff]
    %v219 = vld [vmem:[#allocation8 + $0x40] sm:$0xff]
    %v220 = vld [vmem:[#allocation8 + $0x48] sm:$0xff]
    %v221 = vld [vmem:[#allocation8 + $0x50] sm:$0xff]
    %v222 = vld [vmem:[#allocation8 + $0x58] sm:$0xff]
    %v223 = vld [vmem:[#allocation8 + $0x60] sm:$0xff]
    %v224 = vld [vmem:[#allocation8 + $0x68] sm:$0xff]
    %v225 = vld [vmem:[#allocation8 + $0x70] sm:$0xff]
    %v226 = vld [vmem:[#allocation8 + $0x78] sm:$0xff]
    %v227 = vld [vmem:[#allocation8 + $0x80] sm:$0xff]
    %v228 = vld [vmem:[#allocation8 + $0x88] sm:$0xff]
    %v229 = vld [vmem:[#allocation8 + $0x90] sm:$0xff]
    %v230 = vld [vmem:[#allocation8 + $0x98] sm:$0xff]
    %v231 = vld [vmem:[#allocation8 + $0xa0] sm:$0xff]
    %v232 = vld [vmem:[#allocation8 + $0xa8] sm:$0xff]
    %v233 = vld [vmem:[#allocation8 + $0xb0] sm:$0xff]
    %v234 = vld [vmem:[#allocation8 + $0xb8] sm:$0xff]
    %v235 = vld [vmem:[#allocation8 + $0xc0] sm:$0xff]
    %v236 = vld [vmem:[#allocation8 + $0xc8] sm:$0xff]
    %v237 = vld [vmem:[#allocation8 + $0xd0] sm:$0xff]
    %v238 = vld [vmem:[#allocation8 + $0xd8] sm:$0xff]
    %v239 = vld [vmem:[#allocation8 + $0xe0] sm:$0xff]
    %v240 = vld [vmem:[#allocation8 + $0xe8] sm:$0xff]
    %v241 = vld [vmem:[#allocation8 + $0xf0] sm:$0xff]
    %v242 = vld [vmem:[#allocation8 + $0xf8] sm:$0xff]
    %v243 = vld [vmem:[%s3] ss:$8 sm:$0xf]
    %v245 = vlaneseq
    %v246 = vshrl.u32 %v245, 7
    %v247 = vsub.s32 0, %v246
    %v248 = vrot.slane %v243, %v247
    %v249 = vlaneseq
    %v250 = vshrl.u32 %v249, 7
    %v251 = vsub.s32 1, %v250
    %v252 = vrot.slane %v243, %v251
    %v253 = vlaneseq
    %v254 = vshrl.u32 %v253, 7
    %v255 = vsub.s32 2, %v254
    %v256 = vrot.slane %v243, %v255
    %v257 = vlaneseq
    %v258 = vshrl.u32 %v257, 7
    %v259 = vsub.s32 3, %v258
    %v260 = vrot.slane %v243, %v259
    %v297 = vunpack.c.l.b16 %v211
    %v298 = vunpack.c.h.b16 %v211
    %v299 = vunpack.c.l.b16 %v212
    %v300 = vunpack.c.h.b16 %v212
    %v301 = vunpack.c.l.b16 %v213
    %v302 = vunpack.c.h.b16 %v213
    %v303 = vunpack.c.l.b16 %v214
    %v304 = vunpack.c.h.b16 %v214
    %v305 = vunpack.c.l.b16 %v215
    %v306 = vunpack.c.h.b16 %v215
    %v307 = vunpack.c.l.b16 %v216
    %v308 = vunpack.c.h.b16 %v216
    %v309 = vunpack.c.l.b16 %v217
    %v310 = vunpack.c.h.b16 %v217
    %v311 = vunpack.c.l.b16 %v218
    %v312 = vunpack.c.h.b16 %v218
    %v313 = vunpack.c.l.b16 %v219
    %v314 = vunpack.c.h.b16 %v219
    %v315 = vunpack.c.l.b16 %v220
    %v316 = vunpack.c.h.b16 %v220
    %v317 = vunpack.c.l.b16 %v221
    %v318 = vunpack.c.h.b16 %v221
    %v319 = vunpack.c.l.b16 %v222
    %v320 = vunpack.c.h.b16 %v222
    %v321 = vunpack.c.l.b16 %v223
    %v322 = vunpack.c.h.b16 %v223
    %v323 = vunpack.c.l.b16 %v224
    %v324 = vunpack.c.h.b16 %v224
    %v325 = vunpack.c.l.b16 %v225
    %v326 = vunpack.c.h.b16 %v225
    %v327 = vunpack.c.l.b16 %v226
    %v328 = vunpack.c.h.b16 %v226
    %v329 = vunpack.c.l.b16 %v227
    %v330 = vunpack.c.h.b16 %v227
    %v331 = vunpack.c.l.b16 %v228
    %v332 = vunpack.c.h.b16 %v228
    %v333 = vunpack.c.l.b16 %v229
    %v334 = vunpack.c.h.b16 %v229
    %v335 = vunpack.c.l.b16 %v230
    %v336 = vunpack.c.h.b16 %v230
    %v337 = vunpack.c.l.b16 %v231
    %v338 = vunpack.c.h.b16 %v231
    %v339 = vunpack.c.l.b16 %v232
    %v340 = vunpack.c.h.b16 %v232
    %v341 = vunpack.c.l.b16 %v233
    %v342 = vunpack.c.h.b16 %v233
    %v343 = vunpack.c.l.b16 %v234
    %v344 = vunpack.c.h.b16 %v234
    %v345 = vunpack.c.l.b16 %v235
    %v346 = vunpack.c.h.b16 %v235
    %v347 = vunpack.c.l.b16 %v236
    %v348 = vunpack.c.h.b16 %v236
    %v349 = vunpack.c.l.b16 %v237
    %v350 = vunpack.c.h.b16 %v237
    %v351 = vunpack.c.l.b16 %v238
    %v352 = vunpack.c.h.b16 %v238
    %v353 = vunpack.c.l.b16 %v239
    %v354 = vunpack.c.h.b16 %v239
    %v355 = vunpack.c.l.b16 %v240
    %v356 = vunpack.c.h.b16 %v240
    %v357 = vunpack.c.l.b16 %v241
    %v358 = vunpack.c.h.b16 %v241
    %v359 = vunpack.c.l.b16 %v242
    %v360 = vunpack.c.h.b16 %v242
    %v361 = vpack.c.b16 %v301, %v297
    %v362 = vpack.c.b16 %v302, %v298
    %v363 = vpack.c.b16 %v303, %v299
    %v364 = vpack.c.b16 %v304, %v300
    %v365 = vpack.c.b16 %v309, %v305
    %v366 = vpack.c.b16 %v310, %v306
    %v367 = vpack.c.b16 %v311, %v307
    %v368 = vpack.c.b16 %v312, %v308
    %v369 = vpack.c.b16 %v317, %v313
    %v370 = vpack.c.b16 %v318, %v314
    %v371 = vpack.c.b16 %v319, %v315
    %v372 = vpack.c.b16 %v320, %v316
    %v373 = vpack.c.b16 %v325, %v321
    %v374 = vpack.c.b16 %v326, %v322
    %v375 = vpack.c.b16 %v327, %v323
    %v376 = vpack.c.b16 %v328, %v324
    %v377 = vpack.c.b16 %v333, %v329
    %v378 = vpack.c.b16 %v334, %v330
    %v379 = vpack.c.b16 %v335, %v331
    %v380 = vpack.c.b16 %v336, %v332
    %v381 = vpack.c.b16 %v341, %v337
    %v382 = vpack.c.b16 %v342, %v338
    %v383 = vpack.c.b16 %v343, %v339
    %v384 = vpack.c.b16 %v344, %v340
    %v385 = vpack.c.b16 %v349, %v345
    %v386 = vpack.c.b16 %v350, %v346
    %v387 = vpack.c.b16 %v351, %v347
    %v388 = vpack.c.b16 %v352, %v348
    %v389 = vpack.c.b16 %v357, %v353
    %v390 = vpack.c.b16 %v358, %v354
    %v391 = vpack.c.b16 %v359, %v355
    %v392 = vpack.c.b16 %v360, %v356
    %425 = vmatprep.subr.bf16.mxu0 %v390
    %426 = vmatpush1.bf16.msra.mxu0 %v389
    %427 = vmatprep.subr.bf16.mxu0 %v386
    %428 = vmatpush1.bf16.msra.mxu0 %v385
    %429 = vmatprep.subr.bf16.mxu0 %v382
    %430 = vmatpush1.bf16.msra.mxu0 %v381
    %431 = vmatprep.subr.bf16.mxu0 %v378
    %432 = vmatpush1.bf16.msra.mxu0 %v377
    %433 = vmatprep.subr.bf16.mxu0 %v374
    %434 = vmatpush1.bf16.msra.mxu0 %v373
    %435 = vmatprep.subr.bf16.mxu0 %v370
    %436 = vmatpush1.bf16.msra.mxu0 %v369
    %437 = vmatprep.subr.bf16.mxu0 %v366
    %438 = vmatpush1.bf16.msra.mxu0 %v365
    %439 = vmatprep.subr.bf16.mxu0 %v362
    %440 = vmatpush1.bf16.msra.mxu0 %v361
    %441 = vmatprep.subr.bf16.mxu0 0
    %442 = vmatpush2.bf16.msra.mxu0 0
    %443 = vmatprep.subr.bf16.mxu0 0
    %444 = vmatpush2.bf16.msra.mxu0 0
    %445 = vmatprep.subr.bf16.mxu0 0
    %446 = vmatpush2.bf16.msra.mxu0 0
    %447 = vmatprep.subr.bf16.mxu0 0
    %448 = vmatpush2.bf16.msra.mxu0 0
    %449 = vmatprep.subr.bf16.mxu0 0
    %450 = vmatpush2.bf16.msra.mxu0 0
    %451 = vmatprep.subr.bf16.mxu0 0
    %452 = vmatpush2.bf16.msra.mxu0 0
    %453 = vmatprep.subr.bf16.mxu0 0
    %454 = vmatpush2.bf16.msra.mxu0 0
    %455 = vmatprep.subr.bf16.mxu0 0
    %456 = vmatpush2.bf16.msra.mxu0 0
    %457 = vmatprep.mubr.bf16.mxu0 0
    %458 = vmatmul.mubr.bf16.gmra.mxu0 %v207
    %v459 = vpop.f32.mrf.mxu0
    %v460 = vadd.f32 %v248, %v459
    %v461 = vpop.f32.mrf.mxu0
    %v462 = vadd.f32 %v252, %v461
    %v463 = vpop.f32.mrf.mxu0
    %v464 = vadd.f32 %v248, %v463
    %v465 = vpop.f32.mrf.mxu0
    %v466 = vadd.f32 %v252, %v465
    %467 = vmatprep.mubr.bf16.mxu0 0
    %468 = vmatmul.mubr.bf16.gmra.mxu0 %v208
    %v469 = vpop.f32.mrf.mxu0
    %v470 = vadd.f32 %v248, %v469
    %v471 = vpop.f32.mrf.mxu0
    %v472 = vadd.f32 %v252, %v471
    %v473 = vpop.f32.mrf.mxu0
    %v474 = vadd.f32 %v248, %v473
    %v475 = vpop.f32.mrf.mxu0
    %v476 = vadd.f32 %v252, %v475
    %477 = vmatprep.mubr.bf16.mxu0 0
    %478 = vmatmul.mubr.bf16.gmra.mxu0 %v209
    %v479 = vpop.f32.mrf.mxu0
    %v480 = vadd.f32 %v248, %v479
    %v481 = vpop.f32.mrf.mxu0
    %v482 = vadd.f32 %v252, %v481
    %v483 = vpop.f32.mrf.mxu0
    %v484 = vadd.f32 %v248, %v483
    %v485 = vpop.f32.mrf.mxu0
    %v486 = vadd.f32 %v252, %v485
    %487 = vmatprep.mubr.bf16.mxu0 0
    %488 = vmatmul.mubr.bf16.gmra.mxu0 %v210
    %v489 = vpop.f32.mrf.mxu0
    %v490 = vadd.f32 %v248, %v489
    %v491 = vpop.f32.mrf.mxu0
    %v492 = vadd.f32 %v252, %v491
    %v493 = vpop.f32.mrf.mxu0
    %v494 = vadd.f32 %v248, %v493
    %v495 = vpop.f32.mrf.mxu0
    %v496 = vadd.f32 %v252, %v495
    %497 = vdwg.mxu0
    %498 = vmatprep.subr.bf16.mxu0 %v392
    %499 = vmatpush1.bf16.msra.mxu0 %v391
    %500 = vmatprep.subr.bf16.mxu0 %v388
    %501 = vmatpush1.bf16.msra.mxu0 %v387
    %502 = vmatprep.subr.bf16.mxu0 %v384
    %503 = vmatpush1.bf16.msra.mxu0 %v383
    %504 = vmatprep.subr.bf16.mxu0 %v380
    %505 = vmatpush1.bf16.msra.mxu0 %v379
    %506 = vmatprep.subr.bf16.mxu0 %v376
    %507 = vmatpush1.bf16.msra.mxu0 %v375
    %508 = vmatprep.subr.bf16.mxu0 %v372
    %509 = vmatpush1.bf16.msra.mxu0 %v371
    %510 = vmatprep.subr.bf16.mxu0 %v368
    %511 = vmatpush1.bf16.msra.mxu0 %v367
    %512 = vmatprep.subr.bf16.mxu0 %v364
    %513 = vmatpush1.bf16.msra.mxu0 %v363
    %514 = vmatprep.subr.bf16.mxu0 0
    %515 = vmatpush2.bf16.msra.mxu0 0
    %516 = vmatprep.subr.bf16.mxu0 0
    %517 = vmatpush2.bf16.msra.mxu0 0
    %518 = vmatprep.subr.bf16.mxu0 0
    %519 = vmatpush2.bf16.msra.mxu0 0
    %520 = vmatprep.subr.bf16.mxu0 0
    %521 = vmatpush2.bf16.msra.mxu0 0
    %522 = vmatprep.subr.bf16.mxu0 0
    %523 = vmatpush2.bf16.msra.mxu0 0
    %524 = vmatprep.subr.bf16.mxu0 0
    %525 = vmatpush2.bf16.msra.mxu0 0
    %526 = vmatprep.subr.bf16.mxu0 0
    %527 = vmatpush2.bf16.msra.mxu0 0
    %528 = vmatprep.subr.bf16.mxu0 0
    %529 = vmatpush2.bf16.msra.mxu0 0
    %530 = vmatprep.mubr.bf16.mxu0 0
    %531 = vmatmul.mubr.bf16.gmra.mxu0 %v207
    %v532 = vpop.f32.mrf.mxu0
    %v533 = vadd.f32 %v256, %v532
    %v534 = vpop.f32.mrf.mxu0
    %v535 = vadd.f32 %v260, %v534
    %v536 = vpop.f32.mrf.mxu0
    %v537 = vadd.f32 %v256, %v536
    %v538 = vpop.f32.mrf.mxu0
    %v539 = vadd.f32 %v260, %v538
    %540 = vmatprep.mubr.bf16.mxu0 0
    %541 = vmatmul.mubr.bf16.gmra.mxu0 %v208
    %v542 = vpop.f32.mrf.mxu0
    %v543 = vadd.f32 %v256, %v542
    %v544 = vpop.f32.mrf.mxu0
    %v545 = vadd.f32 %v260, %v544
    %v546 = vpop.f32.mrf.mxu0
    %v547 = vadd.f32 %v256, %v546
    %v548 = vpop.f32.mrf.mxu0
    %v549 = vadd.f32 %v260, %v548
    %550 = vmatprep.mubr.bf16.mxu0 0
    %551 = vmatmul.mubr.bf16.gmra.mxu0 %v209
    %v552 = vpop.f32.mrf.mxu0
    %v553 = vadd.f32 %v256, %v552
    %v554 = vpop.f32.mrf.mxu0
    %v555 = vadd.f32 %v260, %v554
    %v556 = vpop.f32.mrf.mxu0
    %v557 = vadd.f32 %v256, %v556
    %v558 = vpop.f32.mrf.mxu0
    %v559 = vadd.f32 %v260, %v558
    %560 = vmatprep.mubr.bf16.mxu0 0
    %561 = vmatmul.mubr.bf16.gmra.mxu0 %v210
    %v562 = vpop.f32.mrf.mxu0
    %v563 = vadd.f32 %v256, %v562
    %v564 = vpop.f32.mrf.mxu0
    %v565 = vadd.f32 %v260, %v564
    %v566 = vpop.f32.mrf.mxu0
    %v567 = vadd.f32 %v256, %v566
    %v568 = vpop.f32.mrf.mxu0
    %v569 = vadd.f32 %v260, %v568
    %570 = vdwg.mxu0
    %571 = vst [vmem:[#allocation3] sm:$0xff] %v460
    %572 = vst [vmem:[#allocation3 + $0x8] sm:$0xff] %v462
    %573 = vst [vmem:[#allocation3 + $0x10] sm:$0xff] %v533
    %574 = vst [vmem:[#allocation3 + $0x18] sm:$0xff] %v535
    %575 = vst [vmem:[#allocation3 + $0x20] sm:$0xff] %v464
    %576 = vst [vmem:[#allocation3 + $0x28] sm:$0xff] %v466
    %577 = vst [vmem:[#allocation3 + $0x30] sm:$0xff] %v537
    %578 = vst [vmem:[#allocation3 + $0x38] sm:$0xff] %v539
    %579 = vst [vmem:[#allocation3 + $0x40] sm:$0xff] %v470
    %580 = vst [vmem:[#allocation3 + $0x48] sm:$0xff] %v472
    %581 = vst [vmem:[#allocation3 + $0x50] sm:$0xff] %v543
    %582 = vst [vmem:[#allocation3 + $0x58] sm:$0xff] %v545
    %583 = vst [vmem:[#allocation3 + $0x60] sm:$0xff] %v474
    %584 = vst [vmem:[#allocation3 + $0x68] sm:$0xff] %v476
    %585 = vst [vmem:[#allocation3 + $0x70] sm:$0xff] %v547
    %586 = vst [vmem:[#allocation3 + $0x78] sm:$0xff] %v549
    %587 = vst [vmem:[#allocation3 + $0x80] sm:$0xff] %v480
    %588 = vst [vmem:[#allocation3 + $0x88] sm:$0xff] %v482
    %589 = vst [vmem:[#allocation3 + $0x90] sm:$0xff] %v553
    %590 = vst [vmem:[#allocation3 + $0x98] sm:$0xff] %v555
    %591 = vst [vmem:[#allocation3 + $0xa0] sm:$0xff] %v484
    %592 = vst [vmem:[#allocation3 + $0xa8] sm:$0xff] %v486
    %593 = vst [vmem:[#allocation3 + $0xb0] sm:$0xff] %v557
    %594 = vst [vmem:[#allocation3 + $0xb8] sm:$0xff] %v559
    %595 = vst [vmem:[#allocation3 + $0xc0] sm:$0xff] %v490
    %596 = vst [vmem:[#allocation3 + $0xc8] sm:$0xff] %v492
    %597 = vst [vmem:[#allocation3 + $0xd0] sm:$0xff] %v563
    %598 = vst [vmem:[#allocation3 + $0xd8] sm:$0xff] %v565
    %599 = vst [vmem:[#allocation3 + $0xe0] sm:$0xff] %v494
    %600 = vst [vmem:[#allocation3 + $0xe8] sm:$0xff] %v496
    %601 = vst [vmem:[#allocation3 + $0xf0] sm:$0xff] %v567
    %602 = vst [vmem:[#allocation3 + $0xf8] sm:$0xff] %v569
    %v603 = vld [vmem:[#allocation3] sm:$0xff]
    %v604 = vld [vmem:[#allocation3 + $0x8] sm:$0xff]
    %v605 = vld [vmem:[#allocation3 + $0x10] sm:$0xff]
    %v606 = vld [vmem:[#allocation3 + $0x18] sm:$0xff]
    %v607 = vld [vmem:[#allocation8 + $0x100] sm:$0xff]
    %v608 = vld [vmem:[#allocation8 + $0x108] sm:$0xff]
    %v609 = vld [vmem:[#allocation8 + $0x110] sm:$0xff]
    %v610 = vld [vmem:[#allocation8 + $0x118] sm:$0xff]
    %v611 = vld [vmem:[#allocation8 + $0x120] sm:$0xff]
    %v612 = vld [vmem:[#allocation8 + $0x128] sm:$0xff]
    %v613 = vld [vmem:[#allocation8 + $0x130] sm:$0xff]
    %v614 = vld [vmem:[#allocation8 + $0x138] sm:$0xff]
    %v615 = vld [vmem:[#allocation8 + $0x140] sm:$0xff]
    %v616 = vld [vmem:[#allocation8 + $0x148] sm:$0xff]
    %v617 = vld [vmem:[#allocation8 + $0x150] sm:$0xff]
    %v618 = vld [vmem:[#allocation8 + $0x158] sm:$0xff]
    %v619 = vld [vmem:[#allocation8 + $0x160] sm:$0xff]
    %v620 = vld [vmem:[#allocation8 + $0x168] sm:$0xff]
    %v621 = vld [vmem:[#allocation8 + $0x170] sm:$0xff]
    %v622 = vld [vmem:[#allocation8 + $0x178] sm:$0xff]
    %v623 = vld [vmem:[#allocation8 + $0x180] sm:$0xff]
    %v624 = vld [vmem:[#allocation8 + $0x188] sm:$0xff]
    %v625 = vld [vmem:[#allocation8 + $0x190] sm:$0xff]
    %v626 = vld [vmem:[#allocation8 + $0x198] sm:$0xff]
    %v627 = vld [vmem:[#allocation8 + $0x1a0] sm:$0xff]
    %v628 = vld [vmem:[#allocation8 + $0x1a8] sm:$0xff]
    %v629 = vld [vmem:[#allocation8 + $0x1b0] sm:$0xff]
    %v630 = vld [vmem:[#allocation8 + $0x1b8] sm:$0xff]
    %v631 = vld [vmem:[#allocation8 + $0x1c0] sm:$0xff]
    %v632 = vld [vmem:[#allocation8 + $0x1c8] sm:$0xff]
    %v633 = vld [vmem:[#allocation8 + $0x1d0] sm:$0xff]
    %v634 = vld [vmem:[#allocation8 + $0x1d8] sm:$0xff]
    %v635 = vld [vmem:[#allocation8 + $0x1e0] sm:$0xff]
    %v636 = vld [vmem:[#allocation8 + $0x1e8] sm:$0xff]
    %v637 = vld [vmem:[#allocation8 + $0x1f0] sm:$0xff]
    %v638 = vld [vmem:[#allocation8 + $0x1f8] sm:$0xff]
    %v671 = vunpack.c.l.b16 %v607
    %v672 = vunpack.c.h.b16 %v607
    %v673 = vunpack.c.l.b16 %v608
    %v674 = vunpack.c.h.b16 %v608
    %v675 = vunpack.c.l.b16 %v609
    %v676 = vunpack.c.h.b16 %v609
    %v677 = vunpack.c.l.b16 %v610
    %v678 = vunpack.c.h.b16 %v610
    %v679 = vunpack.c.l.b16 %v611
    %v680 = vunpack.c.h.b16 %v611
    %v681 = vunpack.c.l.b16 %v612
    %v682 = vunpack.c.h.b16 %v612
    %v683 = vunpack.c.l.b16 %v613
    %v684 = vunpack.c.h.b16 %v613
    %v685 = vunpack.c.l.b16 %v614
    %v686 = vunpack.c.h.b16 %v614
    %v687 = vunpack.c.l.b16 %v615
    %v688 = vunpack.c.h.b16 %v615
    %v689 = vunpack.c.l.b16 %v616
    %v690 = vunpack.c.h.b16 %v616
    %v691 = vunpack.c.l.b16 %v617
    %v692 = vunpack.c.h.b16 %v617
    %v693 = vunpack.c.l.b16 %v618
    %v694 = vunpack.c.h.b16 %v618
    %v695 = vunpack.c.l.b16 %v619
    %v696 = vunpack.c.h.b16 %v619
    %v697 = vunpack.c.l.b16 %v620
    %v698 = vunpack.c.h.b16 %v620
    %v699 = vunpack.c.l.b16 %v621
    %v700 = vunpack.c.h.b16 %v621
    %v701 = vunpack.c.l.b16 %v622
    %v702 = vunpack.c.h.b16 %v622
    %v703 = vunpack.c.l.b16 %v623
    %v704 = vunpack.c.h.b16 %v623
    %v705 = vunpack.c.l.b16 %v624
    %v706 = vunpack.c.h.b16 %v624
    %v707 = vunpack.c.l.b16 %v625
    %v708 = vunpack.c.h.b16 %v625
    %v709 = vunpack.c.l.b16 %v626
    %v710 = vunpack.c.h.b16 %v626
    %v711 = vunpack.c.l.b16 %v627
    %v712 = vunpack.c.h.b16 %v627
    %v713 = vunpack.c.l.b16 %v628
    %v714 = vunpack.c.h.b16 %v628
    %v715 = vunpack.c.l.b16 %v629
    %v716 = vunpack.c.h.b16 %v629
    %v717 = vunpack.c.l.b16 %v630
    %v718 = vunpack.c.h.b16 %v630
    %v719 = vunpack.c.l.b16 %v631
    %v720 = vunpack.c.h.b16 %v631
    %v721 = vunpack.c.l.b16 %v632
    %v722 = vunpack.c.h.b16 %v632
    %v723 = vunpack.c.l.b16 %v633
    %v724 = vunpack.c.h.b16 %v633
    %v725 = vunpack.c.l.b16 %v634
    %v726 = vunpack.c.h.b16 %v634
    %v727 = vunpack.c.l.b16 %v635
    %v728 = vunpack.c.h.b16 %v635
    %v729 = vunpack.c.l.b16 %v636
    %v730 = vunpack.c.h.b16 %v636
    %v731 = vunpack.c.l.b16 %v637
    %v732 = vunpack.c.h.b16 %v637
    %v733 = vunpack.c.l.b16 %v638
    %v734 = vunpack.c.h.b16 %v638
    %v735 = vpack.c.b16 %v675, %v671
    %v736 = vpack.c.b16 %v676, %v672
    %v737 = vpack.c.b16 %v677, %v673
    %v738 = vpack.c.b16 %v678, %v674
    %v739 = vpack.c.b16 %v683, %v679
    %v740 = vpack.c.b16 %v684, %v680
    %v741 = vpack.c.b16 %v685, %v681
    %v742 = vpack.c.b16 %v686, %v682
    %v743 = vpack.c.b16 %v691, %v687
    %v744 = vpack.c.b16 %v692, %v688
    %v745 = vpack.c.b16 %v693, %v689
    %v746 = vpack.c.b16 %v694, %v690
    %v747 = vpack.c.b16 %v699, %v695
    %v748 = vpack.c.b16 %v700, %v696
    %v749 = vpack.c.b16 %v701, %v697
    %v750 = vpack.c.b16 %v702, %v698
    %v751 = vpack.c.b16 %v707, %v703
    %v752 = vpack.c.b16 %v708, %v704
    %v753 = vpack.c.b16 %v709, %v705
    %v754 = vpack.c.b16 %v710, %v706
    %v755 = vpack.c.b16 %v715, %v711
    %v756 = vpack.c.b16 %v716, %v712
    %v757 = vpack.c.b16 %v717, %v713
    %v758 = vpack.c.b16 %v718, %v714
    %v759 = vpack.c.b16 %v723, %v719
    %v760 = vpack.c.b16 %v724, %v720
    %v761 = vpack.c.b16 %v725, %v721
    %v762 = vpack.c.b16 %v726, %v722
    %v763 = vpack.c.b16 %v731, %v727
    %v764 = vpack.c.b16 %v732, %v728
    %v765 = vpack.c.b16 %v733, %v729
    %v766 = vpack.c.b16 %v734, %v730
    %799 = vmatprep.subr.bf16.mxu0 %v764
    %800 = vmatpush1.bf16.msra.mxu0 %v763
    %801 = vmatprep.subr.bf16.mxu0 %v760
    %802 = vmatpush1.bf16.msra.mxu0 %v759
    %803 = vmatprep.subr.bf16.mxu0 %v756
    %804 = vmatpush1.bf16.msra.mxu0 %v755
    %805 = vmatprep.subr.bf16.mxu0 %v752
    %806 = vmatpush1.bf16.msra.mxu0 %v751
    %807 = vmatprep.subr.bf16.mxu0 %v748
    %808 = vmatpush1.bf16.msra.mxu0 %v747
    %809 = vmatprep.subr.bf16.mxu0 %v744
    %810 = vmatpush1.bf16.msra.mxu0 %v743
    %811 = vmatprep.subr.bf16.mxu0 %v740
    %812 = vmatpush1.bf16.msra.mxu0 %v739
    %813 = vmatprep.subr.bf16.mxu0 %v736
    %814 = vmatpush1.bf16.msra.mxu0 %v735
    %815 = vmatprep.subr.bf16.mxu0 0
    %816 = vmatpush2.bf16.msra.mxu0 0
    %817 = vmatprep.subr.bf16.mxu0 0
    %818 = vmatpush2.bf16.msra.mxu0 0
    %819 = vmatprep.subr.bf16.mxu0 0
    %820 = vmatpush2.bf16.msra.mxu0 0
    %821 = vmatprep.subr.bf16.mxu0 0
    %822 = vmatpush2.bf16.msra.mxu0 0
    %823 = vmatprep.subr.bf16.mxu0 0
    %824 = vmatpush2.bf16.msra.mxu0 0
    %825 = vmatprep.subr.bf16.mxu0 0
    %826 = vmatpush2.bf16.msra.mxu0 0
    %827 = vmatprep.subr.bf16.mxu0 0
    %828 = vmatpush2.bf16.msra.mxu0 0
    %829 = vmatprep.subr.bf16.mxu0 0
    %830 = vmatpush2.bf16.msra.mxu0 0
    %831 = vmatprep.mubr.bf16.mxu0 0
    %832 = vmatmul.mubr.bf16.gmra.mxu0 0
    %v833 = vpop.f32.mrf.mxu0
    %v834 = vadd.f32 0.0, %v833
    %v835 = vpop.f32.mrf.mxu0
    %v836 = vadd.f32 0.0, %v835
    %v837 = vpop.f32.mrf.mxu0
    %v838 = vpop.f32.mrf.mxu0
    %839 = vdwg.mxu0
    %840 = vmatprep.subr.bf16.mxu0 %v766
    %841 = vmatpush1.bf16.msra.mxu0 %v765
    %842 = vmatprep.subr.bf16.mxu0 %v762
    %843 = vmatpush1.bf16.msra.mxu0 %v761
    %844 = vmatprep.subr.bf16.mxu0 %v758
    %845 = vmatpush1.bf16.msra.mxu0 %v757
    %846 = vmatprep.subr.bf16.mxu0 %v754
    %847 = vmatpush1.bf16.msra.mxu0 %v753
    %848 = vmatprep.subr.bf16.mxu0 %v750
    %849 = vmatpush1.bf16.msra.mxu0 %v749
    %850 = vmatprep.subr.bf16.mxu0 %v746
    %851 = vmatpush1.bf16.msra.mxu0 %v745
    %852 = vmatprep.subr.bf16.mxu0 %v742
    %853 = vmatpush1.bf16.msra.mxu0 %v741
    %854 = vmatprep.subr.bf16.mxu0 %v738
    %855 = vmatpush1.bf16.msra.mxu0 %v737
    %856 = vmatprep.subr.bf16.mxu0 0
    %857 = vmatpush2.bf16.msra.mxu0 0
    %858 = vmatprep.subr.bf16.mxu0 0
    %859 = vmatpush2.bf16.msra.mxu0 0
    %860 = vmatprep.subr.bf16.mxu0 0
    %861 = vmatpush2.bf16.msra.mxu0 0
    %862 = vmatprep.subr.bf16.mxu0 0
    %863 = vmatpush2.bf16.msra.mxu0 0
    %864 = vmatprep.subr.bf16.mxu0 0
    %865 = vmatpush2.bf16.msra.mxu0 0
    %866 = vmatprep.subr.bf16.mxu0 0
    %867 = vmatpush2.bf16.msra.mxu0 0
    %868 = vmatprep.subr.bf16.mxu0 0
    %869 = vmatpush2.bf16.msra.mxu0 0
    %870 = vmatprep.subr.bf16.mxu0 0
    %871 = vmatpush2.bf16.msra.mxu0 0
    %872 = vmatprep.mubr.bf16.mxu0 0
    %873 = vmatmul.mubr.bf16.gmra.mxu0 0
    %v874 = vpop.f32.mrf.mxu0
    %v875 = vadd.f32 0.0, %v874
    %v876 = vpop.f32.mrf.mxu0
    %v877 = vadd.f32 0.0, %v876
    %v878 = vpop.f32.mrf.mxu0
    %v879 = vpop.f32.mrf.mxu0
    %880 = vdwg.mxu0
    %v881 = vadd.f32 %v603, %v834
    %v882 = vadd.f32 %v604, %v836
    %v883 = vadd.f32 %v605, %v875
    %v884 = vadd.f32 %v606, %v877
    %v885 = vmul.f32 %v881, 0.5
    %v886 = vmul.f32 %v882, 0.5
    %v887 = vmul.f32 %v883, 0.5
    %v888 = vtanh.pop %v885
    %v889 = vtanh.pop %v886
    %v890 = vtanh.pop %v887
    %v891 = vmul.f32 %v888, 0.5
    %v892 = vmul.f32 %v889, 0.5
    %v893 = vmul.f32 %v890, 0.5
    %v894 = vadd.f32 %v891, 0.5
    %v895 = vadd.f32 %v892, 0.5
    %v896 = vadd.f32 %v893, 0.5
    %v897 = vtanh.pop %v884
    %v898 = vmul.f32 %v895, 0.0
    %v899 = vmul.f32 %v894, %v897
    %v900 = vadd.f32 %v898, %v899
    %v901 = vtanh.pop %v900
    %v902 = vmul.f32 %v896, %v901
    %vm903 = vcmask 523264
    %904 = vst.msk [vmem:[#allocation4] sm:$0xff] %vm903, %v902
    %vm905 = vcmask 1048064
    %906 = vst.msk [vmem:[#allocation4 + $0x38] sm:$0xff] %vm905, %v902
    %v907 = vld [vmem:[#allocation3 + $0x20] sm:$0xff]
    %v908 = vld [vmem:[#allocation3 + $0x28] sm:$0xff]
    %v909 = vld [vmem:[#allocation3 + $0x30] sm:$0xff]
    %v910 = vld [vmem:[#allocation3 + $0x38] sm:$0xff]
    %v911 = vpack.c.bf16 %v902, %v902
    %v912 = vld [vmem:[#allocation8 + $0x100] sm:$0xff]
    %v913 = vld [vmem:[#allocation8 + $0x108] sm:$0xff]
    %v914 = vld [vmem:[#allocation8 + $0x110] sm:$0xff]
    %v915 = vld [vmem:[#allocation8 + $0x118] sm:$0xff]
    %v916 = vld [vmem:[#allocation8 + $0x120] sm:$0xff]
    %v917 = vld [vmem:[#allocation8 + $0x128] sm:$0xff]
    %v918 = vld [vmem:[#allocation8 + $0x130] sm:$0xff]
    %v919 = vld [vmem:[#allocation8 + $0x138] sm:$0xff]
    %v920 = vld [vmem:[#allocation8 + $0x140] sm:$0xff]
    %v921 = vld [vmem:[#allocation8 + $0x148] sm:$0xff]
    %v922 = vld [vmem:[#allocation8 + $0x150] sm:$0xff]
    %v923 = vld [vmem:[#allocation8 + $0x158] sm:$0xff]
    %v924 = vld [vmem:[#allocation8 + $0x160] sm:$0xff]
    %v925 = vld [vmem:[#allocation8 + $0x168] sm:$0xff]
    %v926 = vld [vmem:[#allocation8 + $0x170] sm:$0xff]
    %v927 = vld [vmem:[#allocation8 + $0x178] sm:$0xff]
    %v928 = vld [vmem:[#allocation8 + $0x180] sm:$0xff]
    %v929 = vld [vmem:[#allocation8 + $0x188] sm:$0xff]
    %v930 = vld [vmem:[#allocation8 + $0x190] sm:$0xff]
    %v931 = vld [vmem:[#allocation8 + $0x198] sm:$0xff]
    %v932 = vld [vmem:[#allocation8 + $0x1a0] sm:$0xff]
    %v933 = vld [vmem:[#allocation8 + $0x1a8] sm:$0xff]
    %v934 = vld [vmem:[#allocation8 + $0x1b0] sm:$0xff]
    %v935 = vld [vmem:[#allocation8 + $0x1b8] sm:$0xff]
    %v936 = vld [vmem:[#allocation8 + $0x1c0] sm:$0xff]
    %v937 = vld [vmem:[#allocation8 + $0x1c8] sm:$0xff]
    %v938 = vld [vmem:[#allocation8 + $0x1d0] sm:$0xff]
    %v939 = vld [vmem:[#allocation8 + $0x1d8] sm:$0xff]
    %v940 = vld [vmem:[#allocation8 + $0x1e0] sm:$0xff]
    %v941 = vld [vmem:[#allocation8 + $0x1e8] sm:$0xff]
    %v942 = vld [vmem:[#allocation8 + $0x1f0] sm:$0xff]
    %v943 = vld [vmem:[#allocation8 + $0x1f8] sm:$0xff]
    %v976 = vunpack.c.l.b16 %v912
    %v977 = vunpack.c.h.b16 %v912
    %v978 = vunpack.c.l.b16 %v913
    %v979 = vunpack.c.h.b16 %v913
    %v980 = vunpack.c.l.b16 %v914
    %v981 = vunpack.c.h.b16 %v914
    %v982 = vunpack.c.l.b16 %v915
    %v983 = vunpack.c.h.b16 %v915
    %v984 = vunpack.c.l.b16 %v916
    %v985 = vunpack.c.h.b16 %v916
    %v986 = vunpack.c.l.b16 %v917
    %v987 = vunpack.c.h.b16 %v917
    %v988 = vunpack.c.l.b16 %v918
    %v989 = vunpack.c.h.b16 %v918
    %v990 = vunpack.c.l.b16 %v919
    %v991 = vunpack.c.h.b16 %v919
    %v992 = vunpack.c.l.b16 %v920
    %v993 = vunpack.c.h.b16 %v920
    %v994 = vunpack.c.l.b16 %v921
    %v995 = vunpack.c.h.b16 %v921
    %v996 = vunpack.c.l.b16 %v922
    %v997 = vunpack.c.h.b16 %v922
    %v998 = vunpack.c.l.b16 %v923
    %v999 = vunpack.c.h.b16 %v923
    %v1000 = vunpack.c.l.b16 %v924
    %v1001 = vunpack.c.h.b16 %v924
    %v1002 = vunpack.c.l.b16 %v925
    %v1003 = vunpack.c.h.b16 %v925
    %v1004 = vunpack.c.l.b16 %v926
    %v1005 = vunpack.c.h.b16 %v926
    %v1006 = vunpack.c.l.b16 %v927
    %v1007 = vunpack.c.h.b16 %v927
    %v1008 = vunpack.c.l.b16 %v928
    %v1009 = vunpack.c.h.b16 %v928
    %v1010 = vunpack.c.l.b16 %v929
    %v1011 = vunpack.c.h.b16 %v929
    %v1012 = vunpack.c.l.b16 %v930
    %v1013 = vunpack.c.h.b16 %v930
    %v1014 = vunpack.c.l.b16 %v931
    %v1015 = vunpack.c.h.b16 %v931
    %v1016 = vunpack.c.l.b16 %v932
    %v1017 = vunpack.c.h.b16 %v932
    %v1018 = vunpack.c.l.b16 %v933
    %v1019 = vunpack.c.h.b16 %v933
    %v1020 = vunpack.c.l.b16 %v934
    %v1021 = vunpack.c.h.b16 %v934
    %v1022 = vunpack.c.l.b16 %v935
    %v1023 = vunpack.c.h.b16 %v935
    %v1024 = vunpack.c.l.b16 %v936
    %v1025 = vunpack.c.h.b16 %v936
    %v1026 = vunpack.c.l.b16 %v937
    %v1027 = vunpack.c.h.b16 %v937
    %v1028 = vunpack.c.l.b16 %v938
    %v1029 = vunpack.c.h.b16 %v938
    %v1030 = vunpack.c.l.b16 %v939
    %v1031 = vunpack.c.h.b16 %v939
    %v1032 = vunpack.c.l.b16 %v940
    %v1033 = vunpack.c.h.b16 %v940
    %v1034 = vunpack.c.l.b16 %v941
    %v1035 = vunpack.c.h.b16 %v941
    %v1036 = vunpack.c.l.b16 %v942
    %v1037 = vunpack.c.h.b16 %v942
    %v1038 = vunpack.c.l.b16 %v943
    %v1039 = vunpack.c.h.b16 %v943
    %v1040 = vpack.c.b16 %v980, %v976
    %v1041 = vpack.c.b16 %v981, %v977
    %v1042 = vpack.c.b16 %v982, %v978
    %v1043 = vpack.c.b16 %v983, %v979
    %v1044 = vpack.c.b16 %v988, %v984
    %v1045 = vpack.c.b16 %v989, %v985
    %v1046 = vpack.c.b16 %v990, %v986
    %v1047 = vpack.c.b16 %v991, %v987
    %v1048 = vpack.c.b16 %v996, %v992
    %v1049 = vpack.c.b16 %v997, %v993
    %v1050 = vpack.c.b16 %v998, %v994
    %v1051 = vpack.c.b16 %v999, %v995
    %v1052 = vpack.c.b16 %v1004, %v1000
    %v1053 = vpack.c.b16 %v1005, %v1001
    %v1054 = vpack.c.b16 %v1006, %v1002
    %v1055 = vpack.c.b16 %v1007, %v1003
    %v1056 = vpack.c.b16 %v1012, %v1008
    %v1057 = vpack.c.b16 %v1013, %v1009
    %v1058 = vpack.c.b16 %v1014, %v1010
    %v1059 = vpack.c.b16 %v1015, %v1011
    %v1060 = vpack.c.b16 %v1020, %v1016
    %v1061 = vpack.c.b16 %v1021, %v1017
    %v1062 = vpack.c.b16 %v1022, %v1018
    %v1063 = vpack.c.b16 %v1023, %v1019
    %v1064 = vpack.c.b16 %v1028, %v1024
    %v1065 = vpack.c.b16 %v1029, %v1025
    %v1066 = vpack.c.b16 %v1030, %v1026
    %v1067 = vpack.c.b16 %v1031, %v1027
    %v1068 = vpack.c.b16 %v1036, %v1032
    %v1069 = vpack.c.b16 %v1037, %v1033
    %v1070 = vpack.c.b16 %v1038, %v1034
    %v1071 = vpack.c.b16 %v1039, %v1035
    %1104 = vmatprep.subr.bf16.mxu0 %v1069
    %1105 = vmatpush1.bf16.msra.mxu0 %v1068
    %1106 = vmatprep.subr.bf16.mxu0 %v1065
    %1107 = vmatpush1.bf16.msra.mxu0 %v1064
    %1108 = vmatprep.subr.bf16.mxu0 %v1061
    %1109 = vmatpush1.bf16.msra.mxu0 %v1060
    %1110 = vmatprep.subr.bf16.mxu0 %v1057
    %1111 = vmatpush1.bf16.msra.mxu0 %v1056
    %1112 = vmatprep.subr.bf16.mxu0 %v1053
    %1113 = vmatpush1.bf16.msra.mxu0 %v1052
    %1114 = vmatprep.subr.bf16.mxu0 %v1049
    %1115 = vmatpush1.bf16.msra.mxu0 %v1048
    %1116 = vmatprep.subr.bf16.mxu0 %v1045
    %1117 = vmatpush1.bf16.msra.mxu0 %v1044
    %1118 = vmatprep.subr.bf16.mxu0 %v1041
    %1119 = vmatpush1.bf16.msra.mxu0 %v1040
    %1120 = vmatprep.subr.bf16.mxu0 0
    %1121 = vmatpush2.bf16.msra.mxu0 0
    %1122 = vmatprep.subr.bf16.mxu0 0
    %1123 = vmatpush2.bf16.msra.mxu0 0
    %1124 = vmatprep.subr.bf16.mxu0 0
    %1125 = vmatpush2.bf16.msra.mxu0 0
    %1126 = vmatprep.subr.bf16.mxu0 0
    %1127 = vmatpush2.bf16.msra.mxu0 0
    %1128 = vmatprep.subr.bf16.mxu0 0
    %1129 = vmatpush2.bf16.msra.mxu0 0
    %1130 = vmatprep.subr.bf16.mxu0 0
    %1131 = vmatpush2.bf16.msra.mxu0 0
    %1132 = vmatprep.subr.bf16.mxu0 0
    %1133 = vmatpush2.bf16.msra.mxu0 0
    %1134 = vmatprep.subr.bf16.mxu0 0
    %1135 = vmatpush2.bf16.msra.mxu0 0
    %1136 = vmatprep.mubr.bf16.mxu0 0
    %1137 = vmatmul.mubr.bf16.gmra.mxu0 %v911
    %v1138 = vpop.f32.mrf.mxu0
    %v1139 = vadd.f32 0.0, %v1138
    %v1140 = vpop.f32.mrf.mxu0
    %v1141 = vadd.f32 0.0, %v1140
    %v1142 = vpop.f32.mrf.mxu0
    %v1143 = vpop.f32.mrf.mxu0
    %1144 = vdwg.mxu0
    %1145 = vmatprep.subr.bf16.mxu0 %v1071
    %1146 = vmatpush1.bf16.msra.mxu0 %v1070
    %1147 = vmatprep.subr.bf16.mxu0 %v1067
    %1148 = vmatpush1.bf16.msra.mxu0 %v1066
    %1149 = vmatprep.subr.bf16.mxu0 %v1063
    %1150 = vmatpush1.bf16.msra.mxu0 %v1062
    %1151 = vmatprep.subr.bf16.mxu0 %v1059
    %1152 = vmatpush1.bf16.msra.mxu0 %v1058
    %1153 = vmatprep.subr.bf16.mxu0 %v1055
    %1154 = vmatpush1.bf16.msra.mxu0 %v1054
    %1155 = vmatprep.subr.bf16.mxu0 %v1051
    %1156 = vmatpush1.bf16.msra.mxu0 %v1050
    %1157 = vmatprep.subr.bf16.mxu0 %v1047
    %1158 = vmatpush1.bf16.msra.mxu0 %v1046
    %1159 = vmatprep.subr.bf16.mxu0 %v1043
    %1160 = vmatpush1.bf16.msra.mxu0 %v1042
    %1161 = vmatprep.subr.bf16.mxu0 0
    %1162 = vmatpush2.bf16.msra.mxu0 0
    %1163 = vmatprep.subr.bf16.mxu0 0
    %1164 = vmatpush2.bf16.msra.mxu0 0
    %1165 = vmatprep.subr.bf16.mxu0 0
    %1166 = vmatpush2.bf16.msra.mxu0 0
    %1167 = vmatprep.subr.bf16.mxu0 0
    %1168 = vmatpush2.bf16.msra.mxu0 0
    %1169 = vmatprep.subr.bf16.mxu0 0
    %1170 = vmatpush2.bf16.msra.mxu0 0
    %1171 = vmatprep.subr.bf16.mxu0 0
    %1172 = vmatpush2.bf16.msra.mxu0 0
    %1173 = vmatprep.subr.bf16.mxu0 0
    %1174 = vmatpush2.bf16.msra.mxu0 0
    %1175 = vmatprep.subr.bf16.mxu0 0
    %1176 = vmatpush2.bf16.msra.mxu0 0
    %1177 = vmatprep.mubr.bf16.mxu0 0
    %1178 = vmatmul.mubr.bf16.gmra.mxu0 %v911
    %v1179 = vpop.f32.mrf.mxu0
    %v1180 = vadd.f32 0.0, %v1179
    %v1181 = vpop.f32.mrf.mxu0
    %v1182 = vadd.f32 0.0, %v1181
    %v1183 = vpop.f32.mrf.mxu0
    %v1184 = vpop.f32.mrf.mxu0
    %1185 = vdwg.mxu0
    %v1186 = vadd.f32 %v907, %v1139
    %v1187 = vadd.f32 %v908, %v1141
    %v1188 = vadd.f32 %v909, %v1180
    %v1189 = vadd.f32 %v910, %v1182
    %v1190 = vmul.f32 %v1186, 0.5
    %v1191 = vmul.f32 %v1187, 0.5
    %v1192 = vmul.f32 %v1188, 0.5
    %v1193 = vtanh.pop %v1190
    %v1194 = vtanh.pop %v1191
    %v1195 = vtanh.pop %v1192
    %v1196 = vmul.f32 %v1193, 0.5
    %v1197 = vmul.f32 %v1194, 0.5
    %v1198 = vmul.f32 %v1195, 0.5
    %v1199 = vadd.f32 %v1196, 0.5
    %v1200 = vadd.f32 %v1197, 0.5
    %v1201 = vadd.f32 %v1198, 0.5
    %v1202 = vtanh.pop %v1189
    %v1203 = vmul.f32 %v1200, %v900
    %v1204 = vmul.f32 %v1199, %v1202
    %v1205 = vadd.f32 %v1203, %v1204
    %v1206 = vtanh.pop %v1205
    %v1207 = vmul.f32 %v1201, %v1206
    %1208 = vst.msk [vmem:[#allocation4 + $0x8] sm:$0xff] %vm903, %v1207
    %1209 = vst.msk [vmem:[#allocation4 + $0x30] sm:$0xff] %vm905, %v1207
    %v1210 = vld [vmem:[#allocation3 + $0x40] sm:$0xff]
    %v1211 = vld [vmem:[#allocation3 + $0x48] sm:$0xff]
    %v1212 = vld [vmem:[#allocation3 + $0x50] sm:$0xff]
    %v1213 = vld [vmem:[#allocation3 + $0x58] sm:$0xff]
    %v1214 = vpack.c.bf16 %v1207, %v1207
    %v1215 = vld [vmem:[#allocation8 + $0x100] sm:$0xff]
    %v1216 = vld [vmem:[#allocation8 + $0x108] sm:$0xff]
    %v1217 = vld [vmem:[#allocation8 + $0x110] sm:$0xff]
    %v1218 = vld [vmem:[#allocation8 + $0x118] sm:$0xff]
    %v1219 = vld [vmem:[#allocation8 + $0x120] sm:$0xff]
    %v1220 = vld [vmem:[#allocation8 + $0x128] sm:$0xff]
    %v1221 = vld [vmem:[#allocation8 + $0x130] sm:$0xff]
    %v1222 = vld [vmem:[#allocation8 + $0x138] sm:$0xff]
    %v1223 = vld [vmem:[#allocation8 + $0x140] sm:$0xff]
    %v1224 = vld [vmem:[#allocation8 + $0x148] sm:$0xff]
    %v1225 = vld [vmem:[#allocation8 + $0x150] sm:$0xff]
    %v1226 = vld [vmem:[#allocation8 + $0x158] sm:$0xff]
    %v1227 = vld [vmem:[#allocation8 + $0x160] sm:$0xff]
    %v1228 = vld [vmem:[#allocation8 + $0x168] sm:$0xff]
    %v1229 = vld [vmem:[#allocation8 + $0x170] sm:$0xff]
    %v1230 = vld [vmem:[#allocation8 + $0x178] sm:$0xff]
    %v1231 = vld [vmem:[#allocation8 + $0x180] sm:$0xff]
    %v1232 = vld [vmem:[#allocation8 + $0x188] sm:$0xff]
    %v1233 = vld [vmem:[#allocation8 + $0x190] sm:$0xff]
    %v1234 = vld [vmem:[#allocation8 + $0x198] sm:$0xff]
    %v1235 = vld [vmem:[#allocation8 + $0x1a0] sm:$0xff]
    %v1236 = vld [vmem:[#allocation8 + $0x1a8] sm:$0xff]
    %v1237 = vld [vmem:[#allocation8 + $0x1b0] sm:$0xff]
    %v1238 = vld [vmem:[#allocation8 + $0x1b8] sm:$0xff]
    %v1239 = vld [vmem:[#allocation8 + $0x1c0] sm:$0xff]
    %v1240 = vld [vmem:[#allocation8 + $0x1c8] sm:$0xff]
    %v1241 = vld [vmem:[#allocation8 + $0x1d0] sm:$0xff]
    %v1242 = vld [vmem:[#allocation8 + $0x1d8] sm:$0xff]
    %v1243 = vld [vmem:[#allocation8 + $0x1e0] sm:$0xff]
    %v1244 = vld [vmem:[#allocation8 + $0x1e8] sm:$0xff]
    %v1245 = vld [vmem:[#allocation8 + $0x1f0] sm:$0xff]
    %v1246 = vld [vmem:[#allocation8 + $0x1f8] sm:$0xff]
    %v1279 = vunpack.c.l.b16 %v1215
    %v1280 = vunpack.c.h.b16 %v1215
    %v1281 = vunpack.c.l.b16 %v1216
    %v1282 = vunpack.c.h.b16 %v1216
    %v1283 = vunpack.c.l.b16 %v1217
    %v1284 = vunpack.c.h.b16 %v1217
    %v1285 = vunpack.c.l.b16 %v1218
    %v1286 = vunpack.c.h.b16 %v1218
    %v1287 = vunpack.c.l.b16 %v1219
    %v1288 = vunpack.c.h.b16 %v1219
    %v1289 = vunpack.c.l.b16 %v1220
    %v1290 = vunpack.c.h.b16 %v1220
    %v1291 = vunpack.c.l.b16 %v1221
    %v1292 = vunpack.c.h.b16 %v1221
    %v1293 = vunpack.c.l.b16 %v1222
    %v1294 = vunpack.c.h.b16 %v1222
    %v1295 = vunpack.c.l.b16 %v1223
    %v1296 = vunpack.c.h.b16 %v1223
    %v1297 = vunpack.c.l.b16 %v1224
    %v1298 = vunpack.c.h.b16 %v1224
    %v1299 = vunpack.c.l.b16 %v1225
    %v1300 = vunpack.c.h.b16 %v1225
    %v1301 = vunpack.c.l.b16 %v1226
    %v1302 = vunpack.c.h.b16 %v1226
    %v1303 = vunpack.c.l.b16 %v1227
    %v1304 = vunpack.c.h.b16 %v1227
    %v1305 = vunpack.c.l.b16 %v1228
    %v1306 = vunpack.c.h.b16 %v1228
    %v1307 = vunpack.c.l.b16 %v1229
    %v1308 = vunpack.c.h.b16 %v1229
    %v1309 = vunpack.c.l.b16 %v1230
    %v1310 = vunpack.c.h.b16 %v1230
    %v1311 = vunpack.c.l.b16 %v1231
    %v1312 = vunpack.c.h.b16 %v1231
    %v1313 = vunpack.c.l.b16 %v1232
    %v1314 = vunpack.c.h.b16 %v1232
    %v1315 = vunpack.c.l.b16 %v1233
    %v1316 = vunpack.c.h.b16 %v1233
    %v1317 = vunpack.c.l.b16 %v1234
    %v1318 = vunpack.c.h.b16 %v1234
    %v1319 = vunpack.c.l.b16 %v1235
    %v1320 = vunpack.c.h.b16 %v1235
    %v1321 = vunpack.c.l.b16 %v1236
    %v1322 = vunpack.c.h.b16 %v1236
    %v1323 = vunpack.c.l.b16 %v1237
    %v1324 = vunpack.c.h.b16 %v1237
    %v1325 = vunpack.c.l.b16 %v1238
    %v1326 = vunpack.c.h.b16 %v1238
    %v1327 = vunpack.c.l.b16 %v1239
    %v1328 = vunpack.c.h.b16 %v1239
    %v1329 = vunpack.c.l.b16 %v1240
    %v1330 = vunpack.c.h.b16 %v1240
    %v1331 = vunpack.c.l.b16 %v1241
    %v1332 = vunpack.c.h.b16 %v1241
    %v1333 = vunpack.c.l.b16 %v1242
    %v1334 = vunpack.c.h.b16 %v1242
    %v1335 = vunpack.c.l.b16 %v1243
    %v1336 = vunpack.c.h.b16 %v1243
    %v1337 = vunpack.c.l.b16 %v1244
    %v1338 = vunpack.c.h.b16 %v1244
    %v1339 = vunpack.c.l.b16 %v1245
    %v1340 = vunpack.c.h.b16 %v1245
    %v1341 = vunpack.c.l.b16 %v1246
    %v1342 = vunpack.c.h.b16 %v1246
    %v1343 = vpack.c.b16 %v1283, %v1279
    %v1344 = vpack.c.b16 %v1284, %v1280
    %v1345 = vpack.c.b16 %v1285, %v1281
    %v1346 = vpack.c.b16 %v1286, %v1282
    %v1347 = vpack.c.b16 %v1291, %v1287
    %v1348 = vpack.c.b16 %v1292, %v1288
    %v1349 = vpack.c.b16 %v1293, %v1289
    %v1350 = vpack.c.b16 %v1294, %v1290
    %v1351 = vpack.c.b16 %v1299, %v1295
    %v1352 = vpack.c.b16 %v1300, %v1296
    %v1353 = vpack.c.b16 %v1301, %v1297
    %v1354 = vpack.c.b16 %v1302, %v1298
    %v1355 = vpack.c.b16 %v1307, %v1303
    %v1356 = vpack.c.b16 %v1308, %v1304
    %v1357 = vpack.c.b16 %v1309, %v1305
    %v1358 = vpack.c.b16 %v1310, %v1306
    %v1359 = vpack.c.b16 %v1315, %v1311
    %v1360 = vpack.c.b16 %v1316, %v1312
    %v1361 = vpack.c.b16 %v1317, %v1313
    %v1362 = vpack.c.b16 %v1318, %v1314
    %v1363 = vpack.c.b16 %v1323, %v1319
    %v1364 = vpack.c.b16 %v1324, %v1320
    %v1365 = vpack.c.b16 %v1325, %v1321
    %v1366 = vpack.c.b16 %v1326, %v1322
    %v1367 = vpack.c.b16 %v1331, %v1327
    %v1368 = vpack.c.b16 %v1332, %v1328
    %v1369 = vpack.c.b16 %v1333, %v1329
    %v1370 = vpack.c.b16 %v1334, %v1330
    %v1371 = vpack.c.b16 %v1339, %v1335
    %v1372 = vpack.c.b16 %v1340, %v1336
    %v1373 = vpack.c.b16 %v1341, %v1337
    %v1374 = vpack.c.b16 %v1342, %v1338
    %1407 = vmatprep.subr.bf16.mxu0 %v1372
    %1408 = vmatpush1.bf16.msra.mxu0 %v1371
    %1409 = vmatprep.subr.bf16.mxu0 %v1368
    %1410 = vmatpush1.bf16.msra.mxu0 %v1367
    %1411 = vmatprep.subr.bf16.mxu0 %v1364
    %1412 = vmatpush1.bf16.msra.mxu0 %v1363
    %1413 = vmatprep.subr.bf16.mxu0 %v1360
    %1414 = vmatpush1.bf16.msra.mxu0 %v1359
    %1415 = vmatprep.subr.bf16.mxu0 %v1356
    %1416 = vmatpush1.bf16.msra.mxu0 %v1355
    %1417 = vmatprep.subr.bf16.mxu0 %v1352
    %1418 = vmatpush1.bf16.msra.mxu0 %v1351
    %1419 = vmatprep.subr.bf16.mxu0 %v1348
    %1420 = vmatpush1.bf16.msra.mxu0 %v1347
    %1421 = vmatprep.subr.bf16.mxu0 %v1344
    %1422 = vmatpush1.bf16.msra.mxu0 %v1343
    %1423 = vmatprep.subr.bf16.mxu0 0
    %1424 = vmatpush2.bf16.msra.mxu0 0
    %1425 = vmatprep.subr.bf16.mxu0 0
    %1426 = vmatpush2.bf16.msra.mxu0 0
    %1427 = vmatprep.subr.bf16.mxu0 0
    %1428 = vmatpush2.bf16.msra.mxu0 0
    %1429 = vmatprep.subr.bf16.mxu0 0
    %1430 = vmatpush2.bf16.msra.mxu0 0
    %1431 = vmatprep.subr.bf16.mxu0 0
    %1432 = vmatpush2.bf16.msra.mxu0 0
    %1433 = vmatprep.subr.bf16.mxu0 0
    %1434 = vmatpush2.bf16.msra.mxu0 0
    %1435 = vmatprep.subr.bf16.mxu0 0
    %1436 = vmatpush2.bf16.msra.mxu0 0
    %1437 = vmatprep.subr.bf16.mxu0 0
    %1438 = vmatpush2.bf16.msra.mxu0 0
    %1439 = vmatprep.mubr.bf16.mxu0 0
    %1440 = vmatmul.mubr.bf16.gmra.mxu0 %v1214
    %v1441 = vpop.f32.mrf.mxu0
    %v1442 = vadd.f32 0.0, %v1441
    %v1443 = vpop.f32.mrf.mxu0
    %v1444 = vadd.f32 0.0, %v1443
    %v1445 = vpop.f32.mrf.mxu0
    %v1446 = vpop.f32.mrf.mxu0
    %1447 = vdwg.mxu0
    %1448 = vmatprep.subr.bf16.mxu0 %v1374
    %1449 = vmatpush1.bf16.msra.mxu0 %v1373
    %1450 = vmatprep.subr.bf16.mxu0 %v1370
    %1451 = vmatpush1.bf16.msra.mxu0 %v1369
    %1452 = vmatprep.subr.bf16.mxu0 %v1366
    %1453 = vmatpush1.bf16.msra.mxu0 %v1365
    %1454 = vmatprep.subr.bf16.mxu0 %v1362
    %1455 = vmatpush1.bf16.msra.mxu0 %v1361
    %1456 = vmatprep.subr.bf16.mxu0 %v1358
    %1457 = vmatpush1.bf16.msra.mxu0 %v1357
    %1458 = vmatprep.subr.bf16.mxu0 %v1354
    %1459 = vmatpush1.bf16.msra.mxu0 %v1353
    %1460 = vmatprep.subr.bf16.mxu0 %v1350
    %1461 = vmatpush1.bf16.msra.mxu0 %v1349
    %1462 = vmatprep.subr.bf16.mxu0 %v1346
    %1463 = vmatpush1.bf16.msra.mxu0 %v1345
    %1464 = vmatprep.subr.bf16.mxu0 0
    %1465 = vmatpush2.bf16.msra.mxu0 0
    %1466 = vmatprep.subr.bf16.mxu0 0
    %1467 = vmatpush2.bf16.msra.mxu0 0
    %1468 = vmatprep.subr.bf16.mxu0 0
    %1469 = vmatpush2.bf16.msra.mxu0 0
    %1470 = vmatprep.subr.bf16.mxu0 0
    %1471 = vmatpush2.bf16.msra.mxu0 0
    %1472 = vmatprep.subr.bf16.mxu0 0
    %1473 = vmatpush2.bf16.msra.mxu0 0
    %1474 = vmatprep.subr.bf16.mxu0 0
    %1475 = vmatpush2.bf16.msra.mxu0 0
    %1476 = vmatprep.subr.bf16.mxu0 0
    %1477 = vmatpush2.bf16.msra.mxu0 0
    %1478 = vmatprep.subr.bf16.mxu0 0
    %1479 = vmatpush2.bf16.msra.mxu0 0
    %1480 = vmatprep.mubr.bf16.mxu0 0
    %1481 = vmatmul.mubr.bf16.gmra.mxu0 %v1214
    %v1482 = vpop.f32.mrf.mxu0
    %v1483 = vadd.f32 0.0, %v1482
    %v1484 = vpop.f32.mrf.mxu0
    %v1485 = vadd.f32 0.0, %v1484
    %v1486 = vpop.f32.mrf.mxu0
    %v1487 = vpop.f32.mrf.mxu0
    %1488 = vdwg.mxu0
    %v1489 = vadd.f32 %v1210, %v1442
    %v1490 = vadd.f32 %v1211, %v1444
    %v1491 = vadd.f32 %v1212, %v1483
    %v1492 = vadd.f32 %v1213, %v1485
    %v1493 = vmul.f32 %v1489, 0.5
    %v1494 = vmul.f32 %v1490, 0.5
    %v1495 = vmul.f32 %v1491, 0.5
    %v1496 = vtanh.pop %v1493
    %v1497 = vtanh.pop %v1494
    %v1498 = vtanh.pop %v1495
    %v1499 = vmul.f32 %v1496, 0.5
    %v1500 = vmul.f32 %v1497, 0.5
    %v1501 = vmul.f32 %v1498, 0.5
    %v1502 = vadd.f32 %v1499, 0.5
    %v1503 = vadd.f32 %v1500, 0.5
    %v1504 = vadd.f32 %v1501, 0.5
    %v1505 = vtanh.pop %v1492
    %v1506 = vmul.f32 %v1503, %v1205
    %v1507 = vmul.f32 %v1502, %v1505
    %v1508 = vadd.f32 %v1506, %v1507
    %v1509 = vtanh.pop %v1508
    %v1510 = vmul.f32 %v1504, %v1509
    %1511 = vst.msk [vmem:[#allocation4 + $0x10] sm:$0xff] %vm903, %v1510
    %1512 = vst.msk [vmem:[#allocation4 + $0x28] sm:$0xff] %vm905, %v1510
    %v1513 = vld [vmem:[#allocation3 + $0x60] sm:$0xff]
    %v1514 = vld [vmem:[#allocation3 + $0x68] sm:$0xff]
    %v1515 = vld [vmem:[#allocation3 + $0x70] sm:$0xff]
    %v1516 = vld [vmem:[#allocation3 + $0x78] sm:$0xff]
    %v1517 = vpack.c.bf16 %v1510, %v1510
    %v1518 = vld [vmem:[#allocation8 + $0x100] sm:$0xff]
    %v1519 = vld [vmem:[#allocation8 + $0x108] sm:$0xff]
    %v1520 = vld [vmem:[#allocation8 + $0x110] sm:$0xff]
    %v1521 = vld [vmem:[#allocation8 + $0x118] sm:$0xff]
    %v1522 = vld [vmem:[#allocation8 + $0x120] sm:$0xff]
    %v1523 = vld [vmem:[#allocation8 + $0x128] sm:$0xff]
    %v1524 = vld [vmem:[#allocation8 + $0x130] sm:$0xff]
    %v1525 = vld [vmem:[#allocation8 + $0x138] sm:$0xff]
    %v1526 = vld [vmem:[#allocation8 + $0x140] sm:$0xff]
    %v1527 = vld [vmem:[#allocation8 + $0x148] sm:$0xff]
    %v1528 = vld [vmem:[#allocation8 + $0x150] sm:$0xff]
    %v1529 = vld [vmem:[#allocation8 + $0x158] sm:$0xff]
    %v1530 = vld [vmem:[#allocation8 + $0x160] sm:$0xff]
    %v1531 = vld [vmem:[#allocation8 + $0x168] sm:$0xff]
    %v1532 = vld [vmem:[#allocation8 + $0x170] sm:$0xff]
    %v1533 = vld [vmem:[#allocation8 + $0x178] sm:$0xff]
    %v1534 = vld [vmem:[#allocation8 + $0x180] sm:$0xff]
    %v1535 = vld [vmem:[#allocation8 + $0x188] sm:$0xff]
    %v1536 = vld [vmem:[#allocation8 + $0x190] sm:$0xff]
    %v1537 = vld [vmem:[#allocation8 + $0x198] sm:$0xff]
    %v1538 = vld [vmem:[#allocation8 + $0x1a0] sm:$0xff]
    %v1539 = vld [vmem:[#allocation8 + $0x1a8] sm:$0xff]
    %v1540 = vld [vmem:[#allocation8 + $0x1b0] sm:$0xff]
    %v1541 = vld [vmem:[#allocation8 + $0x1b8] sm:$0xff]
    %v1542 = vld [vmem:[#allocation8 + $0x1c0] sm:$0xff]
    %v1543 = vld [vmem:[#allocation8 + $0x1c8] sm:$0xff]
    %v1544 = vld [vmem:[#allocation8 + $0x1d0] sm:$0xff]
    %v1545 = vld [vmem:[#allocation8 + $0x1d8] sm:$0xff]
    %v1546 = vld [vmem:[#allocation8 + $0x1e0] sm:$0xff]
    %v1547 = vld [vmem:[#allocation8 + $0x1e8] sm:$0xff]
    %v1548 = vld [vmem:[#allocation8 + $0x1f0] sm:$0xff]
    %v1549 = vld [vmem:[#allocation8 + $0x1f8] sm:$0xff]
    %v1582 = vunpack.c.l.b16 %v1518
    %v1583 = vunpack.c.h.b16 %v1518
    %v1584 = vunpack.c.l.b16 %v1519
    %v1585 = vunpack.c.h.b16 %v1519
    %v1586 = vunpack.c.l.b16 %v1520
    %v1587 = vunpack.c.h.b16 %v1520
    %v1588 = vunpack.c.l.b16 %v1521
    %v1589 = vunpack.c.h.b16 %v1521
    %v1590 = vunpack.c.l.b16 %v1522
    %v1591 = vunpack.c.h.b16 %v1522
    %v1592 = vunpack.c.l.b16 %v1523
    %v1593 = vunpack.c.h.b16 %v1523
    %v1594 = vunpack.c.l.b16 %v1524
    %v1595 = vunpack.c.h.b16 %v1524
    %v1596 = vunpack.c.l.b16 %v1525
    %v1597 = vunpack.c.h.b16 %v1525
    %v1598 = vunpack.c.l.b16 %v1526
    %v1599 = vunpack.c.h.b16 %v1526
    %v1600 = vunpack.c.l.b16 %v1527
    %v1601 = vunpack.c.h.b16 %v1527
    %v1602 = vunpack.c.l.b16 %v1528
    %v1603 = vunpack.c.h.b16 %v1528
    %v1604 = vunpack.c.l.b16 %v1529
    %v1605 = vunpack.c.h.b16 %v1529
    %v1606 = vunpack.c.l.b16 %v1530
    %v1607 = vunpack.c.h.b16 %v1530
    %v1608 = vunpack.c.l.b16 %v1531
    %v1609 = vunpack.c.h.b16 %v1531
    %v1610 = vunpack.c.l.b16 %v1532
    %v1611 = vunpack.c.h.b16 %v1532
    %v1612 = vunpack.c.l.b16 %v1533
    %v1613 = vunpack.c.h.b16 %v1533
    %v1614 = vunpack.c.l.b16 %v1534
    %v1615 = vunpack.c.h.b16 %v1534
    %v1616 = vunpack.c.l.b16 %v1535
    %v1617 = vunpack.c.h.b16 %v1535
    %v1618 = vunpack.c.l.b16 %v1536
    %v1619 = vunpack.c.h.b16 %v1536
    %v1620 = vunpack.c.l.b16 %v1537
    %v1621 = vunpack.c.h.b16 %v1537
    %v1622 = vunpack.c.l.b16 %v1538
    %v1623 = vunpack.c.h.b16 %v1538
    %v1624 = vunpack.c.l.b16 %v1539
    %v1625 = vunpack.c.h.b16 %v1539
    %v1626 = vunpack.c.l.b16 %v1540
    %v1627 = vunpack.c.h.b16 %v1540
    %v1628 = vunpack.c.l.b16 %v1541
    %v1629 = vunpack.c.h.b16 %v1541
    %v1630 = vunpack.c.l.b16 %v1542
    %v1631 = vunpack.c.h.b16 %v1542
    %v1632 = vunpack.c.l.b16 %v1543
    %v1633 = vunpack.c.h.b16 %v1543
    %v1634 = vunpack.c.l.b16 %v1544
    %v1635 = vunpack.c.h.b16 %v1544
    %v1636 = vunpack.c.l.b16 %v1545
    %v1637 = vunpack.c.h.b16 %v1545
    %v1638 = vunpack.c.l.b16 %v1546
    %v1639 = vunpack.c.h.b16 %v1546
    %v1640 = vunpack.c.l.b16 %v1547
    %v1641 = vunpack.c.h.b16 %v1547
    %v1642 = vunpack.c.l.b16 %v1548
    %v1643 = vunpack.c.h.b16 %v1548
    %v1644 = vunpack.c.l.b16 %v1549
    %v1645 = vunpack.c.h.b16 %v1549
    %v1646 = vpack.c.b16 %v1586, %v1582
    %v1647 = vpack.c.b16 %v1587, %v1583
    %v1648 = vpack.c.b16 %v1588, %v1584
    %v1649 = vpack.c.b16 %v1589, %v1585
    %v1650 = vpack.c.b16 %v1594, %v1590
    %v1651 = vpack.c.b16 %v1595, %v1591
    %v1652 = vpack.c.b16 %v1596, %v1592
    %v1653 = vpack.c.b16 %v1597, %v1593
    %v1654 = vpack.c.b16 %v1602, %v1598
    %v1655 = vpack.c.b16 %v1603, %v1599
    %v1656 = vpack.c.b16 %v1604, %v1600
    %v1657 = vpack.c.b16 %v1605, %v1601
    %v1658 = vpack.c.b16 %v1610, %v1606
    %v1659 = vpack.c.b16 %v1611, %v1607
    %v1660 = vpack.c.b16 %v1612, %v1608
    %v1661 = vpack.c.b16 %v1613, %v1609
    %v1662 = vpack.c.b16 %v1618, %v1614
    %v1663 = vpack.c.b16 %v1619, %v1615
    %v1664 = vpack.c.b16 %v1620, %v1616
    %v1665 = vpack.c.b16 %v1621, %v1617
    %v1666 = vpack.c.b16 %v1626, %v1622
    %v1667 = vpack.c.b16 %v1627, %v1623
    %v1668 = vpack.c.b16 %v1628, %v1624
    %v1669 = vpack.c.b16 %v1629, %v1625
    %v1670 = vpack.c.b16 %v1634, %v1630
    %v1671 = vpack.c.b16 %v1635, %v1631
    %v1672 = vpack.c.b16 %v1636, %v1632
    %v1673 = vpack.c.b16 %v1637, %v1633
    %v1674 = vpack.c.b16 %v1642, %v1638
    %v1675 = vpack.c.b16 %v1643, %v1639
    %v1676 = vpack.c.b16 %v1644, %v1640
    %v1677 = vpack.c.b16 %v1645, %v1641
    %1710 = vmatprep.subr.bf16.mxu0 %v1675
    %1711 = vmatpush1.bf16.msra.mxu0 %v1674
    %1712 = vmatprep.subr.bf16.mxu0 %v1671
    %1713 = vmatpush1.bf16.msra.mxu0 %v1670
    %1714 = vmatprep.subr.bf16.mxu0 %v1667
    %1715 = vmatpush1.bf16.msra.mxu0 %v1666
    %1716 = vmatprep.subr.bf16.mxu0 %v1663
    %1717 = vmatpush1.bf16.msra.mxu0 %v1662
    %1718 = vmatprep.subr.bf16.mxu0 %v1659
    %1719 = vmatpush1.bf16.msra.mxu0 %v1658
    %1720 = vmatprep.subr.bf16.mxu0 %v1655
    %1721 = vmatpush1.bf16.msra.mxu0 %v1654
    %1722 = vmatprep.subr.bf16.mxu0 %v1651
    %1723 = vmatpush1.bf16.msra.mxu0 %v1650
    %1724 = vmatprep.subr.bf16.mxu0 %v1647
    %1725 = vmatpush1.bf16.msra.mxu0 %v1646
    %1726 = vmatprep.subr.bf16.mxu0 0
    %1727 = vmatpush2.bf16.msra.mxu0 0
    %1728 = vmatprep.subr.bf16.mxu0 0
    %1729 = vmatpush2.bf16.msra.mxu0 0
    %1730 = vmatprep.subr.bf16.mxu0 0
    %1731 = vmatpush2.bf16.msra.mxu0 0
    %1732 = vmatprep.subr.bf16.mxu0 0
    %1733 = vmatpush2.bf16.msra.mxu0 0
    %1734 = vmatprep.subr.bf16.mxu0 0
    %1735 = vmatpush2.bf16.msra.mxu0 0
    %1736 = vmatprep.subr.bf16.mxu0 0
    %1737 = vmatpush2.bf16.msra.mxu0 0
    %1738 = vmatprep.subr.bf16.mxu0 0
    %1739 = vmatpush2.bf16.msra.mxu0 0
    %1740 = vmatprep.subr.bf16.mxu0 0
    %1741 = vmatpush2.bf16.msra.mxu0 0
    %1742 = vmatprep.mubr.bf16.mxu0 0
    %1743 = vmatmul.mubr.bf16.gmra.mxu0 %v1517
    %v1744 = vpop.f32.mrf.mxu0
    %v1745 = vadd.f32 0.0, %v1744
    %v1746 = vpop.f32.mrf.mxu0
    %v1747 = vadd.f32 0.0, %v1746
    %v1748 = vpop.f32.mrf.mxu0
    %v1749 = vpop.f32.mrf.mxu0
    %1750 = vdwg.mxu0
    %1751 = vmatprep.subr.bf16.mxu0 %v1677
    %1752 = vmatpush1.bf16.msra.mxu0 %v1676
    %1753 = vmatprep.subr.bf16.mxu0 %v1673
    %1754 = vmatpush1.bf16.msra.mxu0 %v1672
    %1755 = vmatprep.subr.bf16.mxu0 %v1669
    %1756 = vmatpush1.bf16.msra.mxu0 %v1668
    %1757 = vmatprep.subr.bf16.mxu0 %v1665
    %1758 = vmatpush1.bf16.msra.mxu0 %v1664
    %1759 = vmatprep.subr.bf16.mxu0 %v1661
    %1760 = vmatpush1.bf16.msra.mxu0 %v1660
    %1761 = vmatprep.subr.bf16.mxu0 %v1657
    %1762 = vmatpush1.bf16.msra.mxu0 %v1656
    %1763 = vmatprep.subr.bf16.mxu0 %v1653
    %1764 = vmatpush1.bf16.msra.mxu0 %v1652
    %1765 = vmatprep.subr.bf16.mxu0 %v1649
    %1766 = vmatpush1.bf16.msra.mxu0 %v1648
    %1767 = vmatprep.subr.bf16.mxu0 0
    %1768 = vmatpush2.bf16.msra.mxu0 0
    %1769 = vmatprep.subr.bf16.mxu0 0
    %1770 = vmatpush2.bf16.msra.mxu0 0
    %1771 = vmatprep.subr.bf16.mxu0 0
    %1772 = vmatpush2.bf16.msra.mxu0 0
    %1773 = vmatprep.subr.bf16.mxu0 0
    %1774 = vmatpush2.bf16.msra.mxu0 0
    %1775 = vmatprep.subr.bf16.mxu0 0
    %1776 = vmatpush2.bf16.msra.mxu0 0
    %1777 = vmatprep.subr.bf16.mxu0 0
    %1778 = vmatpush2.bf16.msra.mxu0 0
    %1779 = vmatprep.subr.bf16.mxu0 0
    %1780 = vmatpush2.bf16.msra.mxu0 0
    %1781 = vmatprep.subr.bf16.mxu0 0
    %1782 = vmatpush2.bf16.msra.mxu0 0
    %1783 = vmatprep.mubr.bf16.mxu0 0
    %1784 = vmatmul.mubr.bf16.gmra.mxu0 %v1517
    %v1785 = vpop.f32.mrf.mxu0
    %v1786 = vadd.f32 0.0, %v1785
    %v1787 = vpop.f32.mrf.mxu0
    %v1788 = vadd.f32 0.0, %v1787
    %v1789 = vpop.f32.mrf.mxu0
    %v1790 = vpop.f32.mrf.mxu0
    %1791 = vdwg.mxu0
    %v1792 = vadd.f32 %v1513, %v1745
    %v1793 = vadd.f32 %v1514, %v1747
    %v1794 = vadd.f32 %v1515, %v1786
    %v1795 = vadd.f32 %v1516, %v1788
    %v1796 = vmul.f32 %v1792, 0.5
    %v1797 = vmul.f32 %v1793, 0.5
    %v1798 = vmul.f32 %v1794, 0.5
    %v1799 = vtanh.pop %v1796
    %v1800 = vtanh.pop %v1797
    %v1801 = vtanh.pop %v1798
    %v1802 = vmul.f32 %v1799, 0.5
    %v1803 = vmul.f32 %v1800, 0.5
    %v1804 = vmul.f32 %v1801, 0.5
    %v1805 = vadd.f32 %v1802, 0.5
    %v1806 = vadd.f32 %v1803, 0.5
    %v1807 = vadd.f32 %v1804, 0.5
    %v1808 = vtanh.pop %v1795
    %v1809 = vmul.f32 %v1806, %v1508
    %v1810 = vmul.f32 %v1805, %v1808
    %v1811 = vadd.f32 %v1809, %v1810
    %v1812 = vtanh.pop %v1811
    %v1813 = vmul.f32 %v1807, %v1812
    %1814 = vst.msk [vmem:[#allocation4 + $0x18] sm:$0xff] %vm903, %v1813
    %1815 = vst.msk [vmem:[#allocation4 + $0x20] sm:$0xff] %vm905, %v1813
    %v1816 = vld [vmem:[#allocation3 + $0x80] sm:$0xff]
    %v1817 = vld [vmem:[#allocation3 + $0x88] sm:$0xff]
    %v1818 = vld [vmem:[#allocation3 + $0x90] sm:$0xff]
    %v1819 = vld [vmem:[#allocation3 + $0x98] sm:$0xff]
    %v1820 = vpack.c.bf16 %v1813, %v1813
    %v1821 = vld [vmem:[#allocation8 + $0x100] sm:$0xff]
    %v1822 = vld [vmem:[#allocation8 + $0x108] sm:$0xff]
    %v1823 = vld [vmem:[#allocation8 + $0x110] sm:$0xff]
    %v1824 = vld [vmem:[#allocation8 + $0x118] sm:$0xff]
    %v1825 = vld [vmem:[#allocation8 + $0x120] sm:$0xff]
    %v1826 = vld [vmem:[#allocation8 + $0x128] sm:$0xff]
    %v1827 = vld [vmem:[#allocation8 + $0x130] sm:$0xff]
    %v1828 = vld [vmem:[#allocation8 + $0x138] sm:$0xff]
    %v1829 = vld [vmem:[#allocation8 + $0x140] sm:$0xff]
    %v1830 = vld [vmem:[#allocation8 + $0x148] sm:$0xff]
    %v1831 = vld [vmem:[#allocation8 + $0x150] sm:$0xff]
    %v1832 = vld [vmem:[#allocation8 + $0x158] sm:$0xff]
    %v1833 = vld [vmem:[#allocation8 + $0x160] sm:$0xff]
    %v1834 = vld [vmem:[#allocation8 + $0x168] sm:$0xff]
    %v1835 = vld [vmem:[#allocation8 + $0x170] sm:$0xff]
    %v1836 = vld [vmem:[#allocation8 + $0x178] sm:$0xff]
    %v1837 = vld [vmem:[#allocation8 + $0x180] sm:$0xff]
    %v1838 = vld [vmem:[#allocation8 + $0x188] sm:$0xff]
    %v1839 = vld [vmem:[#allocation8 + $0x190] sm:$0xff]
    %v1840 = vld [vmem:[#allocation8 + $0x198] sm:$0xff]
    %v1841 = vld [vmem:[#allocation8 + $0x1a0] sm:$0xff]
    %v1842 = vld [vmem:[#allocation8 + $0x1a8] sm:$0xff]
    %v1843 = vld [vmem:[#allocation8 + $0x1b0] sm:$0xff]
    %v1844 = vld [vmem:[#allocation8 + $0x1b8] sm:$0xff]
    %v1845 = vld [vmem:[#allocation8 + $0x1c0] sm:$0xff]
    %v1846 = vld [vmem:[#allocation8 + $0x1c8] sm:$0xff]
    %v1847 = vld [vmem:[#allocation8 + $0x1d0] sm:$0xff]
    %v1848 = vld [vmem:[#allocation8 + $0x1d8] sm:$0xff]
    %v1849 = vld [vmem:[#allocation8 + $0x1e0] sm:$0xff]
    %v1850 = vld [vmem:[#allocation8 + $0x1e8] sm:$0xff]
    %v1851 = vld [vmem:[#allocation8 + $0x1f0] sm:$0xff]
    %v1852 = vld [vmem:[#allocation8 + $0x1f8] sm:$0xff]
    %v1885 = vunpack.c.l.b16 %v1821
    %v1886 = vunpack.c.h.b16 %v1821
    %v1887 = vunpack.c.l.b16 %v1822
    %v1888 = vunpack.c.h.b16 %v1822
    %v1889 = vunpack.c.l.b16 %v1823
    %v1890 = vunpack.c.h.b16 %v1823
    %v1891 = vunpack.c.l.b16 %v1824
    %v1892 = vunpack.c.h.b16 %v1824
    %v1893 = vunpack.c.l.b16 %v1825
    %v1894 = vunpack.c.h.b16 %v1825
    %v1895 = vunpack.c.l.b16 %v1826
    %v1896 = vunpack.c.h.b16 %v1826
    %v1897 = vunpack.c.l.b16 %v1827
    %v1898 = vunpack.c.h.b16 %v1827
    %v1899 = vunpack.c.l.b16 %v1828
    %v1900 = vunpack.c.h.b16 %v1828
    %v1901 = vunpack.c.l.b16 %v1829
    %v1902 = vunpack.c.h.b16 %v1829
    %v1903 = vunpack.c.l.b16 %v1830
    %v1904 = vunpack.c.h.b16 %v1830
    %v1905 = vunpack.c.l.b16 %v1831
    %v1906 = vunpack.c.h.b16 %v1831
    %v1907 = vunpack.c.l.b16 %v1832
    %v1908 = vunpack.c.h.b16 %v1832
    %v1909 = vunpack.c.l.b16 %v1833
    %v1910 = vunpack.c.h.b16 %v1833
    %v1911 = vunpack.c.l.b16 %v1834
    %v1912 = vunpack.c.h.b16 %v1834
    %v1913 = vunpack.c.l.b16 %v1835
    %v1914 = vunpack.c.h.b16 %v1835
    %v1915 = vunpack.c.l.b16 %v1836
    %v1916 = vunpack.c.h.b16 %v1836
    %v1917 = vunpack.c.l.b16 %v1837
    %v1918 = vunpack.c.h.b16 %v1837
    %v1919 = vunpack.c.l.b16 %v1838
    %v1920 = vunpack.c.h.b16 %v1838
    %v1921 = vunpack.c.l.b16 %v1839
    %v1922 = vunpack.c.h.b16 %v1839
    %v1923 = vunpack.c.l.b16 %v1840
    %v1924 = vunpack.c.h.b16 %v1840
    %v1925 = vunpack.c.l.b16 %v1841
    %v1926 = vunpack.c.h.b16 %v1841
    %v1927 = vunpack.c.l.b16 %v1842
    %v1928 = vunpack.c.h.b16 %v1842
    %v1929 = vunpack.c.l.b16 %v1843
    %v1930 = vunpack.c.h.b16 %v1843
    %v1931 = vunpack.c.l.b16 %v1844
    %v1932 = vunpack.c.h.b16 %v1844
    %v1933 = vunpack.c.l.b16 %v1845
    %v1934 = vunpack.c.h.b16 %v1845
    %v1935 = vunpack.c.l.b16 %v1846
    %v1936 = vunpack.c.h.b16 %v1846
    %v1937 = vunpack.c.l.b16 %v1847
    %v1938 = vunpack.c.h.b16 %v1847
    %v1939 = vunpack.c.l.b16 %v1848
    %v1940 = vunpack.c.h.b16 %v1848
    %v1941 = vunpack.c.l.b16 %v1849
    %v1942 = vunpack.c.h.b16 %v1849
    %v1943 = vunpack.c.l.b16 %v1850
    %v1944 = vunpack.c.h.b16 %v1850
    %v1945 = vunpack.c.l.b16 %v1851
    %v1946 = vunpack.c.h.b16 %v1851
    %v1947 = vunpack.c.l.b16 %v1852
    %v1948 = vunpack.c.h.b16 %v1852
    %v1949 = vpack.c.b16 %v1889, %v1885
    %v1950 = vpack.c.b16 %v1890, %v1886
    %v1951 = vpack.c.b16 %v1891, %v1887
    %v1952 = vpack.c.b16 %v1892, %v1888
    %v1953 = vpack.c.b16 %v1897, %v1893
    %v1954 = vpack.c.b16 %v1898, %v1894
    %v1955 = vpack.c.b16 %v1899, %v1895
    %v1956 = vpack.c.b16 %v1900, %v1896
    %v1957 = vpack.c.b16 %v1905, %v1901
    %v1958 = vpack.c.b16 %v1906, %v1902
    %v1959 = vpack.c.b16 %v1907, %v1903
    %v1960 = vpack.c.b16 %v1908, %v1904
    %v1961 = vpack.c.b16 %v1913, %v1909
    %v1962 = vpack.c.b16 %v1914, %v1910
    %v1963 = vpack.c.b16 %v1915, %v1911
    %v1964 = vpack.c.b16 %v1916, %v1912
    %v1965 = vpack.c.b16 %v1921, %v1917
    %v1966 = vpack.c.b16 %v1922, %v1918
    %v1967 = vpack.c.b16 %v1923, %v1919
    %v1968 = vpack.c.b16 %v1924, %v1920
    %v1969 = vpack.c.b16 %v1929, %v1925
    %v1970 = vpack.c.b16 %v1930, %v1926
    %v1971 = vpack.c.b16 %v1931, %v1927
    %v1972 = vpack.c.b16 %v1932, %v1928
    %v1973 = vpack.c.b16 %v1937, %v1933
    %v1974 = vpack.c.b16 %v1938, %v1934
    %v1975 = vpack.c.b16 %v1939, %v1935
    %v1976 = vpack.c.b16 %v1940, %v1936
    %v1977 = vpack.c.b16 %v1945, %v1941
    %v1978 = vpack.c.b16 %v1946, %v1942
    %v1979 = vpack.c.b16 %v1947, %v1943
    %v1980 = vpack.c.b16 %v1948, %v1944
    %2013 = vmatprep.subr.bf16.mxu0 %v1978
    %2014 = vmatpush1.bf16.msra.mxu0 %v1977
    %2015 = vmatprep.subr.bf16.mxu0 %v1974
    %2016 = vmatpush1.bf16.msra.mxu0 %v1973
    %2017 = vmatprep.subr.bf16.mxu0 %v1970
    %2018 = vmatpush1.bf16.msra.mxu0 %v1969
    %2019 = vmatprep.subr.bf16.mxu0 %v1966
    %2020 = vmatpush1.bf16.msra.mxu0 %v1965
    %2021 = vmatprep.subr.bf16.mxu0 %v1962
    %2022 = vmatpush1.bf16.msra.mxu0 %v1961
    %2023 = vmatprep.subr.bf16.mxu0 %v1958
    %2024 = vmatpush1.bf16.msra.mxu0 %v1957
    %2025 = vmatprep.subr.bf16.mxu0 %v1954
    %2026 = vmatpush1.bf16.msra.mxu0 %v1953
    %2027 = vmatprep.subr.bf16.mxu0 %v1950
    %2028 = vmatpush1.bf16.msra.mxu0 %v1949
    %2029 = vmatprep.subr.bf16.mxu0 0
    %2030 = vmatpush2.bf16.msra.mxu0 0
    %2031 = vmatprep.subr.bf16.mxu0 0
    %2032 = vmatpush2.bf16.msra.mxu0 0
    %2033 = vmatprep.subr.bf16.mxu0 0
    %2034 = vmatpush2.bf16.msra.mxu0 0
    %2035 = vmatprep.subr.bf16.mxu0 0
    %2036 = vmatpush2.bf16.msra.mxu0 0
    %2037 = vmatprep.subr.bf16.mxu0 0
    %2038 = vmatpush2.bf16.msra.mxu0 0
    %2039 = vmatprep.subr.bf16.mxu0 0
    %2040 = vmatpush2.bf16.msra.mxu0 0
    %2041 = vmatprep.subr.bf16.mxu0 0
    %2042 = vmatpush2.bf16.msra.mxu0 0
    %2043 = vmatprep.subr.bf16.mxu0 0
    %2044 = vmatpush2.bf16.msra.mxu0 0
    %2045 = vmatprep.mubr.bf16.mxu0 0
    %2046 = vmatmul.mubr.bf16.gmra.mxu0 %v1820
    %v2047 = vpop.f32.mrf.mxu0
    %v2048 = vadd.f32 0.0, %v2047
    %v2049 = vpop.f32.mrf.mxu0
    %v2050 = vadd.f32 0.0, %v2049
    %v2051 = vpop.f32.mrf.mxu0
    %v2052 = vpop.f32.mrf.mxu0
    %2053 = vdwg.mxu0
    %2054 = vmatprep.subr.bf16.mxu0 %v1980
    %2055 = vmatpush1.bf16.msra.mxu0 %v1979
    %2056 = vmatprep.subr.bf16.mxu0 %v1976
    %2057 = vmatpush1.bf16.msra.mxu0 %v1975
    %2058 = vmatprep.subr.bf16.mxu0 %v1972
    %2059 = vmatpush1.bf16.msra.mxu0 %v1971
    %2060 = vmatprep.subr.bf16.mxu0 %v1968
    %2061 = vmatpush1.bf16.msra.mxu0 %v1967
    %2062 = vmatprep.subr.bf16.mxu0 %v1964
    %2063 = vmatpush1.bf16.msra.mxu0 %v1963
    %2064 = vmatprep.subr.bf16.mxu0 %v1960
    %2065 = vmatpush1.bf16.msra.mxu0 %v1959
    %2066 = vmatprep.subr.bf16.mxu0 %v1956
    %2067 = vmatpush1.bf16.msra.mxu0 %v1955
    %2068 = vmatprep.subr.bf16.mxu0 %v1952
    %2069 = vmatpush1.bf16.msra.mxu0 %v1951
    %2070 = vmatprep.subr.bf16.mxu0 0
    %2071 = vmatpush2.bf16.msra.mxu0 0
    %2072 = vmatprep.subr.bf16.mxu0 0
    %2073 = vmatpush2.bf16.msra.mxu0 0
    %2074 = vmatprep.subr.bf16.mxu0 0
    %2075 = vmatpush2.bf16.msra.mxu0 0
    %2076 = vmatprep.subr.bf16.mxu0 0
    %2077 = vmatpush2.bf16.msra.mxu0 0
    %2078 = vmatprep.subr.bf16.mxu0 0
    %2079 = vmatpush2.bf16.msra.mxu0 0
    %2080 = vmatprep.subr.bf16.mxu0 0
    %2081 = vmatpush2.bf16.msra.mxu0 0
    %2082 = vmatprep.subr.bf16.mxu0 0
    %2083 = vmatpush2.bf16.msra.mxu0 0
    %2084 = vmatprep.subr.bf16.mxu0 0
    %2085 = vmatpush2.bf16.msra.mxu0 0
    %2086 = vmatprep.mubr.bf16.mxu0 0
    %2087 = vmatmul.mubr.bf16.gmra.mxu0 %v1820
    %v2088 = vpop.f32.mrf.mxu0
    %v2089 = vadd.f32 0.0, %v2088
    %v2090 = vpop.f32.mrf.mxu0
    %v2091 = vadd.f32 0.0, %v2090
    %v2092 = vpop.f32.mrf.mxu0
    %v2093 = vpop.f32.mrf.mxu0
    %2094 = vdwg.mxu0
    %v2095 = vadd.f32 %v1816, %v2048
    %v2096 = vadd.f32 %v1817, %v2050
    %v2097 = vadd.f32 %v1818, %v2089
    %v2098 = vadd.f32 %v1819, %v2091
    %v2099 = vmul.f32 %v2095, 0.5
    %v2100 = vmul.f32 %v2096, 0.5
    %v2101 = vmul.f32 %v2097, 0.5
    %v2102 = vtanh.pop %v2099
    %v2103 = vtanh.pop %v2100
    %v2104 = vtanh.pop %v2101
    %v2105 = vmul.f32 %v2102, 0.5
    %v2106 = vmul.f32 %v2103, 0.5
    %v2107 = vmul.f32 %v2104, 0.5
    %v2108 = vadd.f32 %v2105, 0.5
    %v2109 = vadd.f32 %v2106, 0.5
    %v2110 = vadd.f32 %v2107, 0.5
    %v2111 = vtanh.pop %v2098
    %v2112 = vmul.f32 %v2109, %v1811
    %v2113 = vmul.f32 %v2108, %v2111
    %v2114 = vadd.f32 %v2112, %v2113
    %v2115 = vtanh.pop %v2114
    %v2116 = vmul.f32 %v2110, %v2115
    %2117 = vst.msk [vmem:[#allocation4 + $0x20] sm:$0xff] %vm903, %v2116
    %2118 = vst.msk [vmem:[#allocation4 + $0x18] sm:$0xff] %vm905, %v2116
    %v2119 = vld [vmem:[#allocation3 + $0xa0] sm:$0xff]
    %v2120 = vld [vmem:[#allocation3 + $0xa8] sm:$0xff]
    %v2121 = vld [vmem:[#allocation3 + $0xb0] sm:$0xff]
    %v2122 = vld [vmem:[#allocation3 + $0xb8] sm:$0xff]
    %v2123 = vpack.c.bf16 %v2116, %v2116
    %v2124 = vld [vmem:[#allocation8 + $0x100] sm:$0xff]
    %v2125 = vld [vmem:[#allocation8 + $0x108] sm:$0xff]
    %v2126 = vld [vmem:[#allocation8 + $0x110] sm:$0xff]
    %v2127 = vld [vmem:[#allocation8 + $0x118] sm:$0xff]
    %v2128 = vld [vmem:[#allocation8 + $0x120] sm:$0xff]
    %v2129 = vld [vmem:[#allocation8 + $0x128] sm:$0xff]
    %v2130 = vld [vmem:[#allocation8 + $0x130] sm:$0xff]
    %v2131 = vld [vmem:[#allocation8 + $0x138] sm:$0xff]
    %v2132 = vld [vmem:[#allocation8 + $0x140] sm:$0xff]
    %v2133 = vld [vmem:[#allocation8 + $0x148] sm:$0xff]
    %v2134 = vld [vmem:[#allocation8 + $0x150] sm:$0xff]
    %v2135 = vld [vmem:[#allocation8 + $0x158] sm:$0xff]
    %v2136 = vld [vmem:[#allocation8 + $0x160] sm:$0xff]
    %v2137 = vld [vmem:[#allocation8 + $0x168] sm:$0xff]
    %v2138 = vld [vmem:[#allocation8 + $0x170] sm:$0xff]
    %v2139 = vld [vmem:[#allocation8 + $0x178] sm:$0xff]
    %v2140 = vld [vmem:[#allocation8 + $0x180] sm:$0xff]
    %v2141 = vld [vmem:[#allocation8 + $0x188] sm:$0xff]
    %v2142 = vld [vmem:[#allocation8 + $0x190] sm:$0xff]
    %v2143 = vld [vmem:[#allocation8 + $0x198] sm:$0xff]
    %v2144 = vld [vmem:[#allocation8 + $0x1a0] sm:$0xff]
    %v2145 = vld [vmem:[#allocation8 + $0x1a8] sm:$0xff]
    %v2146 = vld [vmem:[#allocation8 + $0x1b0] sm:$0xff]
    %v2147 = vld [vmem:[#allocation8 + $0x1b8] sm:$0xff]
    %v2148 = vld [vmem:[#allocation8 + $0x1c0] sm:$0xff]
    %v2149 = vld [vmem:[#allocation8 + $0x1c8] sm:$0xff]
    %v2150 = vld [vmem:[#allocation8 + $0x1d0] sm:$0xff]
    %v2151 = vld [vmem:[#allocation8 + $0x1d8] sm:$0xff]
    %v2152 = vld [vmem:[#allocation8 + $0x1e0] sm:$0xff]
    %v2153 = vld [vmem:[#allocation8 + $0x1e8] sm:$0xff]
    %v2154 = vld [vmem:[#allocation8 + $0x1f0] sm:$0xff]
    %v2155 = vld [vmem:[#allocation8 + $0x1f8] sm:$0xff]
    %v2188 = vunpack.c.l.b16 %v2124
    %v2189 = vunpack.c.h.b16 %v2124
    %v2190 = vunpack.c.l.b16 %v2125
    %v2191 = vunpack.c.h.b16 %v2125
    %v2192 = vunpack.c.l.b16 %v2126
    %v2193 = vunpack.c.h.b16 %v2126
    %v2194 = vunpack.c.l.b16 %v2127
    %v2195 = vunpack.c.h.b16 %v2127
    %v2196 = vunpack.c.l.b16 %v2128
    %v2197 = vunpack.c.h.b16 %v2128
    %v2198 = vunpack.c.l.b16 %v2129
    %v2199 = vunpack.c.h.b16 %v2129
    %v2200 = vunpack.c.l.b16 %v2130
    %v2201 = vunpack.c.h.b16 %v2130
    %v2202 = vunpack.c.l.b16 %v2131
    %v2203 = vunpack.c.h.b16 %v2131
    %v2204 = vunpack.c.l.b16 %v2132
    %v2205 = vunpack.c.h.b16 %v2132
    %v2206 = vunpack.c.l.b16 %v2133
    %v2207 = vunpack.c.h.b16 %v2133
    %v2208 = vunpack.c.l.b16 %v2134
    %v2209 = vunpack.c.h.b16 %v2134
    %v2210 = vunpack.c.l.b16 %v2135
    %v2211 = vunpack.c.h.b16 %v2135
    %v2212 = vunpack.c.l.b16 %v2136
    %v2213 = vunpack.c.h.b16 %v2136
    %v2214 = vunpack.c.l.b16 %v2137
    %v2215 = vunpack.c.h.b16 %v2137
    %v2216 = vunpack.c.l.b16 %v2138
    %v2217 = vunpack.c.h.b16 %v2138
    %v2218 = vunpack.c.l.b16 %v2139
    %v2219 = vunpack.c.h.b16 %v2139
    %v2220 = vunpack.c.l.b16 %v2140
    %v2221 = vunpack.c.h.b16 %v2140
    %v2222 = vunpack.c.l.b16 %v2141
    %v2223 = vunpack.c.h.b16 %v2141
    %v2224 = vunpack.c.l.b16 %v2142
    %v2225 = vunpack.c.h.b16 %v2142
    %v2226 = vunpack.c.l.b16 %v2143
    %v2227 = vunpack.c.h.b16 %v2143
    %v2228 = vunpack.c.l.b16 %v2144
    %v2229 = vunpack.c.h.b16 %v2144
    %v2230 = vunpack.c.l.b16 %v2145
    %v2231 = vunpack.c.h.b16 %v2145
    %v2232 = vunpack.c.l.b16 %v2146
    %v2233 = vunpack.c.h.b16 %v2146
    %v2234 = vunpack.c.l.b16 %v2147
    %v2235 = vunpack.c.h.b16 %v2147
    %v2236 = vunpack.c.l.b16 %v2148
    %v2237 = vunpack.c.h.b16 %v2148
    %v2238 = vunpack.c.l.b16 %v2149
    %v2239 = vunpack.c.h.b16 %v2149
    %v2240 = vunpack.c.l.b16 %v2150
    %v2241 = vunpack.c.h.b16 %v2150
    %v2242 = vunpack.c.l.b16 %v2151
    %v2243 = vunpack.c.h.b16 %v2151
    %v2244 = vunpack.c.l.b16 %v2152
    %v2245 = vunpack.c.h.b16 %v2152
    %v2246 = vunpack.c.l.b16 %v2153
    %v2247 = vunpack.c.h.b16 %v2153
    %v2248 = vunpack.c.l.b16 %v2154
    %v2249 = vunpack.c.h.b16 %v2154
    %v2250 = vunpack.c.l.b16 %v2155
    %v2251 = vunpack.c.h.b16 %v2155
    %v2252 = vpack.c.b16 %v2192, %v2188
    %v2253 = vpack.c.b16 %v2193, %v2189
    %v2254 = vpack.c.b16 %v2194, %v2190
    %v2255 = vpack.c.b16 %v2195, %v2191
    %v2256 = vpack.c.b16 %v2200, %v2196
    %v2257 = vpack.c.b16 %v2201, %v2197
    %v2258 = vpack.c.b16 %v2202, %v2198
    %v2259 = vpack.c.b16 %v2203, %v2199
    %v2260 = vpack.c.b16 %v2208, %v2204
    %v2261 = vpack.c.b16 %v2209, %v2205
    %v2262 = vpack.c.b16 %v2210, %v2206
    %v2263 = vpack.c.b16 %v2211, %v2207
    %v2264 = vpack.c.b16 %v2216, %v2212
    %v2265 = vpack.c.b16 %v2217, %v2213
    %v2266 = vpack.c.b16 %v2218, %v2214
    %v2267 = vpack.c.b16 %v2219, %v2215
    %v2268 = vpack.c.b16 %v2224, %v2220
    %v2269 = vpack.c.b16 %v2225, %v2221
    %v2270 = vpack.c.b16 %v2226, %v2222
    %v2271 = vpack.c.b16 %v2227, %v2223
    %v2272 = vpack.c.b16 %v2232, %v2228
    %v2273 = vpack.c.b16 %v2233, %v2229
    %v2274 = vpack.c.b16 %v2234, %v2230
    %v2275 = vpack.c.b16 %v2235, %v2231
    %v2276 = vpack.c.b16 %v2240, %v2236
    %v2277 = vpack.c.b16 %v2241, %v2237
    %v2278 = vpack.c.b16 %v2242, %v2238
    %v2279 = vpack.c.b16 %v2243, %v2239
    %v2280 = vpack.c.b16 %v2248, %v2244
    %v2281 = vpack.c.b16 %v2249, %v2245
    %v2282 = vpack.c.b16 %v2250, %v2246
    %v2283 = vpack.c.b16 %v2251, %v2247
    %2316 = vmatprep.subr.bf16.mxu0 %v2281
    %2317 = vmatpush1.bf16.msra.mxu0 %v2280
    %2318 = vmatprep.subr.bf16.mxu0 %v2277
    %2319 = vmatpush1.bf16.msra.mxu0 %v2276
    %2320 = vmatprep.subr.bf16.mxu0 %v2273
    %2321 = vmatpush1.bf16.msra.mxu0 %v2272
    %2322 = vmatprep.subr.bf16.mxu0 %v2269
    %2323 = vmatpush1.bf16.msra.mxu0 %v2268
    %2324 = vmatprep.subr.bf16.mxu0 %v2265
    %2325 = vmatpush1.bf16.msra.mxu0 %v2264
    %2326 = vmatprep.subr.bf16.mxu0 %v2261
    %2327 = vmatpush1.bf16.msra.mxu0 %v2260
    %2328 = vmatprep.subr.bf16.mxu0 %v2257
    %2329 = vmatpush1.bf16.msra.mxu0 %v2256
    %2330 = vmatprep.subr.bf16.mxu0 %v2253
    %2331 = vmatpush1.bf16.msra.mxu0 %v2252
    %2332 = vmatprep.subr.bf16.mxu0 0
    %2333 = vmatpush2.bf16.msra.mxu0 0
    %2334 = vmatprep.subr.bf16.mxu0 0
    %2335 = vmatpush2.bf16.msra.mxu0 0
    %2336 = vmatprep.subr.bf16.mxu0 0
    %2337 = vmatpush2.bf16.msra.mxu0 0
    %2338 = vmatprep.subr.bf16.mxu0 0
    %2339 = vmatpush2.bf16.msra.mxu0 0
    %2340 = vmatprep.subr.bf16.mxu0 0
    %2341 = vmatpush2.bf16.msra.mxu0 0
    %2342 = vmatprep.subr.bf16.mxu0 0
    %2343 = vmatpush2.bf16.msra.mxu0 0
    %2344 = vmatprep.subr.bf16.mxu0 0
    %2345 = vmatpush2.bf16.msra.mxu0 0
    %2346 = vmatprep.subr.bf16.mxu0 0
    %2347 = vmatpush2.bf16.msra.mxu0 0
    %2348 = vmatprep.mubr.bf16.mxu0 0
    %2349 = vmatmul.mubr.bf16.gmra.mxu0 %v2123
    %v2350 = vpop.f32.mrf.mxu0
    %v2351 = vadd.f32 0.0, %v2350
    %v2352 = vpop.f32.mrf.mxu0
    %v2353 = vadd.f32 0.0, %v2352
    %v2354 = vpop.f32.mrf.mxu0
    %v2355 = vpop.f32.mrf.mxu0
    %2356 = vdwg.mxu0
    %2357 = vmatprep.subr.bf16.mxu0 %v2283
    %2358 = vmatpush1.bf16.msra.mxu0 %v2282
    %2359 = vmatprep.subr.bf16.mxu0 %v2279
    %2360 = vmatpush1.bf16.msra.mxu0 %v2278
    %2361 = vmatprep.subr.bf16.mxu0 %v2275
    %2362 = vmatpush1.bf16.msra.mxu0 %v2274
    %2363 = vmatprep.subr.bf16.mxu0 %v2271
    %2364 = vmatpush1.bf16.msra.mxu0 %v2270
    %2365 = vmatprep.subr.bf16.mxu0 %v2267
    %2366 = vmatpush1.bf16.msra.mxu0 %v2266
    %2367 = vmatprep.subr.bf16.mxu0 %v2263
    %2368 = vmatpush1.bf16.msra.mxu0 %v2262
    %2369 = vmatprep.subr.bf16.mxu0 %v2259
    %2370 = vmatpush1.bf16.msra.mxu0 %v2258
    %2371 = vmatprep.subr.bf16.mxu0 %v2255
    %2372 = vmatpush1.bf16.msra.mxu0 %v2254
    %2373 = vmatprep.subr.bf16.mxu0 0
    %2374 = vmatpush2.bf16.msra.mxu0 0
    %2375 = vmatprep.subr.bf16.mxu0 0
    %2376 = vmatpush2.bf16.msra.mxu0 0
    %2377 = vmatprep.subr.bf16.mxu0 0
    %2378 = vmatpush2.bf16.msra.mxu0 0
    %2379 = vmatprep.subr.bf16.mxu0 0
    %2380 = vmatpush2.bf16.msra.mxu0 0
    %2381 = vmatprep.subr.bf16.mxu0 0
    %2382 = vmatpush2.bf16.msra.mxu0 0
    %2383 = vmatprep.subr.bf16.mxu0 0
    %2384 = vmatpush2.bf16.msra.mxu0 0
    %2385 = vmatprep.subr.bf16.mxu0 0
    %2386 = vmatpush2.bf16.msra.mxu0 0
    %2387 = vmatprep.subr.bf16.mxu0 0
    %2388 = vmatpush2.bf16.msra.mxu0 0
    %2389 = vmatprep.mubr.bf16.mxu0 0
    %2390 = vmatmul.mubr.bf16.gmra.mxu0 %v2123
    %v2391 = vpop.f32.mrf.mxu0
    %v2392 = vadd.f32 0.0, %v2391
    %v2393 = vpop.f32.mrf.mxu0
    %v2394 = vadd.f32 0.0, %v2393
    %v2395 = vpop.f32.mrf.mxu0
    %v2396 = vpop.f32.mrf.mxu0
    %2397 = vdwg.mxu0
    %v2398 = vadd.f32 %v2119, %v2351
    %v2399 = vadd.f32 %v2120, %v2353
    %v2400 = vadd.f32 %v2121, %v2392
    %v2401 = vadd.f32 %v2122, %v2394
    %v2402 = vmul.f32 %v2398, 0.5
    %v2403 = vmul.f32 %v2399, 0.5
    %v2404 = vmul.f32 %v2400, 0.5
    %v2405 = vtanh.pop %v2402
    %v2406 = vtanh.pop %v2403
    %v2407 = vtanh.pop %v2404
    %v2408 = vmul.f32 %v2405, 0.5
    %v2409 = vmul.f32 %v2406, 0.5
    %v2410 = vmul.f32 %v2407, 0.5
    %v2411 = vadd.f32 %v2408, 0.5
    %v2412 = vadd.f32 %v2409, 0.5
    %v2413 = vadd.f32 %v2410, 0.5
    %v2414 = vtanh.pop %v2401
    %v2415 = vmul.f32 %v2412, %v2114
    %v2416 = vmul.f32 %v2411, %v2414
    %v2417 = vadd.f32 %v2415, %v2416
    %v2418 = vtanh.pop %v2417
    %v2419 = vmul.f32 %v2413, %v2418
    %2420 = vst.msk [vmem:[#allocation4 + $0x28] sm:$0xff] %vm903, %v2419
    %2421 = vst.msk [vmem:[#allocation4 + $0x10] sm:$0xff] %vm905, %v2419
    %v2422 = vld [vmem:[#allocation3 + $0xc0] sm:$0xff]
    %v2423 = vld [vmem:[#allocation3 + $0xc8] sm:$0xff]
    %v2424 = vld [vmem:[#allocation3 + $0xd0] sm:$0xff]
    %v2425 = vld [vmem:[#allocation3 + $0xd8] sm:$0xff]
    %v2426 = vpack.c.bf16 %v2419, %v2419
    %v2427 = vld [vmem:[#allocation8 + $0x100] sm:$0xff]
    %v2428 = vld [vmem:[#allocation8 + $0x108] sm:$0xff]
    %v2429 = vld [vmem:[#allocation8 + $0x110] sm:$0xff]
    %v2430 = vld [vmem:[#allocation8 + $0x118] sm:$0xff]
    %v2431 = vld [vmem:[#allocation8 + $0x120] sm:$0xff]
    %v2432 = vld [vmem:[#allocation8 + $0x128] sm:$0xff]
    %v2433 = vld [vmem:[#allocation8 + $0x130] sm:$0xff]
    %v2434 = vld [vmem:[#allocation8 + $0x138] sm:$0xff]
    %v2435 = vld [vmem:[#allocation8 + $0x140] sm:$0xff]
    %v2436 = vld [vmem:[#allocation8 + $0x148] sm:$0xff]
    %v2437 = vld [vmem:[#allocation8 + $0x150] sm:$0xff]
    %v2438 = vld [vmem:[#allocation8 + $0x158] sm:$0xff]
    %v2439 = vld [vmem:[#allocation8 + $0x160] sm:$0xff]
    %v2440 = vld [vmem:[#allocation8 + $0x168] sm:$0xff]
    %v2441 = vld [vmem:[#allocation8 + $0x170] sm:$0xff]
    %v2442 = vld [vmem:[#allocation8 + $0x178] sm:$0xff]
    %v2443 = vld [vmem:[#allocation8 + $0x180] sm:$0xff]
    %v2444 = vld [vmem:[#allocation8 + $0x188] sm:$0xff]
    %v2445 = vld [vmem:[#allocation8 + $0x190] sm:$0xff]
    %v2446 = vld [vmem:[#allocation8 + $0x198] sm:$0xff]
    %v2447 = vld [vmem:[#allocation8 + $0x1a0] sm:$0xff]
    %v2448 = vld [vmem:[#allocation8 + $0x1a8] sm:$0xff]
    %v2449 = vld [vmem:[#allocation8 + $0x1b0] sm:$0xff]
    %v2450 = vld [vmem:[#allocation8 + $0x1b8] sm:$0xff]
    %v2451 = vld [vmem:[#allocation8 + $0x1c0] sm:$0xff]
    %v2452 = vld [vmem:[#allocation8 + $0x1c8] sm:$0xff]
    %v2453 = vld [vmem:[#allocation8 + $0x1d0] sm:$0xff]
    %v2454 = vld [vmem:[#allocation8 + $0x1d8] sm:$0xff]
    %v2455 = vld [vmem:[#allocation8 + $0x1e0] sm:$0xff]
    %v2456 = vld [vmem:[#allocation8 + $0x1e8] sm:$0xff]
    %v2457 = vld [vmem:[#allocation8 + $0x1f0] sm:$0xff]
    %v2458 = vld [vmem:[#allocation8 + $0x1f8] sm:$0xff]
    %v2491 = vunpack.c.l.b16 %v2427
    %v2492 = vunpack.c.h.b16 %v2427
    %v2493 = vunpack.c.l.b16 %v2428
    %v2494 = vunpack.c.h.b16 %v2428
    %v2495 = vunpack.c.l.b16 %v2429
    %v2496 = vunpack.c.h.b16 %v2429
    %v2497 = vunpack.c.l.b16 %v2430
    %v2498 = vunpack.c.h.b16 %v2430
    %v2499 = vunpack.c.l.b16 %v2431
    %v2500 = vunpack.c.h.b16 %v2431
    %v2501 = vunpack.c.l.b16 %v2432
    %v2502 = vunpack.c.h.b16 %v2432
    %v2503 = vunpack.c.l.b16 %v2433
    %v2504 = vunpack.c.h.b16 %v2433
    %v2505 = vunpack.c.l.b16 %v2434
    %v2506 = vunpack.c.h.b16 %v2434
    %v2507 = vunpack.c.l.b16 %v2435
    %v2508 = vunpack.c.h.b16 %v2435
    %v2509 = vunpack.c.l.b16 %v2436
    %v2510 = vunpack.c.h.b16 %v2436
    %v2511 = vunpack.c.l.b16 %v2437
    %v2512 = vunpack.c.h.b16 %v2437
    %v2513 = vunpack.c.l.b16 %v2438
    %v2514 = vunpack.c.h.b16 %v2438
    %v2515 = vunpack.c.l.b16 %v2439
    %v2516 = vunpack.c.h.b16 %v2439
    %v2517 = vunpack.c.l.b16 %v2440
    %v2518 = vunpack.c.h.b16 %v2440
    %v2519 = vunpack.c.l.b16 %v2441
    %v2520 = vunpack.c.h.b16 %v2441
    %v2521 = vunpack.c.l.b16 %v2442
    %v2522 = vunpack.c.h.b16 %v2442
    %v2523 = vunpack.c.l.b16 %v2443
    %v2524 = vunpack.c.h.b16 %v2443
    %v2525 = vunpack.c.l.b16 %v2444
    %v2526 = vunpack.c.h.b16 %v2444
    %v2527 = vunpack.c.l.b16 %v2445
    %v2528 = vunpack.c.h.b16 %v2445
    %v2529 = vunpack.c.l.b16 %v2446
    %v2530 = vunpack.c.h.b16 %v2446
    %v2531 = vunpack.c.l.b16 %v2447
    %v2532 = vunpack.c.h.b16 %v2447
    %v2533 = vunpack.c.l.b16 %v2448
    %v2534 = vunpack.c.h.b16 %v2448
    %v2535 = vunpack.c.l.b16 %v2449
    %v2536 = vunpack.c.h.b16 %v2449
    %v2537 = vunpack.c.l.b16 %v2450
    %v2538 = vunpack.c.h.b16 %v2450
    %v2539 = vunpack.c.l.b16 %v2451
    %v2540 = vunpack.c.h.b16 %v2451
    %v2541 = vunpack.c.l.b16 %v2452
    %v2542 = vunpack.c.h.b16 %v2452
    %v2543 = vunpack.c.l.b16 %v2453
    %v2544 = vunpack.c.h.b16 %v2453
    %v2545 = vunpack.c.l.b16 %v2454
    %v2546 = vunpack.c.h.b16 %v2454
    %v2547 = vunpack.c.l.b16 %v2455
    %v2548 = vunpack.c.h.b16 %v2455
    %v2549 = vunpack.c.l.b16 %v2456
    %v2550 = vunpack.c.h.b16 %v2456
    %v2551 = vunpack.c.l.b16 %v2457
    %v2552 = vunpack.c.h.b16 %v2457
    %v2553 = vunpack.c.l.b16 %v2458
    %v2554 = vunpack.c.h.b16 %v2458
    %v2555 = vpack.c.b16 %v2495, %v2491
    %v2556 = vpack.c.b16 %v2496, %v2492
    %v2557 = vpack.c.b16 %v2497, %v2493
    %v2558 = vpack.c.b16 %v2498, %v2494
    %v2559 = vpack.c.b16 %v2503, %v2499
    %v2560 = vpack.c.b16 %v2504, %v2500
    %v2561 = vpack.c.b16 %v2505, %v2501
    %v2562 = vpack.c.b16 %v2506, %v2502
    %v2563 = vpack.c.b16 %v2511, %v2507
    %v2564 = vpack.c.b16 %v2512, %v2508
    %v2565 = vpack.c.b16 %v2513, %v2509
    %v2566 = vpack.c.b16 %v2514, %v2510
    %v2567 = vpack.c.b16 %v2519, %v2515
    %v2568 = vpack.c.b16 %v2520, %v2516
    %v2569 = vpack.c.b16 %v2521, %v2517
    %v2570 = vpack.c.b16 %v2522, %v2518
    %v2571 = vpack.c.b16 %v2527, %v2523
    %v2572 = vpack.c.b16 %v2528, %v2524
    %v2573 = vpack.c.b16 %v2529, %v2525
    %v2574 = vpack.c.b16 %v2530, %v2526
    %v2575 = vpack.c.b16 %v2535, %v2531
    %v2576 = vpack.c.b16 %v2536, %v2532
    %v2577 = vpack.c.b16 %v2537, %v2533
    %v2578 = vpack.c.b16 %v2538, %v2534
    %v2579 = vpack.c.b16 %v2543, %v2539
    %v2580 = vpack.c.b16 %v2544, %v2540
    %v2581 = vpack.c.b16 %v2545, %v2541
    %v2582 = vpack.c.b16 %v2546, %v2542
    %v2583 = vpack.c.b16 %v2551, %v2547
    %v2584 = vpack.c.b16 %v2552, %v2548
    %v2585 = vpack.c.b16 %v2553, %v2549
    %v2586 = vpack.c.b16 %v2554, %v2550
    %2619 = vmatprep.subr.bf16.mxu0 %v2584
    %2620 = vmatpush1.bf16.msra.mxu0 %v2583
    %2621 = vmatprep.subr.bf16.mxu0 %v2580
    %2622 = vmatpush1.bf16.msra.mxu0 %v2579
    %2623 = vmatprep.subr.bf16.mxu0 %v2576
    %2624 = vmatpush1.bf16.msra.mxu0 %v2575
    %2625 = vmatprep.subr.bf16.mxu0 %v2572
    %2626 = vmatpush1.bf16.msra.mxu0 %v2571
    %2627 = vmatprep.subr.bf16.mxu0 %v2568
    %2628 = vmatpush1.bf16.msra.mxu0 %v2567
    %2629 = vmatprep.subr.bf16.mxu0 %v2564
    %2630 = vmatpush1.bf16.msra.mxu0 %v2563
    %2631 = vmatprep.subr.bf16.mxu0 %v2560
    %2632 = vmatpush1.bf16.msra.mxu0 %v2559
    %2633 = vmatprep.subr.bf16.mxu0 %v2556
    %2634 = vmatpush1.bf16.msra.mxu0 %v2555
    %2635 = vmatprep.subr.bf16.mxu0 0
    %2636 = vmatpush2.bf16.msra.mxu0 0
    %2637 = vmatprep.subr.bf16.mxu0 0
    %2638 = vmatpush2.bf16.msra.mxu0 0
    %2639 = vmatprep.subr.bf16.mxu0 0
    %2640 = vmatpush2.bf16.msra.mxu0 0
    %2641 = vmatprep.subr.bf16.mxu0 0
    %2642 = vmatpush2.bf16.msra.mxu0 0
    %2643 = vmatprep.subr.bf16.mxu0 0
    %2644 = vmatpush2.bf16.msra.mxu0 0
    %2645 = vmatprep.subr.bf16.mxu0 0
    %2646 = vmatpush2.bf16.msra.mxu0 0
    %2647 = vmatprep.subr.bf16.mxu0 0
    %2648 = vmatpush2.bf16.msra.mxu0 0
    %2649 = vmatprep.subr.bf16.mxu0 0
    %2650 = vmatpush2.bf16.msra.mxu0 0
    %2651 = vmatprep.mubr.bf16.mxu0 0
    %2652 = vmatmul.mubr.bf16.gmra.mxu0 %v2426
    %v2653 = vpop.f32.mrf.mxu0
    %v2654 = vadd.f32 0.0, %v2653
    %v2655 = vpop.f32.mrf.mxu0
    %v2656 = vadd.f32 0.0, %v2655
    %v2657 = vpop.f32.mrf.mxu0
    %v2658 = vpop.f32.mrf.mxu0
    %2659 = vdwg.mxu0
    %2660 = vmatprep.subr.bf16.mxu0 %v2586
    %2661 = vmatpush1.bf16.msra.mxu0 %v2585
    %2662 = vmatprep.subr.bf16.mxu0 %v2582
    %2663 = vmatpush1.bf16.msra.mxu0 %v2581
    %2664 = vmatprep.subr.bf16.mxu0 %v2578
    %2665 = vmatpush1.bf16.msra.mxu0 %v2577
    %2666 = vmatprep.subr.bf16.mxu0 %v2574
    %2667 = vmatpush1.bf16.msra.mxu0 %v2573
    %2668 = vmatprep.subr.bf16.mxu0 %v2570
    %2669 = vmatpush1.bf16.msra.mxu0 %v2569
    %2670 = vmatprep.subr.bf16.mxu0 %v2566
    %2671 = vmatpush1.bf16.msra.mxu0 %v2565
    %2672 = vmatprep.subr.bf16.mxu0 %v2562
    %2673 = vmatpush1.bf16.msra.mxu0 %v2561
    %2674 = vmatprep.subr.bf16.mxu0 %v2558
    %2675 = vmatpush1.bf16.msra.mxu0 %v2557
    %2676 = vmatprep.subr.bf16.mxu0 0
    %2677 = vmatpush2.bf16.msra.mxu0 0
    %2678 = vmatprep.subr.bf16.mxu0 0
    %2679 = vmatpush2.bf16.msra.mxu0 0
    %2680 = vmatprep.subr.bf16.mxu0 0
    %2681 = vmatpush2.bf16.msra.mxu0 0
    %2682 = vmatprep.subr.bf16.mxu0 0
    %2683 = vmatpush2.bf16.msra.mxu0 0
    %2684 = vmatprep.subr.bf16.mxu0 0
    %2685 = vmatpush2.bf16.msra.mxu0 0
    %2686 = vmatprep.subr.bf16.mxu0 0
    %2687 = vmatpush2.bf16.msra.mxu0 0
    %2688 = vmatprep.subr.bf16.mxu0 0
    %2689 = vmatpush2.bf16.msra.mxu0 0
    %2690 = vmatprep.subr.bf16.mxu0 0
    %2691 = vmatpush2.bf16.msra.mxu0 0
    %2692 = vmatprep.mubr.bf16.mxu0 0
    %2693 = vmatmul.mubr.bf16.gmra.mxu0 %v2426
    %v2694 = vpop.f32.mrf.mxu0
    %v2695 = vadd.f32 0.0, %v2694
    %v2696 = vpop.f32.mrf.mxu0
    %v2697 = vadd.f32 0.0, %v2696
    %v2698 = vpop.f32.mrf.mxu0
    %v2699 = vpop.f32.mrf.mxu0
    %2700 = vdwg.mxu0
    %v2701 = vadd.f32 %v2422, %v2654
    %v2702 = vadd.f32 %v2423, %v2656
    %v2703 = vadd.f32 %v2424, %v2695
    %v2704 = vadd.f32 %v2425, %v2697
    %v2705 = vmul.f32 %v2701, 0.5
    %v2706 = vmul.f32 %v2702, 0.5
    %v2707 = vmul.f32 %v2703, 0.5
    %v2708 = vtanh.pop %v2705
    %v2709 = vtanh.pop %v2706
    %v2710 = vtanh.pop %v2707
    %v2711 = vmul.f32 %v2708, 0.5
    %v2712 = vmul.f32 %v2709, 0.5
    %v2713 = vmul.f32 %v2710, 0.5
    %v2714 = vadd.f32 %v2711, 0.5
    %v2715 = vadd.f32 %v2712, 0.5
    %v2716 = vadd.f32 %v2713, 0.5
    %v2717 = vtanh.pop %v2704
    %v2718 = vmul.f32 %v2715, %v2417
    %v2719 = vmul.f32 %v2714, %v2717
    %v2720 = vadd.f32 %v2718, %v2719
    %v2721 = vtanh.pop %v2720
    %v2722 = vmul.f32 %v2716, %v2721
    %2723 = vst.msk [vmem:[#allocation4 + $0x30] sm:$0xff] %vm903, %v2722
    %2724 = vst.msk [vmem:[#allocation4 + $0x8] sm:$0xff] %vm905, %v2722
    %v2725 = vld [vmem:[#allocation3 + $0xe0] sm:$0xff]
    %v2726 = vld [vmem:[#allocation3 + $0xe8] sm:$0xff]
    %v2727 = vld [vmem:[#allocation3 + $0xf0] sm:$0xff]
    %v2728 = vld [vmem:[#allocation3 + $0xf8] sm:$0xff]
    %v2729 = vpack.c.bf16 %v2722, %v2722
    %v2730 = vld [vmem:[#allocation8 + $0x100] sm:$0xff]
    %v2731 = vld [vmem:[#allocation8 + $0x108] sm:$0xff]
    %v2732 = vld [vmem:[#allocation8 + $0x110] sm:$0xff]
    %v2733 = vld [vmem:[#allocation8 + $0x118] sm:$0xff]
    %v2734 = vld [vmem:[#allocation8 + $0x120] sm:$0xff]
    %v2735 = vld [vmem:[#allocation8 + $0x128] sm:$0xff]
    %v2736 = vld [vmem:[#allocation8 + $0x130] sm:$0xff]
    %v2737 = vld [vmem:[#allocation8 + $0x138] sm:$0xff]
    %v2738 = vld [vmem:[#allocation8 + $0x140] sm:$0xff]
    %v2739 = vld [vmem:[#allocation8 + $0x148] sm:$0xff]
    %v2740 = vld [vmem:[#allocation8 + $0x150] sm:$0xff]
    %v2741 = vld [vmem:[#allocation8 + $0x158] sm:$0xff]
    %v2742 = vld [vmem:[#allocation8 + $0x160] sm:$0xff]
    %v2743 = vld [vmem:[#allocation8 + $0x168] sm:$0xff]
    %v2744 = vld [vmem:[#allocation8 + $0x170] sm:$0xff]
    %v2745 = vld [vmem:[#allocation8 + $0x178] sm:$0xff]
    %v2746 = vld [vmem:[#allocation8 + $0x180] sm:$0xff]
    %v2747 = vld [vmem:[#allocation8 + $0x188] sm:$0xff]
    %v2748 = vld [vmem:[#allocation8 + $0x190] sm:$0xff]
    %v2749 = vld [vmem:[#allocation8 + $0x198] sm:$0xff]
    %v2750 = vld [vmem:[#allocation8 + $0x1a0] sm:$0xff]
    %v2751 = vld [vmem:[#allocation8 + $0x1a8] sm:$0xff]
    %v2752 = vld [vmem:[#allocation8 + $0x1b0] sm:$0xff]
    %v2753 = vld [vmem:[#allocation8 + $0x1b8] sm:$0xff]
    %v2754 = vld [vmem:[#allocation8 + $0x1c0] sm:$0xff]
    %v2755 = vld [vmem:[#allocation8 + $0x1c8] sm:$0xff]
    %v2756 = vld [vmem:[#allocation8 + $0x1d0] sm:$0xff]
    %v2757 = vld [vmem:[#allocation8 + $0x1d8] sm:$0xff]
    %v2758 = vld [vmem:[#allocation8 + $0x1e0] sm:$0xff]
    %v2759 = vld [vmem:[#allocation8 + $0x1e8] sm:$0xff]
    %v2760 = vld [vmem:[#allocation8 + $0x1f0] sm:$0xff]
    %v2761 = vld [vmem:[#allocation8 + $0x1f8] sm:$0xff]
    %v2794 = vunpack.c.l.b16 %v2730
    %v2795 = vunpack.c.h.b16 %v2730
    %v2796 = vunpack.c.l.b16 %v2731
    %v2797 = vunpack.c.h.b16 %v2731
    %v2798 = vunpack.c.l.b16 %v2732
    %v2799 = vunpack.c.h.b16 %v2732
    %v2800 = vunpack.c.l.b16 %v2733
    %v2801 = vunpack.c.h.b16 %v2733
    %v2802 = vunpack.c.l.b16 %v2734
    %v2803 = vunpack.c.h.b16 %v2734
    %v2804 = vunpack.c.l.b16 %v2735
    %v2805 = vunpack.c.h.b16 %v2735
    %v2806 = vunpack.c.l.b16 %v2736
    %v2807 = vunpack.c.h.b16 %v2736
    %v2808 = vunpack.c.l.b16 %v2737
    %v2809 = vunpack.c.h.b16 %v2737
    %v2810 = vunpack.c.l.b16 %v2738
    %v2811 = vunpack.c.h.b16 %v2738
    %v2812 = vunpack.c.l.b16 %v2739
    %v2813 = vunpack.c.h.b16 %v2739
    %v2814 = vunpack.c.l.b16 %v2740
    %v2815 = vunpack.c.h.b16 %v2740
    %v2816 = vunpack.c.l.b16 %v2741
    %v2817 = vunpack.c.h.b16 %v2741
    %v2818 = vunpack.c.l.b16 %v2742
    %v2819 = vunpack.c.h.b16 %v2742
    %v2820 = vunpack.c.l.b16 %v2743
    %v2821 = vunpack.c.h.b16 %v2743
    %v2822 = vunpack.c.l.b16 %v2744
    %v2823 = vunpack.c.h.b16 %v2744
    %v2824 = vunpack.c.l.b16 %v2745
    %v2825 = vunpack.c.h.b16 %v2745
    %v2826 = vunpack.c.l.b16 %v2746
    %v2827 = vunpack.c.h.b16 %v2746
    %v2828 = vunpack.c.l.b16 %v2747
    %v2829 = vunpack.c.h.b16 %v2747
    %v2830 = vunpack.c.l.b16 %v2748
    %v2831 = vunpack.c.h.b16 %v2748
    %v2832 = vunpack.c.l.b16 %v2749
    %v2833 = vunpack.c.h.b16 %v2749
    %v2834 = vunpack.c.l.b16 %v2750
    %v2835 = vunpack.c.h.b16 %v2750
    %v2836 = vunpack.c.l.b16 %v2751
    %v2837 = vunpack.c.h.b16 %v2751
    %v2838 = vunpack.c.l.b16 %v2752
    %v2839 = vunpack.c.h.b16 %v2752
    %v2840 = vunpack.c.l.b16 %v2753
    %v2841 = vunpack.c.h.b16 %v2753
    %v2842 = vunpack.c.l.b16 %v2754
    %v2843 = vunpack.c.h.b16 %v2754
    %v2844 = vunpack.c.l.b16 %v2755
    %v2845 = vunpack.c.h.b16 %v2755
    %v2846 = vunpack.c.l.b16 %v2756
    %v2847 = vunpack.c.h.b16 %v2756
    %v2848 = vunpack.c.l.b16 %v2757
    %v2849 = vunpack.c.h.b16 %v2757
    %v2850 = vunpack.c.l.b16 %v2758
    %v2851 = vunpack.c.h.b16 %v2758
    %v2852 = vunpack.c.l.b16 %v2759
    %v2853 = vunpack.c.h.b16 %v2759
    %v2854 = vunpack.c.l.b16 %v2760
    %v2855 = vunpack.c.h.b16 %v2760
    %v2856 = vunpack.c.l.b16 %v2761
    %v2857 = vunpack.c.h.b16 %v2761
    %v2858 = vpack.c.b16 %v2798, %v2794
    %v2859 = vpack.c.b16 %v2799, %v2795
    %v2860 = vpack.c.b16 %v2800, %v2796
    %v2861 = vpack.c.b16 %v2801, %v2797
    %v2862 = vpack.c.b16 %v2806, %v2802
    %v2863 = vpack.c.b16 %v2807, %v2803
    %v2864 = vpack.c.b16 %v2808, %v2804
    %v2865 = vpack.c.b16 %v2809, %v2805
    %v2866 = vpack.c.b16 %v2814, %v2810
    %v2867 = vpack.c.b16 %v2815, %v2811
    %v2868 = vpack.c.b16 %v2816, %v2812
    %v2869 = vpack.c.b16 %v2817, %v2813
    %v2870 = vpack.c.b16 %v2822, %v2818
    %v2871 = vpack.c.b16 %v2823, %v2819
    %v2872 = vpack.c.b16 %v2824, %v2820
    %v2873 = vpack.c.b16 %v2825, %v2821
    %v2874 = vpack.c.b16 %v2830, %v2826
    %v2875 = vpack.c.b16 %v2831, %v2827
    %v2876 = vpack.c.b16 %v2832, %v2828
    %v2877 = vpack.c.b16 %v2833, %v2829
    %v2878 = vpack.c.b16 %v2838, %v2834
    %v2879 = vpack.c.b16 %v2839, %v2835
    %v2880 = vpack.c.b16 %v2840, %v2836
    %v2881 = vpack.c.b16 %v2841, %v2837
    %v2882 = vpack.c.b16 %v2846, %v2842
    %v2883 = vpack.c.b16 %v2847, %v2843
    %v2884 = vpack.c.b16 %v2848, %v2844
    %v2885 = vpack.c.b16 %v2849, %v2845
    %v2886 = vpack.c.b16 %v2854, %v2850
    %v2887 = vpack.c.b16 %v2855, %v2851
    %v2888 = vpack.c.b16 %v2856, %v2852
    %v2889 = vpack.c.b16 %v2857, %v2853
    %2922 = vmatprep.subr.bf16.mxu0 %v2887
    %2923 = vmatpush1.bf16.msra.mxu0 %v2886
    %2924 = vmatprep.subr.bf16.mxu0 %v2883
    %2925 = vmatpush1.bf16.msra.mxu0 %v2882
    %2926 = vmatprep.subr.bf16.mxu0 %v2879
    %2927 = vmatpush1.bf16.msra.mxu0 %v2878
    %2928 = vmatprep.subr.bf16.mxu0 %v2875
    %2929 = vmatpush1.bf16.msra.mxu0 %v2874
    %2930 = vmatprep.subr.bf16.mxu0 %v2871
    %2931 = vmatpush1.bf16.msra.mxu0 %v2870
    %2932 = vmatprep.subr.bf16.mxu0 %v2867
    %2933 = vmatpush1.bf16.msra.mxu0 %v2866
    %2934 = vmatprep.subr.bf16.mxu0 %v2863
    %2935 = vmatpush1.bf16.msra.mxu0 %v2862
    %2936 = vmatprep.subr.bf16.mxu0 %v2859
    %2937 = vmatpush1.bf16.msra.mxu0 %v2858
    %2938 = vmatprep.subr.bf16.mxu0 0
    %2939 = vmatpush2.bf16.msra.mxu0 0
    %2940 = vmatprep.subr.bf16.mxu0 0
    %2941 = vmatpush2.bf16.msra.mxu0 0
    %2942 = vmatprep.subr.bf16.mxu0 0
    %2943 = vmatpush2.bf16.msra.mxu0 0
    %2944 = vmatprep.subr.bf16.mxu0 0
    %2945 = vmatpush2.bf16.msra.mxu0 0
    %2946 = vmatprep.subr.bf16.mxu0 0
    %2947 = vmatpush2.bf16.msra.mxu0 0
    %2948 = vmatprep.subr.bf16.mxu0 0
    %2949 = vmatpush2.bf16.msra.mxu0 0
    %2950 = vmatprep.subr.bf16.mxu0 0
    %2951 = vmatpush2.bf16.msra.mxu0 0
    %2952 = vmatprep.subr.bf16.mxu0 0
    %2953 = vmatpush2.bf16.msra.mxu0 0
    %2954 = vmatprep.mubr.bf16.mxu0 0
    %2955 = vmatmul.mubr.bf16.gmra.mxu0 %v2729
    %v2956 = vpop.f32.mrf.mxu0
    %v2957 = vadd.f32 0.0, %v2956
    %v2958 = vpop.f32.mrf.mxu0
    %v2959 = vadd.f32 0.0, %v2958
    %v2960 = vpop.f32.mrf.mxu0
    %v2961 = vpop.f32.mrf.mxu0
    %2962 = vdwg.mxu0
    %2963 = vmatprep.subr.bf16.mxu0 %v2889
    %2964 = vmatpush1.bf16.msra.mxu0 %v2888
    %2965 = vmatprep.subr.bf16.mxu0 %v2885
    %2966 = vmatpush1.bf16.msra.mxu0 %v2884
    %2967 = vmatprep.subr.bf16.mxu0 %v2881
    %2968 = vmatpush1.bf16.msra.mxu0 %v2880
    %2969 = vmatprep.subr.bf16.mxu0 %v2877
    %2970 = vmatpush1.bf16.msra.mxu0 %v2876
    %2971 = vmatprep.subr.bf16.mxu0 %v2873
    %2972 = vmatpush1.bf16.msra.mxu0 %v2872
    %2973 = vmatprep.subr.bf16.mxu0 %v2869
    %2974 = vmatpush1.bf16.msra.mxu0 %v2868
    %2975 = vmatprep.subr.bf16.mxu0 %v2865
    %2976 = vmatpush1.bf16.msra.mxu0 %v2864
    %2977 = vmatprep.subr.bf16.mxu0 %v2861
    %2978 = vmatpush1.bf16.msra.mxu0 %v2860
    %2979 = vmatprep.subr.bf16.mxu0 0
    %2980 = vmatpush2.bf16.msra.mxu0 0
    %2981 = vmatprep.subr.bf16.mxu0 0
    %2982 = vmatpush2.bf16.msra.mxu0 0
    %2983 = vmatprep.subr.bf16.mxu0 0
    %2984 = vmatpush2.bf16.msra.mxu0 0
    %2985 = vmatprep.subr.bf16.mxu0 0
    %2986 = vmatpush2.bf16.msra.mxu0 0
    %2987 = vmatprep.subr.bf16.mxu0 0
    %2988 = vmatpush2.bf16.msra.mxu0 0
    %2989 = vmatprep.subr.bf16.mxu0 0
    %2990 = vmatpush2.bf16.msra.mxu0 0
    %2991 = vmatprep.subr.bf16.mxu0 0
    %2992 = vmatpush2.bf16.msra.mxu0 0
    %2993 = vmatprep.subr.bf16.mxu0 0
    %2994 = vmatpush2.bf16.msra.mxu0 0
    %2995 = vmatprep.mubr.bf16.mxu0 0
    %2996 = vmatmul.mubr.bf16.gmra.mxu0 %v2729
    %v2997 = vpop.f32.mrf.mxu0
    %v2998 = vadd.f32 0.0, %v2997
    %v2999 = vpop.f32.mrf.mxu0
    %v3000 = vadd.f32 0.0, %v2999
    %v3001 = vpop.f32.mrf.mxu0
    %v3002 = vpop.f32.mrf.mxu0
    %3003 = vdwg.mxu0
    %v3004 = vadd.f32 %v2725, %v2957
    %v3005 = vadd.f32 %v2726, %v2959
    %v3006 = vadd.f32 %v2727, %v2998
    %v3007 = vadd.f32 %v2728, %v3000
    %v3008 = vmul.f32 %v3004, 0.5
    %v3009 = vmul.f32 %v3005, 0.5
    %v3010 = vmul.f32 %v3006, 0.5
    %v3011 = vtanh.pop %v3008
    %v3012 = vtanh.pop %v3009
    %v3013 = vtanh.pop %v3010
    %v3014 = vmul.f32 %v3011, 0.5
    %v3015 = vmul.f32 %v3012, 0.5
    %v3016 = vmul.f32 %v3013, 0.5
    %v3017 = vadd.f32 %v3014, 0.5
    %v3018 = vadd.f32 %v3015, 0.5
    %v3019 = vadd.f32 %v3016, 0.5
    %v3020 = vtanh.pop %v3007
    %v3021 = vmul.f32 %v3018, %v2720
    %v3022 = vmul.f32 %v3017, %v3020
    %v3023 = vadd.f32 %v3021, %v3022
    %v3024 = vtanh.pop %v3023
    %v3025 = vmul.f32 %v3019, %v3024
    %3026 = vst.msk [vmem:[#allocation4 + $0x38] sm:$0xff] %vm903, %v3025
    %3027 = vst.msk [vmem:[#allocation4] sm:$0xff] %vm905, %v3025
    %v3028 = vld [vmem:[#allocation4] sm:$0xff]
    %v3029 = vld [vmem:[#allocation4 + $0x8] sm:$0xff]
    %v3030 = vld [vmem:[#allocation4 + $0x10] sm:$0xff]
    %v3031 = vld [vmem:[#allocation4 + $0x18] sm:$0xff]
    %v3032 = vld [vmem:[#allocation4 + $0x20] sm:$0xff]
    %v3033 = vld [vmem:[#allocation4 + $0x28] sm:$0xff]
    %v3034 = vld [vmem:[#allocation4 + $0x30] sm:$0xff]
    %v3035 = vld [vmem:[#allocation4 + $0x38] sm:$0xff]
    %v3036 = vpack.c.bf16 %v3029, %v3028
    %v3037 = vpack.c.bf16 %v3031, %v3030
    %v3038 = vpack.c.bf16 %v3033, %v3032
    %v3039 = vpack.c.bf16 %v3035, %v3034
    %v3040 = vld [vmem:[#allocation8 + $0x200] sm:$0xff]
    %v3041 = vld [vmem:[#allocation8 + $0x208] sm:$0xff]
    %v3042 = vld [vmem:[#allocation8 + $0x210] sm:$0xff]
    %v3043 = vld [vmem:[#allocation8 + $0x218] sm:$0xff]
    %v3044 = vld [vmem:[#allocation8 + $0x220] sm:$0xff]
    %v3045 = vld [vmem:[#allocation8 + $0x228] sm:$0xff]
    %v3046 = vld [vmem:[#allocation8 + $0x230] sm:$0xff]
    %v3047 = vld [vmem:[#allocation8 + $0x238] sm:$0xff]
    %v3048 = vld [vmem:[#allocation8 + $0x240] sm:$0xff]
    %v3049 = vld [vmem:[#allocation8 + $0x248] sm:$0xff]
    %v3050 = vld [vmem:[#allocation8 + $0x250] sm:$0xff]
    %v3051 = vld [vmem:[#allocation8 + $0x258] sm:$0xff]
    %v3052 = vld [vmem:[#allocation8 + $0x260] sm:$0xff]
    %v3053 = vld [vmem:[#allocation8 + $0x268] sm:$0xff]
    %v3054 = vld [vmem:[#allocation8 + $0x270] sm:$0xff]
    %v3055 = vld [vmem:[#allocation8 + $0x278] sm:$0xff]
    %v3056 = vld [vmem:[#allocation8 + $0x280] sm:$0xff]
    %v3057 = vld [vmem:[#allocation8 + $0x288] sm:$0xff]
    %v3058 = vld [vmem:[#allocation8 + $0x290] sm:$0xff]
    %v3059 = vld [vmem:[#allocation8 + $0x298] sm:$0xff]
    %v3060 = vld [vmem:[#allocation8 + $0x2a0] sm:$0xff]
    %v3061 = vld [vmem:[#allocation8 + $0x2a8] sm:$0xff]
    %v3062 = vld [vmem:[#allocation8 + $0x2b0] sm:$0xff]
    %v3063 = vld [vmem:[#allocation8 + $0x2b8] sm:$0xff]
    %v3064 = vld [vmem:[#allocation8 + $0x2c0] sm:$0xff]
    %v3065 = vld [vmem:[#allocation8 + $0x2c8] sm:$0xff]
    %v3066 = vld [vmem:[#allocation8 + $0x2d0] sm:$0xff]
    %v3067 = vld [vmem:[#allocation8 + $0x2d8] sm:$0xff]
    %v3068 = vld [vmem:[#allocation8 + $0x2e0] sm:$0xff]
    %v3069 = vld [vmem:[#allocation8 + $0x2e8] sm:$0xff]
    %v3070 = vld [vmem:[#allocation8 + $0x2f0] sm:$0xff]
    %v3071 = vld [vmem:[#allocation8 + $0x2f8] sm:$0xff]
    %s3072 = scalar_lea.vmem %s3, 1
    %v3073 = vld [vmem:[%s3072] ss:$8 sm:$0xf]
    %v3075 = vlaneseq
    %v3076 = vshrl.u32 %v3075, 7
    %v3077 = vsub.s32 0, %v3076
    %v3078 = vrot.slane %v3073, %v3077
    %v3079 = vlaneseq
    %v3080 = vshrl.u32 %v3079, 7
    %v3081 = vsub.s32 1, %v3080
    %v3082 = vrot.slane %v3073, %v3081
    %v3083 = vlaneseq
    %v3084 = vshrl.u32 %v3083, 7
    %v3085 = vsub.s32 2, %v3084
    %v3086 = vrot.slane %v3073, %v3085
    %v3087 = vlaneseq
    %v3088 = vshrl.u32 %v3087, 7
    %v3089 = vsub.s32 3, %v3088
    %v3090 = vrot.slane %v3073, %v3089
    %v3127 = vunpack.c.l.b16 %v3040
    %v3128 = vunpack.c.h.b16 %v3040
    %v3129 = vunpack.c.l.b16 %v3041
    %v3130 = vunpack.c.h.b16 %v3041
    %v3131 = vunpack.c.l.b16 %v3042
    %v3132 = vunpack.c.h.b16 %v3042
    %v3133 = vunpack.c.l.b16 %v3043
    %v3134 = vunpack.c.h.b16 %v3043
    %v3135 = vunpack.c.l.b16 %v3044
    %v3136 = vunpack.c.h.b16 %v3044
    %v3137 = vunpack.c.l.b16 %v3045
    %v3138 = vunpack.c.h.b16 %v3045
    %v3139 = vunpack.c.l.b16 %v3046
    %v3140 = vunpack.c.h.b16 %v3046
    %v3141 = vunpack.c.l.b16 %v3047
    %v3142 = vunpack.c.h.b16 %v3047
    %v3143 = vunpack.c.l.b16 %v3048
    %v3144 = vunpack.c.h.b16 %v3048
    %v3145 = vunpack.c.l.b16 %v3049
    %v3146 = vunpack.c.h.b16 %v3049
    %v3147 = vunpack.c.l.b16 %v3050
    %v3148 = vunpack.c.h.b16 %v3050
    %v3149 = vunpack.c.l.b16 %v3051
    %v3150 = vunpack.c.h.b16 %v3051
    %v3151 = vunpack.c.l.b16 %v3052
    %v3152 = vunpack.c.h.b16 %v3052
    %v3153 = vunpack.c.l.b16 %v3053
    %v3154 = vunpack.c.h.b16 %v3053
    %v3155 = vunpack.c.l.b16 %v3054
    %v3156 = vunpack.c.h.b16 %v3054
    %v3157 = vunpack.c.l.b16 %v3055
    %v3158 = vunpack.c.h.b16 %v3055
    %v3159 = vunpack.c.l.b16 %v3056
    %v3160 = vunpack.c.h.b16 %v3056
    %v3161 = vunpack.c.l.b16 %v3057
    %v3162 = vunpack.c.h.b16 %v3057
    %v3163 = vunpack.c.l.b16 %v3058
    %v3164 = vunpack.c.h.b16 %v3058
    %v3165 = vunpack.c.l.b16 %v3059
    %v3166 = vunpack.c.h.b16 %v3059
    %v3167 = vunpack.c.l.b16 %v3060
    %v3168 = vunpack.c.h.b16 %v3060
    %v3169 = vunpack.c.l.b16 %v3061
    %v3170 = vunpack.c.h.b16 %v3061
    %v3171 = vunpack.c.l.b16 %v3062
    %v3172 = vunpack.c.h.b16 %v3062
    %v3173 = vunpack.c.l.b16 %v3063
    %v3174 = vunpack.c.h.b16 %v3063
    %v3175 = vunpack.c.l.b16 %v3064
    %v3176 = vunpack.c.h.b16 %v3064
    %v3177 = vunpack.c.l.b16 %v3065
    %v3178 = vunpack.c.h.b16 %v3065
    %v3179 = vunpack.c.l.b16 %v3066
    %v3180 = vunpack.c.h.b16 %v3066
    %v3181 = vunpack.c.l.b16 %v3067
    %v3182 = vunpack.c.h.b16 %v3067
    %v3183 = vunpack.c.l.b16 %v3068
    %v3184 = vunpack.c.h.b16 %v3068
    %v3185 = vunpack.c.l.b16 %v3069
    %v3186 = vunpack.c.h.b16 %v3069
    %v3187 = vunpack.c.l.b16 %v3070
    %v3188 = vunpack.c.h.b16 %v3070
    %v3189 = vunpack.c.l.b16 %v3071
    %v3190 = vunpack.c.h.b16 %v3071
    %v3191 = vpack.c.b16 %v3131, %v3127
    %v3192 = vpack.c.b16 %v3132, %v3128
    %v3193 = vpack.c.b16 %v3133, %v3129
    %v3194 = vpack.c.b16 %v3134, %v3130
    %v3195 = vpack.c.b16 %v3139, %v3135
    %v3196 = vpack.c.b16 %v3140, %v3136
    %v3197 = vpack.c.b16 %v3141, %v3137
    %v3198 = vpack.c.b16 %v3142, %v3138
    %v3199 = vpack.c.b16 %v3147, %v3143
    %v3200 = vpack.c.b16 %v3148, %v3144
    %v3201 = vpack.c.b16 %v3149, %v3145
    %v3202 = vpack.c.b16 %v3150, %v3146
    %v3203 = vpack.c.b16 %v3155, %v3151
    %v3204 = vpack.c.b16 %v3156, %v3152
    %v3205 = vpack.c.b16 %v3157, %v3153
    %v3206 = vpack.c.b16 %v3158, %v3154
    %v3207 = vpack.c.b16 %v3163, %v3159
    %v3208 = vpack.c.b16 %v3164, %v3160
    %v3209 = vpack.c.b16 %v3165, %v3161
    %v3210 = vpack.c.b16 %v3166, %v3162
    %v3211 = vpack.c.b16 %v3171, %v3167
    %v3212 = vpack.c.b16 %v3172, %v3168
    %v3213 = vpack.c.b16 %v3173, %v3169
    %v3214 = vpack.c.b16 %v3174, %v3170
    %v3215 = vpack.c.b16 %v3179, %v3175
    %v3216 = vpack.c.b16 %v3180, %v3176
    %v3217 = vpack.c.b16 %v3181, %v3177
    %v3218 = vpack.c.b16 %v3182, %v3178
    %v3219 = vpack.c.b16 %v3187, %v3183
    %v3220 = vpack.c.b16 %v3188, %v3184
    %v3221 = vpack.c.b16 %v3189, %v3185
    %v3222 = vpack.c.b16 %v3190, %v3186
    %3255 = vmatprep.subr.bf16.mxu0 %v3220
    %3256 = vmatpush1.bf16.msra.mxu0 %v3219
    %3257 = vmatprep.subr.bf16.mxu0 %v3216
    %3258 = vmatpush1.bf16.msra.mxu0 %v3215
    %3259 = vmatprep.subr.bf16.mxu0 %v3212
    %3260 = vmatpush1.bf16.msra.mxu0 %v3211
    %3261 = vmatprep.subr.bf16.mxu0 %v3208
    %3262 = vmatpush1.bf16.msra.mxu0 %v3207
    %3263 = vmatprep.subr.bf16.mxu0 %v3204
    %3264 = vmatpush1.bf16.msra.mxu0 %v3203
    %3265 = vmatprep.subr.bf16.mxu0 %v3200
    %3266 = vmatpush1.bf16.msra.mxu0 %v3199
    %3267 = vmatprep.subr.bf16.mxu0 %v3196
    %3268 = vmatpush1.bf16.msra.mxu0 %v3195
    %3269 = vmatprep.subr.bf16.mxu0 %v3192
    %3270 = vmatpush1.bf16.msra.mxu0 %v3191
    %3271 = vmatprep.subr.bf16.mxu0 0
    %3272 = vmatpush2.bf16.msra.mxu0 0
    %3273 = vmatprep.subr.bf16.mxu0 0
    %3274 = vmatpush2.bf16.msra.mxu0 0
    %3275 = vmatprep.subr.bf16.mxu0 0
    %3276 = vmatpush2.bf16.msra.mxu0 0
    %3277 = vmatprep.subr.bf16.mxu0 0
    %3278 = vmatpush2.bf16.msra.mxu0 0
    %3279 = vmatprep.subr.bf16.mxu0 0
    %3280 = vmatpush2.bf16.msra.mxu0 0
    %3281 = vmatprep.subr.bf16.mxu0 0
    %3282 = vmatpush2.bf16.msra.mxu0 0
    %3283 = vmatprep.subr.bf16.mxu0 0
    %3284 = vmatpush2.bf16.msra.mxu0 0
    %3285 = vmatprep.subr.bf16.mxu0 0
    %3286 = vmatpush2.bf16.msra.mxu0 0
    %3287 = vmatprep.mubr.bf16.mxu0 0
    %3288 = vmatmul.mubr.bf16.gmra.mxu0 %v3036
    %v3289 = vpop.f32.mrf.mxu0
    %v3290 = vadd.f32 %v3078, %v3289
    %v3291 = vpop.f32.mrf.mxu0
    %v3292 = vadd.f32 %v3082, %v3291
    %v3293 = vpop.f32.mrf.mxu0
    %v3294 = vadd.f32 %v3078, %v3293
    %v3295 = vpop.f32.mrf.mxu0
    %v3296 = vadd.f32 %v3082, %v3295
    %3297 = vmatprep.mubr.bf16.mxu0 0
    %3298 = vmatmul.mubr.bf16.gmra.mxu0 %v3037
    %v3299 = vpop.f32.mrf.mxu0
    %v3300 = vadd.f32 %v3078, %v3299
    %v3301 = vpop.f32.mrf.mxu0
    %v3302 = vadd.f32 %v3082, %v3301
    %v3303 = vpop.f32.mrf.mxu0
    %v3304 = vadd.f32 %v3078, %v3303
    %v3305 = vpop.f32.mrf.mxu0
    %v3306 = vadd.f32 %v3082, %v3305
    %3307 = vmatprep.mubr.bf16.mxu0 0
    %3308 = vmatmul.mubr.bf16.gmra.mxu0 %v3038
    %v3309 = vpop.f32.mrf.mxu0
    %v3310 = vadd.f32 %v3078, %v3309
    %v3311 = vpop.f32.mrf.mxu0
    %v3312 = vadd.f32 %v3082, %v3311
    %v3313 = vpop.f32.mrf.mxu0
    %v3314 = vadd.f32 %v3078, %v3313
    %v3315 = vpop.f32.mrf.mxu0
    %v3316 = vadd.f32 %v3082, %v3315
    %3317 = vmatprep.mubr.bf16.mxu0 0
    %3318 = vmatmul.mubr.bf16.gmra.mxu0 %v3039
    %v3319 = vpop.f32.mrf.mxu0
    %v3320 = vadd.f32 %v3078, %v3319
    %v3321 = vpop.f32.mrf.mxu0
    %v3322 = vadd.f32 %v3082, %v3321
    %v3323 = vpop.f32.mrf.mxu0
    %v3324 = vadd.f32 %v3078, %v3323
    %v3325 = vpop.f32.mrf.mxu0
    %v3326 = vadd.f32 %v3082, %v3325
    %3327 = vdwg.mxu0
    %3328 = vmatprep.subr.bf16.mxu0 %v3222
    %3329 = vmatpush1.bf16.msra.mxu0 %v3221
    %3330 = vmatprep.subr.bf16.mxu0 %v3218
    %3331 = vmatpush1.bf16.msra.mxu0 %v3217
    %3332 = vmatprep.subr.bf16.mxu0 %v3214
    %3333 = vmatpush1.bf16.msra.mxu0 %v3213
    %3334 = vmatprep.subr.bf16.mxu0 %v3210
    %3335 = vmatpush1.bf16.msra.mxu0 %v3209
    %3336 = vmatprep.subr.bf16.mxu0 %v3206
    %3337 = vmatpush1.bf16.msra.mxu0 %v3205
    %3338 = vmatprep.subr.bf16.mxu0 %v3202
    %3339 = vmatpush1.bf16.msra.mxu0 %v3201
    %3340 = vmatprep.subr.bf16.mxu0 %v3198
    %3341 = vmatpush1.bf16.msra.mxu0 %v3197
    %3342 = vmatprep.subr.bf16.mxu0 %v3194
    %3343 = vmatpush1.bf16.msra.mxu0 %v3193
    %3344 = vmatprep.subr.bf16.mxu0 0
    %3345 = vmatpush2.bf16.msra.mxu0 0
    %3346 = vmatprep.subr.bf16.mxu0 0
    %3347 = vmatpush2.bf16.msra.mxu0 0
    %3348 = vmatprep.subr.bf16.mxu0 0
    %3349 = vmatpush2.bf16.msra.mxu0 0
    %3350 = vmatprep.subr.bf16.mxu0 0
    %3351 = vmatpush2.bf16.msra.mxu0 0
    %3352 = vmatprep.subr.bf16.mxu0 0
    %3353 = vmatpush2.bf16.msra.mxu0 0
    %3354 = vmatprep.subr.bf16.mxu0 0
    %3355 = vmatpush2.bf16.msra.mxu0 0
    %3356 = vmatprep.subr.bf16.mxu0 0
    %3357 = vmatpush2.bf16.msra.mxu0 0
    %3358 = vmatprep.subr.bf16.mxu0 0
    %3359 = vmatpush2.bf16.msra.mxu0 0
    %3360 = vmatprep.mubr.bf16.mxu0 0
    %3361 = vmatmul.mubr.bf16.gmra.mxu0 %v3036
    %v3362 = vpop.f32.mrf.mxu0
    %v3363 = vadd.f32 %v3086, %v3362
    %v3364 = vpop.f32.mrf.mxu0
    %v3365 = vadd.f32 %v3090, %v3364
    %v3366 = vpop.f32.mrf.mxu0
    %v3367 = vadd.f32 %v3086, %v3366
    %v3368 = vpop.f32.mrf.mxu0
    %v3369 = vadd.f32 %v3090, %v3368
    %3370 = vmatprep.mubr.bf16.mxu0 0
    %3371 = vmatmul.mubr.bf16.gmra.mxu0 %v3037
    %v3372 = vpop.f32.mrf.mxu0
    %v3373 = vadd.f32 %v3086, %v3372
    %v3374 = vpop.f32.mrf.mxu0
    %v3375 = vadd.f32 %v3090, %v3374
    %v3376 = vpop.f32.mrf.mxu0
    %v3377 = vadd.f32 %v3086, %v3376
    %v3378 = vpop.f32.mrf.mxu0
    %v3379 = vadd.f32 %v3090, %v3378
    %3380 = vmatprep.mubr.bf16.mxu0 0
    %3381 = vmatmul.mubr.bf16.gmra.mxu0 %v3038
    %v3382 = vpop.f32.mrf.mxu0
    %v3383 = vadd.f32 %v3086, %v3382
    %v3384 = vpop.f32.mrf.mxu0
    %v3385 = vadd.f32 %v3090, %v3384
    %v3386 = vpop.f32.mrf.mxu0
    %v3387 = vadd.f32 %v3086, %v3386
    %v3388 = vpop.f32.mrf.mxu0
    %v3389 = vadd.f32 %v3090, %v3388
    %3390 = vmatprep.mubr.bf16.mxu0 0
    %3391 = vmatmul.mubr.bf16.gmra.mxu0 %v3039
    %v3392 = vpop.f32.mrf.mxu0
    %v3393 = vadd.f32 %v3086, %v3392
    %v3394 = vpop.f32.mrf.mxu0
    %v3395 = vadd.f32 %v3090, %v3394
    %v3396 = vpop.f32.mrf.mxu0
    %v3397 = vadd.f32 %v3086, %v3396
    %v3398 = vpop.f32.mrf.mxu0
    %v3399 = vadd.f32 %v3090, %v3398
    %3400 = vdwg.mxu0
    %3401 = vst [vmem:[#allocation3] sm:$0xff] %v3290
    %3402 = vst [vmem:[#allocation3 + $0x8] sm:$0xff] %v3292
    %3403 = vst [vmem:[#allocation3 + $0x10] sm:$0xff] %v3363
    %3404 = vst [vmem:[#allocation3 + $0x18] sm:$0xff] %v3365
    %3405 = vst [vmem:[#allocation3 + $0x20] sm:$0xff] %v3294
    %3406 = vst [vmem:[#allocation3 + $0x28] sm:$0xff] %v3296
    %3407 = vst [vmem:[#allocation3 + $0x30] sm:$0xff] %v3367
    %3408 = vst [vmem:[#allocation3 + $0x38] sm:$0xff] %v3369
    %3409 = vst [vmem:[#allocation3 + $0x40] sm:$0xff] %v3300
    %3410 = vst [vmem:[#allocation3 + $0x48] sm:$0xff] %v3302
    %3411 = vst [vmem:[#allocation3 + $0x50] sm:$0xff] %v3373
    %3412 = vst [vmem:[#allocation3 + $0x58] sm:$0xff] %v3375
    %3413 = vst [vmem:[#allocation3 + $0x60] sm:$0xff] %v3304
    %3414 = vst [vmem:[#allocation3 + $0x68] sm:$0xff] %v3306
    %3415 = vst [vmem:[#allocation3 + $0x70] sm:$0xff] %v3377
    %3416 = vst [vmem:[#allocation3 + $0x78] sm:$0xff] %v3379
    %3417 = vst [vmem:[#allocation3 + $0x80] sm:$0xff] %v3310
    %3418 = vst [vmem:[#allocation3 + $0x88] sm:$0xff] %v3312
    %3419 = vst [vmem:[#allocation3 + $0x90] sm:$0xff] %v3383
    %3420 = vst [vmem:[#allocation3 + $0x98] sm:$0xff] %v3385
    %3421 = vst [vmem:[#allocation3 + $0xa0] sm:$0xff] %v3314
    %3422 = vst [vmem:[#allocation3 + $0xa8] sm:$0xff] %v3316
    %3423 = vst [vmem:[#allocation3 + $0xb0] sm:$0xff] %v3387
    %3424 = vst [vmem:[#allocation3 + $0xb8] sm:$0xff] %v3389
    %3425 = vst [vmem:[#allocation3 + $0xc0] sm:$0xff] %v3320
    %3426 = vst [vmem:[#allocation3 + $0xc8] sm:$0xff] %v3322
    %3427 = vst [vmem:[#allocation3 + $0xd0] sm:$0xff] %v3393
    %3428 = vst [vmem:[#allocation3 + $0xd8] sm:$0xff] %v3395
    %3429 = vst [vmem:[#allocation3 + $0xe0] sm:$0xff] %v3324
    %3430 = vst [vmem:[#allocation3 + $0xe8] sm:$0xff] %v3326
    %3431 = vst [vmem:[#allocation3 + $0xf0] sm:$0xff] %v3397
    %3432 = vst [vmem:[#allocation3 + $0xf8] sm:$0xff] %v3399
    %v3433 = vlaneseq
    %v3434 = vand.u32 %v3433, 127
    %vm3435 = vcmp.lt.s32.totalorder %v3434, 64
    %v3436 = vsel %vm3435, 1, 0
    %v3437 = vcvt.s32.f32 %v3436
    %v3438 = vld [vmem:[#allocation3] sm:$0xff]
    %v3439 = vld [vmem:[#allocation3 + $0x8] sm:$0xff]
    %v3440 = vld [vmem:[#allocation3 + $0x10] sm:$0xff]
    %v3441 = vld [vmem:[#allocation3 + $0x18] sm:$0xff]
    %v3442 = vld [vmem:[#allocation8 + $0x300] sm:$0xff]
    %v3443 = vld [vmem:[#allocation8 + $0x308] sm:$0xff]
    %v3444 = vld [vmem:[#allocation8 + $0x310] sm:$0xff]
    %v3445 = vld [vmem:[#allocation8 + $0x318] sm:$0xff]
    %v3446 = vld [vmem:[#allocation8 + $0x320] sm:$0xff]
    %v3447 = vld [vmem:[#allocation8 + $0x328] sm:$0xff]
    %v3448 = vld [vmem:[#allocation8 + $0x330] sm:$0xff]
    %v3449 = vld [vmem:[#allocation8 + $0x338] sm:$0xff]
    %v3450 = vld [vmem:[#allocation8 + $0x340] sm:$0xff]
    %v3451 = vld [vmem:[#allocation8 + $0x348] sm:$0xff]
    %v3452 = vld [vmem:[#allocation8 + $0x350] sm:$0xff]
    %v3453 = vld [vmem:[#allocation8 + $0x358] sm:$0xff]
    %v3454 = vld [vmem:[#allocation8 + $0x360] sm:$0xff]
    %v3455 = vld [vmem:[#allocation8 + $0x368] sm:$0xff]
    %v3456 = vld [vmem:[#allocation8 + $0x370] sm:$0xff]
    %v3457 = vld [vmem:[#allocation8 + $0x378] sm:$0xff]
    %v3458 = vld [vmem:[#allocation8 + $0x380] sm:$0xff]
    %v3459 = vld [vmem:[#allocation8 + $0x388] sm:$0xff]
    %v3460 = vld [vmem:[#allocation8 + $0x390] sm:$0xff]
    %v3461 = vld [vmem:[#allocation8 + $0x398] sm:$0xff]
    %v3462 = vld [vmem:[#allocation8 + $0x3a0] sm:$0xff]
    %v3463 = vld [vmem:[#allocation8 + $0x3a8] sm:$0xff]
    %v3464 = vld [vmem:[#allocation8 + $0x3b0] sm:$0xff]
    %v3465 = vld [vmem:[#allocation8 + $0x3b8] sm:$0xff]
    %v3466 = vld [vmem:[#allocation8 + $0x3c0] sm:$0xff]
    %v3467 = vld [vmem:[#allocation8 + $0x3c8] sm:$0xff]
    %v3468 = vld [vmem:[#allocation8 + $0x3d0] sm:$0xff]
    %v3469 = vld [vmem:[#allocation8 + $0x3d8] sm:$0xff]
    %v3470 = vld [vmem:[#allocation8 + $0x3e0] sm:$0xff]
    %v3471 = vld [vmem:[#allocation8 + $0x3e8] sm:$0xff]
    %v3472 = vld [vmem:[#allocation8 + $0x3f0] sm:$0xff]
    %v3473 = vld [vmem:[#allocation8 + $0x3f8] sm:$0xff]
    %v3506 = vunpack.c.l.b16 %v3442
    %v3507 = vunpack.c.h.b16 %v3442
    %v3508 = vunpack.c.l.b16 %v3443
    %v3509 = vunpack.c.h.b16 %v3443
    %v3510 = vunpack.c.l.b16 %v3444
    %v3511 = vunpack.c.h.b16 %v3444
    %v3512 = vunpack.c.l.b16 %v3445
    %v3513 = vunpack.c.h.b16 %v3445
    %v3514 = vunpack.c.l.b16 %v3446
    %v3515 = vunpack.c.h.b16 %v3446
    %v3516 = vunpack.c.l.b16 %v3447
    %v3517 = vunpack.c.h.b16 %v3447
    %v3518 = vunpack.c.l.b16 %v3448
    %v3519 = vunpack.c.h.b16 %v3448
    %v3520 = vunpack.c.l.b16 %v3449
    %v3521 = vunpack.c.h.b16 %v3449
    %v3522 = vunpack.c.l.b16 %v3450
    %v3523 = vunpack.c.h.b16 %v3450
    %v3524 = vunpack.c.l.b16 %v3451
    %v3525 = vunpack.c.h.b16 %v3451
    %v3526 = vunpack.c.l.b16 %v3452
    %v3527 = vunpack.c.h.b16 %v3452
    %v3528 = vunpack.c.l.b16 %v3453
    %v3529 = vunpack.c.h.b16 %v3453
    %v3530 = vunpack.c.l.b16 %v3454
    %v3531 = vunpack.c.h.b16 %v3454
    %v3532 = vunpack.c.l.b16 %v3455
    %v3533 = vunpack.c.h.b16 %v3455
    %v3534 = vunpack.c.l.b16 %v3456
    %v3535 = vunpack.c.h.b16 %v3456
    %v3536 = vunpack.c.l.b16 %v3457
    %v3537 = vunpack.c.h.b16 %v3457
    %v3538 = vunpack.c.l.b16 %v3458
    %v3539 = vunpack.c.h.b16 %v3458
    %v3540 = vunpack.c.l.b16 %v3459
    %v3541 = vunpack.c.h.b16 %v3459
    %v3542 = vunpack.c.l.b16 %v3460
    %v3543 = vunpack.c.h.b16 %v3460
    %v3544 = vunpack.c.l.b16 %v3461
    %v3545 = vunpack.c.h.b16 %v3461
    %v3546 = vunpack.c.l.b16 %v3462
    %v3547 = vunpack.c.h.b16 %v3462
    %v3548 = vunpack.c.l.b16 %v3463
    %v3549 = vunpack.c.h.b16 %v3463
    %v3550 = vunpack.c.l.b16 %v3464
    %v3551 = vunpack.c.h.b16 %v3464
    %v3552 = vunpack.c.l.b16 %v3465
    %v3553 = vunpack.c.h.b16 %v3465
    %v3554 = vunpack.c.l.b16 %v3466
    %v3555 = vunpack.c.h.b16 %v3466
    %v3556 = vunpack.c.l.b16 %v3467
    %v3557 = vunpack.c.h.b16 %v3467
    %v3558 = vunpack.c.l.b16 %v3468
    %v3559 = vunpack.c.h.b16 %v3468
    %v3560 = vunpack.c.l.b16 %v3469
    %v3561 = vunpack.c.h.b16 %v3469
    %v3562 = vunpack.c.l.b16 %v3470
    %v3563 = vunpack.c.h.b16 %v3470
    %v3564 = vunpack.c.l.b16 %v3471
    %v3565 = vunpack.c.h.b16 %v3471
    %v3566 = vunpack.c.l.b16 %v3472
    %v3567 = vunpack.c.h.b16 %v3472
    %v3568 = vunpack.c.l.b16 %v3473
    %v3569 = vunpack.c.h.b16 %v3473
    %v3570 = vpack.c.b16 %v3510, %v3506
    %v3571 = vpack.c.b16 %v3511, %v3507
    %v3572 = vpack.c.b16 %v3512, %v3508
    %v3573 = vpack.c.b16 %v3513, %v3509
    %v3574 = vpack.c.b16 %v3518, %v3514
    %v3575 = vpack.c.b16 %v3519, %v3515
    %v3576 = vpack.c.b16 %v3520, %v3516
    %v3577 = vpack.c.b16 %v3521, %v3517
    %v3578 = vpack.c.b16 %v3526, %v3522
    %v3579 = vpack.c.b16 %v3527, %v3523
    %v3580 = vpack.c.b16 %v3528, %v3524
    %v3581 = vpack.c.b16 %v3529, %v3525
    %v3582 = vpack.c.b16 %v3534, %v3530
    %v3583 = vpack.c.b16 %v3535, %v3531
    %v3584 = vpack.c.b16 %v3536, %v3532
    %v3585 = vpack.c.b16 %v3537, %v3533
    %v3586 = vpack.c.b16 %v3542, %v3538
    %v3587 = vpack.c.b16 %v3543, %v3539
    %v3588 = vpack.c.b16 %v3544, %v3540
    %v3589 = vpack.c.b16 %v3545, %v3541
    %v3590 = vpack.c.b16 %v3550, %v3546
    %v3591 = vpack.c.b16 %v3551, %v3547
    %v3592 = vpack.c.b16 %v3552, %v3548
    %v3593 = vpack.c.b16 %v3553, %v3549
    %v3594 = vpack.c.b16 %v3558, %v3554
    %v3595 = vpack.c.b16 %v3559, %v3555
    %v3596 = vpack.c.b16 %v3560, %v3556
    %v3597 = vpack.c.b16 %v3561, %v3557
    %v3598 = vpack.c.b16 %v3566, %v3562
    %v3599 = vpack.c.b16 %v3567, %v3563
    %v3600 = vpack.c.b16 %v3568, %v3564
    %v3601 = vpack.c.b16 %v3569, %v3565
    %3634 = vmatprep.subr.bf16.mxu0 %v3599
    %3635 = vmatpush1.bf16.msra.mxu0 %v3598
    %3636 = vmatprep.subr.bf16.mxu0 %v3595
    %3637 = vmatpush1.bf16.msra.mxu0 %v3594
    %3638 = vmatprep.subr.bf16.mxu0 %v3591
    %3639 = vmatpush1.bf16.msra.mxu0 %v3590
    %3640 = vmatprep.subr.bf16.mxu0 %v3587
    %3641 = vmatpush1.bf16.msra.mxu0 %v3586
    %3642 = vmatprep.subr.bf16.mxu0 %v3583
    %3643 = vmatpush1.bf16.msra.mxu0 %v3582
    %3644 = vmatprep.subr.bf16.mxu0 %v3579
    %3645 = vmatpush1.bf16.msra.mxu0 %v3578
    %3646 = vmatprep.subr.bf16.mxu0 %v3575
    %3647 = vmatpush1.bf16.msra.mxu0 %v3574
    %3648 = vmatprep.subr.bf16.mxu0 %v3571
    %3649 = vmatpush1.bf16.msra.mxu0 %v3570
    %3650 = vmatprep.subr.bf16.mxu0 0
    %3651 = vmatpush2.bf16.msra.mxu0 0
    %3652 = vmatprep.subr.bf16.mxu0 0
    %3653 = vmatpush2.bf16.msra.mxu0 0
    %3654 = vmatprep.subr.bf16.mxu0 0
    %3655 = vmatpush2.bf16.msra.mxu0 0
    %3656 = vmatprep.subr.bf16.mxu0 0
    %3657 = vmatpush2.bf16.msra.mxu0 0
    %3658 = vmatprep.subr.bf16.mxu0 0
    %3659 = vmatpush2.bf16.msra.mxu0 0
    %3660 = vmatprep.subr.bf16.mxu0 0
    %3661 = vmatpush2.bf16.msra.mxu0 0
    %3662 = vmatprep.subr.bf16.mxu0 0
    %3663 = vmatpush2.bf16.msra.mxu0 0
    %3664 = vmatprep.subr.bf16.mxu0 0
    %3665 = vmatpush2.bf16.msra.mxu0 0
    %3666 = vmatprep.mubr.bf16.mxu0 0
    %3667 = vmatmul.mubr.bf16.gmra.mxu0 0
    %v3668 = vpop.f32.mrf.mxu0
    %v3669 = vadd.f32 0.0, %v3668
    %v3670 = vpop.f32.mrf.mxu0
    %v3671 = vadd.f32 0.0, %v3670
    %v3672 = vpop.f32.mrf.mxu0
    %v3673 = vpop.f32.mrf.mxu0
    %3674 = vdwg.mxu0
    %3675 = vmatprep.subr.bf16.mxu0 %v3601
    %3676 = vmatpush1.bf16.msra.mxu0 %v3600
    %3677 = vmatprep.subr.bf16.mxu0 %v3597
    %3678 = vmatpush1.bf16.msra.mxu0 %v3596
    %3679 = vmatprep.subr.bf16.mxu0 %v3593
    %3680 = vmatpush1.bf16.msra.mxu0 %v3592
    %3681 = vmatprep.subr.bf16.mxu0 %v3589
    %3682 = vmatpush1.bf16.msra.mxu0 %v3588
    %3683 = vmatprep.subr.bf16.mxu0 %v3585
    %3684 = vmatpush1.bf16.msra.mxu0 %v3584
    %3685 = vmatprep.subr.bf16.mxu0 %v3581
    %3686 = vmatpush1.bf16.msra.mxu0 %v3580
    %3687 = vmatprep.subr.bf16.mxu0 %v3577
    %3688 = vmatpush1.bf16.msra.mxu0 %v3576
    %3689 = vmatprep.subr.bf16.mxu0 %v3573
    %3690 = vmatpush1.bf16.msra.mxu0 %v3572
    %3691 = vmatprep.subr.bf16.mxu0 0
    %3692 = vmatpush2.bf16.msra.mxu0 0
    %3693 = vmatprep.subr.bf16.mxu0 0
    %3694 = vmatpush2.bf16.msra.mxu0 0
    %3695 = vmatprep.subr.bf16.mxu0 0
    %3696 = vmatpush2.bf16.msra.mxu0 0
    %3697 = vmatprep.subr.bf16.mxu0 0
    %3698 = vmatpush2.bf16.msra.mxu0 0
    %3699 = vmatprep.subr.bf16.mxu0 0
    %3700 = vmatpush2.bf16.msra.mxu0 0
    %3701 = vmatprep.subr.bf16.mxu0 0
    %3702 = vmatpush2.bf16.msra.mxu0 0
    %3703 = vmatprep.subr.bf16.mxu0 0
    %3704 = vmatpush2.bf16.msra.mxu0 0
    %3705 = vmatprep.subr.bf16.mxu0 0
    %3706 = vmatpush2.bf16.msra.mxu0 0
    %3707 = vmatprep.mubr.bf16.mxu0 0
    %3708 = vmatmul.mubr.bf16.gmra.mxu0 0
    %v3709 = vpop.f32.mrf.mxu0
    %v3710 = vadd.f32 0.0, %v3709
    %v3711 = vpop.f32.mrf.mxu0
    %v3712 = vadd.f32 0.0, %v3711
    %v3713 = vpop.f32.mrf.mxu0
    %v3714 = vpop.f32.mrf.mxu0
    %3715 = vdwg.mxu0
    %v3716 = vadd.f32 %v3438, %v3669
    %v3717 = vadd.f32 %v3439, %v3671
    %v3718 = vadd.f32 %v3440, %v3710
    %v3719 = vadd.f32 %v3441, %v3712
    %v3720 = vmul.f32 %v3716, 0.5
    %v3721 = vmul.f32 %v3717, 0.5
    %v3722 = vmul.f32 %v3718, 0.5
    %v3723 = vtanh.pop %v3720
    %v3724 = vtanh.pop %v3721
    %v3725 = vtanh.pop %v3722
    %v3726 = vmul.f32 %v3723, 0.5
    %v3727 = vmul.f32 %v3724, 0.5
    %v3728 = vmul.f32 %v3725, 0.5
    %v3729 = vadd.f32 %v3726, 0.5
    %v3730 = vadd.f32 %v3727, 0.5
    %v3731 = vadd.f32 %v3728, 0.5
    %v3732 = vtanh.pop %v3719
    %v3733 = vmul.f32 %v3437, 0.0
    %v3734 = vmul.f32 %v3730, %v3733
    %v3735 = vmul.f32 %v3729, %v3732
    %v3736 = vadd.f32 %v3734, %v3735
    %v3737 = vtanh.pop %v3736
    %v3738 = vmul.f32 %v3731, %v3737
    %v3739 = vld [vmem:[#allocation3 + $0x20] sm:$0xff]
    %v3740 = vld [vmem:[#allocation3 + $0x28] sm:$0xff]
    %v3741 = vld [vmem:[#allocation3 + $0x30] sm:$0xff]
    %v3742 = vld [vmem:[#allocation3 + $0x38] sm:$0xff]
    %v3743 = vpack.c.bf16 %v3738, %v3738
    %3744 = vmatprep.subr.bf16.mxu0 %v3599
    %3745 = vmatpush1.bf16.msra.mxu0 %v3598
    %3746 = vmatprep.subr.bf16.mxu0 %v3595
    %3747 = vmatpush1.bf16.msra.mxu0 %v3594
    %3748 = vmatprep.subr.bf16.mxu0 %v3591
    %3749 = vmatpush1.bf16.msra.mxu0 %v3590
    %3750 = vmatprep.subr.bf16.mxu0 %v3587
    %3751 = vmatpush1.bf16.msra.mxu0 %v3586
    %3752 = vmatprep.subr.bf16.mxu0 %v3583
    %3753 = vmatpush1.bf16.msra.mxu0 %v3582
    %3754 = vmatprep.subr.bf16.mxu0 %v3579
    %3755 = vmatpush1.bf16.msra.mxu0 %v3578
    %3756 = vmatprep.subr.bf16.mxu0 %v3575
    %3757 = vmatpush1.bf16.msra.mxu0 %v3574
    %3758 = vmatprep.subr.bf16.mxu0 %v3571
    %3759 = vmatpush1.bf16.msra.mxu0 %v3570
    %3760 = vmatprep.subr.bf16.mxu0 0
    %3761 = vmatpush2.bf16.msra.mxu0 0
    %3762 = vmatprep.subr.bf16.mxu0 0
    %3763 = vmatpush2.bf16.msra.mxu0 0
    %3764 = vmatprep.subr.bf16.mxu0 0
    %3765 = vmatpush2.bf16.msra.mxu0 0
    %3766 = vmatprep.subr.bf16.mxu0 0
    %3767 = vmatpush2.bf16.msra.mxu0 0
    %3768 = vmatprep.subr.bf16.mxu0 0
    %3769 = vmatpush2.bf16.msra.mxu0 0
    %3770 = vmatprep.subr.bf16.mxu0 0
    %3771 = vmatpush2.bf16.msra.mxu0 0
    %3772 = vmatprep.subr.bf16.mxu0 0
    %3773 = vmatpush2.bf16.msra.mxu0 0
    %3774 = vmatprep.subr.bf16.mxu0 0
    %3775 = vmatpush2.bf16.msra.mxu0 0
    %3776 = vmatprep.mubr.bf16.mxu0 0
    %3777 = vmatmul.mubr.bf16.gmra.mxu0 %v3743
    %v3778 = vpop.f32.mrf.mxu0
    %v3779 = vadd.f32 0.0, %v3778
    %v3780 = vpop.f32.mrf.mxu0
    %v3781 = vadd.f32 0.0, %v3780
    %v3782 = vpop.f32.mrf.mxu0
    %v3783 = vpop.f32.mrf.mxu0
    %3784 = vdwg.mxu0
    %3785 = vmatprep.subr.bf16.mxu0 %v3601
    %3786 = vmatpush1.bf16.msra.mxu0 %v3600
    %3787 = vmatprep.subr.bf16.mxu0 %v3597
    %3788 = vmatpush1.bf16.msra.mxu0 %v3596
    %3789 = vmatprep.subr.bf16.mxu0 %v3593
    %3790 = vmatpush1.bf16.msra.mxu0 %v3592
    %3791 = vmatprep.subr.bf16.mxu0 %v3589
    %3792 = vmatpush1.bf16.msra.mxu0 %v3588
    %3793 = vmatprep.subr.bf16.mxu0 %v3585
    %3794 = vmatpush1.bf16.msra.mxu0 %v3584
    %3795 = vmatprep.subr.bf16.mxu0 %v3581
    %3796 = vmatpush1.bf16.msra.mxu0 %v3580
    %3797 = vmatprep.subr.bf16.mxu0 %v3577
    %3798 = vmatpush1.bf16.msra.mxu0 %v3576
    %3799 = vmatprep.subr.bf16.mxu0 %v3573
    %3800 = vmatpush1.bf16.msra.mxu0 %v3572
    %3801 = vmatprep.subr.bf16.mxu0 0
    %3802 = vmatpush2.bf16.msra.mxu0 0
    %3803 = vmatprep.subr.bf16.mxu0 0
    %3804 = vmatpush2.bf16.msra.mxu0 0
    %3805 = vmatprep.subr.bf16.mxu0 0
    %3806 = vmatpush2.bf16.msra.mxu0 0
    %3807 = vmatprep.subr.bf16.mxu0 0
    %3808 = vmatpush2.bf16.msra.mxu0 0
    %3809 = vmatprep.subr.bf16.mxu0 0
    %3810 = vmatpush2.bf16.msra.mxu0 0
    %3811 = vmatprep.subr.bf16.mxu0 0
    %3812 = vmatpush2.bf16.msra.mxu0 0
    %3813 = vmatprep.subr.bf16.mxu0 0
    %3814 = vmatpush2.bf16.msra.mxu0 0
    %3815 = vmatprep.subr.bf16.mxu0 0
    %3816 = vmatpush2.bf16.msra.mxu0 0
    %3817 = vmatprep.mubr.bf16.mxu0 0
    %3818 = vmatmul.mubr.bf16.gmra.mxu0 %v3743
    %v3819 = vpop.f32.mrf.mxu0
    %v3820 = vadd.f32 0.0, %v3819
    %v3821 = vpop.f32.mrf.mxu0
    %v3822 = vadd.f32 0.0, %v3821
    %v3823 = vpop.f32.mrf.mxu0
    %v3824 = vpop.f32.mrf.mxu0
    %3825 = vdwg.mxu0
    %v3826 = vadd.f32 %v3739, %v3779
    %v3827 = vadd.f32 %v3740, %v3781
    %v3828 = vadd.f32 %v3741, %v3820
    %v3829 = vadd.f32 %v3742, %v3822
    %v3830 = vmul.f32 %v3826, 0.5
    %v3831 = vmul.f32 %v3827, 0.5
    %v3832 = vmul.f32 %v3828, 0.5
    %v3833 = vtanh.pop %v3830
    %v3834 = vtanh.pop %v3831
    %v3835 = vtanh.pop %v3832
    %v3836 = vmul.f32 %v3833, 0.5
    %v3837 = vmul.f32 %v3834, 0.5
    %v3838 = vmul.f32 %v3835, 0.5
    %v3839 = vadd.f32 %v3836, 0.5
    %v3840 = vadd.f32 %v3837, 0.5
    %v3841 = vadd.f32 %v3838, 0.5
    %v3842 = vtanh.pop %v3829
    %v3843 = vmul.f32 %v3736, %v3437
    %v3844 = vmul.f32 %v3840, %v3843
    %v3845 = vmul.f32 %v3839, %v3842
    %v3846 = vadd.f32 %v3844, %v3845
    %v3847 = vtanh.pop %v3846
    %v3848 = vmul.f32 %v3841, %v3847
    %v3849 = vld [vmem:[#allocation3 + $0x40] sm:$0xff]
    %v3850 = vld [vmem:[#allocation3 + $0x48] sm:$0xff]
    %v3851 = vld [vmem:[#allocation3 + $0x50] sm:$0xff]
    %v3852 = vld [vmem:[#allocation3 + $0x58] sm:$0xff]
    %v3853 = vpack.c.bf16 %v3848, %v3848
    %3854 = vmatprep.subr.bf16.mxu0 %v3599
    %3855 = vmatpush1.bf16.msra.mxu0 %v3598
    %3856 = vmatprep.subr.bf16.mxu0 %v3595
    %3857 = vmatpush1.bf16.msra.mxu0 %v3594
    %3858 = vmatprep.subr.bf16.mxu0 %v3591
    %3859 = vmatpush1.bf16.msra.mxu0 %v3590
    %3860 = vmatprep.subr.bf16.mxu0 %v3587
    %3861 = vmatpush1.bf16.msra.mxu0 %v3586
    %3862 = vmatprep.subr.bf16.mxu0 %v3583
    %3863 = vmatpush1.bf16.msra.mxu0 %v3582
    %3864 = vmatprep.subr.bf16.mxu0 %v3579
    %3865 = vmatpush1.bf16.msra.mxu0 %v3578
    %3866 = vmatprep.subr.bf16.mxu0 %v3575
    %3867 = vmatpush1.bf16.msra.mxu0 %v3574
    %3868 = vmatprep.subr.bf16.mxu0 %v3571
    %3869 = vmatpush1.bf16.msra.mxu0 %v3570
    %3870 = vmatprep.subr.bf16.mxu0 0
    %3871 = vmatpush2.bf16.msra.mxu0 0
    %3872 = vmatprep.subr.bf16.mxu0 0
    %3873 = vmatpush2.bf16.msra.mxu0 0
    %3874 = vmatprep.subr.bf16.mxu0 0
    %3875 = vmatpush2.bf16.msra.mxu0 0
    %3876 = vmatprep.subr.bf16.mxu0 0
    %3877 = vmatpush2.bf16.msra.mxu0 0
    %3878 = vmatprep.subr.bf16.mxu0 0
    %3879 = vmatpush2.bf16.msra.mxu0 0
    %3880 = vmatprep.subr.bf16.mxu0 0
    %3881 = vmatpush2.bf16.msra.mxu0 0
    %3882 = vmatprep.subr.bf16.mxu0 0
    %3883 = vmatpush2.bf16.msra.mxu0 0
    %3884 = vmatprep.subr.bf16.mxu0 0
    %3885 = vmatpush2.bf16.msra.mxu0 0
    %3886 = vmatprep.mubr.bf16.mxu0 0
    %3887 = vmatmul.mubr.bf16.gmra.mxu0 %v3853
    %v3888 = vpop.f32.mrf.mxu0
    %v3889 = vadd.f32 0.0, %v3888
    %v3890 = vpop.f32.mrf.mxu0
    %v3891 = vadd.f32 0.0, %v3890
    %v3892 = vpop.f32.mrf.mxu0
    %v3893 = vpop.f32.mrf.mxu0
    %3894 = vdwg.mxu0
    %3895 = vmatprep.subr.bf16.mxu0 %v3601
    %3896 = vmatpush1.bf16.msra.mxu0 %v3600
    %3897 = vmatprep.subr.bf16.mxu0 %v3597
    %3898 = vmatpush1.bf16.msra.mxu0 %v3596
    %3899 = vmatprep.subr.bf16.mxu0 %v3593
    %3900 = vmatpush1.bf16.msra.mxu0 %v3592
    %3901 = vmatprep.subr.bf16.mxu0 %v3589
    %3902 = vmatpush1.bf16.msra.mxu0 %v3588
    %3903 = vmatprep.subr.bf16.mxu0 %v3585
    %3904 = vmatpush1.bf16.msra.mxu0 %v3584
    %3905 = vmatprep.subr.bf16.mxu0 %v3581
    %3906 = vmatpush1.bf16.msra.mxu0 %v3580
    %3907 = vmatprep.subr.bf16.mxu0 %v3577
    %3908 = vmatpush1.bf16.msra.mxu0 %v3576
    %3909 = vmatprep.subr.bf16.mxu0 %v3573
    %3910 = vmatpush1.bf16.msra.mxu0 %v3572
    %3911 = vmatprep.subr.bf16.mxu0 0
    %3912 = vmatpush2.bf16.msra.mxu0 0
    %3913 = vmatprep.subr.bf16.mxu0 0
    %3914 = vmatpush2.bf16.msra.mxu0 0
    %3915 = vmatprep.subr.bf16.mxu0 0
    %3916 = vmatpush2.bf16.msra.mxu0 0
    %3917 = vmatprep.subr.bf16.mxu0 0
    %3918 = vmatpush2.bf16.msra.mxu0 0
    %3919 = vmatprep.subr.bf16.mxu0 0
    %3920 = vmatpush2.bf16.msra.mxu0 0
    %3921 = vmatprep.subr.bf16.mxu0 0
    %3922 = vmatpush2.bf16.msra.mxu0 0
    %3923 = vmatprep.subr.bf16.mxu0 0
    %3924 = vmatpush2.bf16.msra.mxu0 0
    %3925 = vmatprep.subr.bf16.mxu0 0
    %3926 = vmatpush2.bf16.msra.mxu0 0
    %3927 = vmatprep.mubr.bf16.mxu0 0
    %3928 = vmatmul.mubr.bf16.gmra.mxu0 %v3853
    %v3929 = vpop.f32.mrf.mxu0
    %v3930 = vadd.f32 0.0, %v3929
    %v3931 = vpop.f32.mrf.mxu0
    %v3932 = vadd.f32 0.0, %v3931
    %v3933 = vpop.f32.mrf.mxu0
    %v3934 = vpop.f32.mrf.mxu0
    %3935 = vdwg.mxu0
    %v3936 = vadd.f32 %v3849, %v3889
    %v3937 = vadd.f32 %v3850, %v3891
    %v3938 = vadd.f32 %v3851, %v3930
    %v3939 = vadd.f32 %v3852, %v3932
    %v3940 = vmul.f32 %v3936, 0.5
    %v3941 = vmul.f32 %v3937, 0.5
    %v3942 = vmul.f32 %v3938, 0.5
    %v3943 = vtanh.pop %v3940
    %v3944 = vtanh.pop %v3941
    %v3945 = vtanh.pop %v3942
    %v3946 = vmul.f32 %v3943, 0.5
    %v3947 = vmul.f32 %v3944, 0.5
    %v3948 = vmul.f32 %v3945, 0.5
    %v3949 = vadd.f32 %v3946, 0.5
    %v3950 = vadd.f32 %v3947, 0.5
    %v3951 = vadd.f32 %v3948, 0.5
    %v3952 = vtanh.pop %v3939
    %v3953 = vmul.f32 %v3846, %v3437
    %v3954 = vmul.f32 %v3950, %v3953
    %v3955 = vmul.f32 %v3949, %v3952
    %v3956 = vadd.f32 %v3954, %v3955
    %v3957 = vtanh.pop %v3956
    %v3958 = vmul.f32 %v3951, %v3957
    %v3959 = vld [vmem:[#allocation3 + $0x60] sm:$0xff]
    %v3960 = vld [vmem:[#allocation3 + $0x68] sm:$0xff]
    %v3961 = vld [vmem:[#allocation3 + $0x70] sm:$0xff]
    %v3962 = vld [vmem:[#allocation3 + $0x78] sm:$0xff]
    %v3963 = vpack.c.bf16 %v3958, %v3958
    %3964 = vmatprep.subr.bf16.mxu0 %v3599
    %3965 = vmatpush1.bf16.msra.mxu0 %v3598
    %3966 = vmatprep.subr.bf16.mxu0 %v3595
    %3967 = vmatpush1.bf16.msra.mxu0 %v3594
    %3968 = vmatprep.subr.bf16.mxu0 %v3591
    %3969 = vmatpush1.bf16.msra.mxu0 %v3590
    %3970 = vmatprep.subr.bf16.mxu0 %v3587
    %3971 = vmatpush1.bf16.msra.mxu0 %v3586
    %3972 = vmatprep.subr.bf16.mxu0 %v3583
    %3973 = vmatpush1.bf16.msra.mxu0 %v3582
    %3974 = vmatprep.subr.bf16.mxu0 %v3579
    %3975 = vmatpush1.bf16.msra.mxu0 %v3578
    %3976 = vmatprep.subr.bf16.mxu0 %v3575
    %3977 = vmatpush1.bf16.msra.mxu0 %v3574
    %3978 = vmatprep.subr.bf16.mxu0 %v3571
    %3979 = vmatpush1.bf16.msra.mxu0 %v3570
    %3980 = vmatprep.subr.bf16.mxu0 0
    %3981 = vmatpush2.bf16.msra.mxu0 0
    %3982 = vmatprep.subr.bf16.mxu0 0
    %3983 = vmatpush2.bf16.msra.mxu0 0
    %3984 = vmatprep.subr.bf16.mxu0 0
    %3985 = vmatpush2.bf16.msra.mxu0 0
    %3986 = vmatprep.subr.bf16.mxu0 0
    %3987 = vmatpush2.bf16.msra.mxu0 0
    %3988 = vmatprep.subr.bf16.mxu0 0
    %3989 = vmatpush2.bf16.msra.mxu0 0
    %3990 = vmatprep.subr.bf16.mxu0 0
    %3991 = vmatpush2.bf16.msra.mxu0 0
    %3992 = vmatprep.subr.bf16.mxu0 0
    %3993 = vmatpush2.bf16.msra.mxu0 0
    %3994 = vmatprep.subr.bf16.mxu0 0
    %3995 = vmatpush2.bf16.msra.mxu0 0
    %3996 = vmatprep.mubr.bf16.mxu0 0
    %3997 = vmatmul.mubr.bf16.gmra.mxu0 %v3963
    %v3998 = vpop.f32.mrf.mxu0
    %v3999 = vadd.f32 0.0, %v3998
    %v4000 = vpop.f32.mrf.mxu0
    %v4001 = vadd.f32 0.0, %v4000
    %v4002 = vpop.f32.mrf.mxu0
    %v4003 = vpop.f32.mrf.mxu0
    %4004 = vdwg.mxu0
    %4005 = vmatprep.subr.bf16.mxu0 %v3601
    %4006 = vmatpush1.bf16.msra.mxu0 %v3600
    %4007 = vmatprep.subr.bf16.mxu0 %v3597
    %4008 = vmatpush1.bf16.msra.mxu0 %v3596
    %4009 = vmatprep.subr.bf16.mxu0 %v3593
    %4010 = vmatpush1.bf16.msra.mxu0 %v3592
    %4011 = vmatprep.subr.bf16.mxu0 %v3589
    %4012 = vmatpush1.bf16.msra.mxu0 %v3588
    %4013 = vmatprep.subr.bf16.mxu0 %v3585
    %4014 = vmatpush1.bf16.msra.mxu0 %v3584
    %4015 = vmatprep.subr.bf16.mxu0 %v3581
    %4016 = vmatpush1.bf16.msra.mxu0 %v3580
    %4017 = vmatprep.subr.bf16.mxu0 %v3577
    %4018 = vmatpush1.bf16.msra.mxu0 %v3576
    %4019 = vmatprep.subr.bf16.mxu0 %v3573
    %4020 = vmatpush1.bf16.msra.mxu0 %v3572
    %4021 = vmatprep.subr.bf16.mxu0 0
    %4022 = vmatpush2.bf16.msra.mxu0 0
    %4023 = vmatprep.subr.bf16.mxu0 0
    %4024 = vmatpush2.bf16.msra.mxu0 0
    %4025 = vmatprep.subr.bf16.mxu0 0
    %4026 = vmatpush2.bf16.msra.mxu0 0
    %4027 = vmatprep.subr.bf16.mxu0 0
    %4028 = vmatpush2.bf16.msra.mxu0 0
    %4029 = vmatprep.subr.bf16.mxu0 0
    %4030 = vmatpush2.bf16.msra.mxu0 0
    %4031 = vmatprep.subr.bf16.mxu0 0
    %4032 = vmatpush2.bf16.msra.mxu0 0
    %4033 = vmatprep.subr.bf16.mxu0 0
    %4034 = vmatpush2.bf16.msra.mxu0 0
    %4035 = vmatprep.subr.bf16.mxu0 0
    %4036 = vmatpush2.bf16.msra.mxu0 0
    %4037 = vmatprep.mubr.bf16.mxu0 0
    %4038 = vmatmul.mubr.bf16.gmra.mxu0 %v3963
    %v4039 = vpop.f32.mrf.mxu0
    %v4040 = vadd.f32 0.0, %v4039
    %v4041 = vpop.f32.mrf.mxu0
    %v4042 = vadd.f32 0.0, %v4041
    %v4043 = vpop.f32.mrf.mxu0
    %v4044 = vpop.f32.mrf.mxu0
    %4045 = vdwg.mxu0
    %v4046 = vadd.f32 %v3959, %v3999
    %v4047 = vadd.f32 %v3960, %v4001
    %v4048 = vadd.f32 %v3961, %v4040
    %v4049 = vadd.f32 %v3962, %v4042
    %v4050 = vmul.f32 %v4046, 0.5
    %v4051 = vmul.f32 %v4047, 0.5
    %v4052 = vmul.f32 %v4048, 0.5
    %v4053 = vtanh.pop %v4050
    %v4054 = vtanh.pop %v4051
    %v4055 = vtanh.pop %v4052
    %v4056 = vmul.f32 %v4053, 0.5
    %v4057 = vmul.f32 %v4054, 0.5
    %v4058 = vmul.f32 %v4055, 0.5
    %v4059 = vadd.f32 %v4056, 0.5
    %v4060 = vadd.f32 %v4057, 0.5
    %v4061 = vadd.f32 %v4058, 0.5
    %v4062 = vtanh.pop %v4049
    %v4063 = vmul.f32 %v3956, %v3437
    %v4064 = vmul.f32 %v4060, %v4063
    %v4065 = vmul.f32 %v4059, %v4062
    %v4066 = vadd.f32 %v4064, %v4065
    %v4067 = vtanh.pop %v4066
    %v4068 = vmul.f32 %v4061, %v4067
    %v4069 = vld [vmem:[#allocation3 + $0x80] sm:$0xff]
    %v4070 = vld [vmem:[#allocation3 + $0x88] sm:$0xff]
    %v4071 = vld [vmem:[#allocation3 + $0x90] sm:$0xff]
    %v4072 = vld [vmem:[#allocation3 + $0x98] sm:$0xff]
    %v4073 = vpack.c.bf16 %v4068, %v4068
    %4074 = vmatprep.subr.bf16.mxu0 %v3599
    %4075 = vmatpush1.bf16.msra.mxu0 %v3598
    %4076 = vmatprep.subr.bf16.mxu0 %v3595
    %4077 = vmatpush1.bf16.msra.mxu0 %v3594
    %4078 = vmatprep.subr.bf16.mxu0 %v3591
    %4079 = vmatpush1.bf16.msra.mxu0 %v3590
    %4080 = vmatprep.subr.bf16.mxu0 %v3587
    %4081 = vmatpush1.bf16.msra.mxu0 %v3586
    %4082 = vmatprep.subr.bf16.mxu0 %v3583
    %4083 = vmatpush1.bf16.msra.mxu0 %v3582
    %4084 = vmatprep.subr.bf16.mxu0 %v3579
    %4085 = vmatpush1.bf16.msra.mxu0 %v3578
    %4086 = vmatprep.subr.bf16.mxu0 %v3575
    %4087 = vmatpush1.bf16.msra.mxu0 %v3574
    %4088 = vmatprep.subr.bf16.mxu0 %v3571
    %4089 = vmatpush1.bf16.msra.mxu0 %v3570
    %4090 = vmatprep.subr.bf16.mxu0 0
    %4091 = vmatpush2.bf16.msra.mxu0 0
    %4092 = vmatprep.subr.bf16.mxu0 0
    %4093 = vmatpush2.bf16.msra.mxu0 0
    %4094 = vmatprep.subr.bf16.mxu0 0
    %4095 = vmatpush2.bf16.msra.mxu0 0
    %4096 = vmatprep.subr.bf16.mxu0 0
    %4097 = vmatpush2.bf16.msra.mxu0 0
    %4098 = vmatprep.subr.bf16.mxu0 0
    %4099 = vmatpush2.bf16.msra.mxu0 0
    %4100 = vmatprep.subr.bf16.mxu0 0
    %4101 = vmatpush2.bf16.msra.mxu0 0
    %4102 = vmatprep.subr.bf16.mxu0 0
    %4103 = vmatpush2.bf16.msra.mxu0 0
    %4104 = vmatprep.subr.bf16.mxu0 0
    %4105 = vmatpush2.bf16.msra.mxu0 0
    %4106 = vmatprep.mubr.bf16.mxu0 0
    %4107 = vmatmul.mubr.bf16.gmra.mxu0 %v4073
    %v4108 = vpop.f32.mrf.mxu0
    %v4109 = vadd.f32 0.0, %v4108
    %v4110 = vpop.f32.mrf.mxu0
    %v4111 = vadd.f32 0.0, %v4110
    %v4112 = vpop.f32.mrf.mxu0
    %v4113 = vpop.f32.mrf.mxu0
    %4114 = vdwg.mxu0
    %4115 = vmatprep.subr.bf16.mxu0 %v3601
    %4116 = vmatpush1.bf16.msra.mxu0 %v3600
    %4117 = vmatprep.subr.bf16.mxu0 %v3597
    %4118 = vmatpush1.bf16.msra.mxu0 %v3596
    %4119 = vmatprep.subr.bf16.mxu0 %v3593
    %4120 = vmatpush1.bf16.msra.mxu0 %v3592
    %4121 = vmatprep.subr.bf16.mxu0 %v3589
    %4122 = vmatpush1.bf16.msra.mxu0 %v3588
    %4123 = vmatprep.subr.bf16.mxu0 %v3585
    %4124 = vmatpush1.bf16.msra.mxu0 %v3584
    %4125 = vmatprep.subr.bf16.mxu0 %v3581
    %4126 = vmatpush1.bf16.msra.mxu0 %v3580
    %4127 = vmatprep.subr.bf16.mxu0 %v3577
    %4128 = vmatpush1.bf16.msra.mxu0 %v3576
    %4129 = vmatprep.subr.bf16.mxu0 %v3573
    %4130 = vmatpush1.bf16.msra.mxu0 %v3572
    %4131 = vmatprep.subr.bf16.mxu0 0
    %4132 = vmatpush2.bf16.msra.mxu0 0
    %4133 = vmatprep.subr.bf16.mxu0 0
    %4134 = vmatpush2.bf16.msra.mxu0 0
    %4135 = vmatprep.subr.bf16.mxu0 0
    %4136 = vmatpush2.bf16.msra.mxu0 0
    %4137 = vmatprep.subr.bf16.mxu0 0
    %4138 = vmatpush2.bf16.msra.mxu0 0
    %4139 = vmatprep.subr.bf16.mxu0 0
    %4140 = vmatpush2.bf16.msra.mxu0 0
    %4141 = vmatprep.subr.bf16.mxu0 0
    %4142 = vmatpush2.bf16.msra.mxu0 0
    %4143 = vmatprep.subr.bf16.mxu0 0
    %4144 = vmatpush2.bf16.msra.mxu0 0
    %4145 = vmatprep.subr.bf16.mxu0 0
    %4146 = vmatpush2.bf16.msra.mxu0 0
    %4147 = vmatprep.mubr.bf16.mxu0 0
    %4148 = vmatmul.mubr.bf16.gmra.mxu0 %v4073
    %v4149 = vpop.f32.mrf.mxu0
    %v4150 = vadd.f32 0.0, %v4149
    %v4151 = vpop.f32.mrf.mxu0
    %v4152 = vadd.f32 0.0, %v4151
    %v4153 = vpop.f32.mrf.mxu0
    %v4154 = vpop.f32.mrf.mxu0
    %4155 = vdwg.mxu0
    %v4156 = vadd.f32 %v4069, %v4109
    %v4157 = vadd.f32 %v4070, %v4111
    %v4158 = vadd.f32 %v4071, %v4150
    %v4159 = vadd.f32 %v4072, %v4152
    %v4160 = vmul.f32 %v4156, 0.5
    %v4161 = vmul.f32 %v4157, 0.5
    %v4162 = vmul.f32 %v4158, 0.5
    %v4163 = vtanh.pop %v4160
    %v4164 = vtanh.pop %v4161
    %v4165 = vtanh.pop %v4162
    %v4166 = vmul.f32 %v4163, 0.5
    %v4167 = vmul.f32 %v4164, 0.5
    %v4168 = vmul.f32 %v4165, 0.5
    %v4169 = vadd.f32 %v4166, 0.5
    %v4170 = vadd.f32 %v4167, 0.5
    %v4171 = vadd.f32 %v4168, 0.5
    %v4172 = vtanh.pop %v4159
    %v4173 = vmul.f32 %v4066, %v3437
    %v4174 = vmul.f32 %v4170, %v4173
    %v4175 = vmul.f32 %v4169, %v4172
    %v4176 = vadd.f32 %v4174, %v4175
    %v4177 = vtanh.pop %v4176
    %v4178 = vmul.f32 %v4171, %v4177
    %v4179 = vld [vmem:[#allocation3 + $0xa0] sm:$0xff]
    %v4180 = vld [vmem:[#allocation3 + $0xa8] sm:$0xff]
    %v4181 = vld [vmem:[#allocation3 + $0xb0] sm:$0xff]
    %v4182 = vld [vmem:[#allocation3 + $0xb8] sm:$0xff]
    %v4183 = vpack.c.bf16 %v4178, %v4178
    %4184 = vmatprep.subr.bf16.mxu0 %v3599
    %4185 = vmatpush1.bf16.msra.mxu0 %v3598
    %4186 = vmatprep.subr.bf16.mxu0 %v3595
    %4187 = vmatpush1.bf16.msra.mxu0 %v3594
    %4188 = vmatprep.subr.bf16.mxu0 %v3591
    %4189 = vmatpush1.bf16.msra.mxu0 %v3590
    %4190 = vmatprep.subr.bf16.mxu0 %v3587
    %4191 = vmatpush1.bf16.msra.mxu0 %v3586
    %4192 = vmatprep.subr.bf16.mxu0 %v3583
    %4193 = vmatpush1.bf16.msra.mxu0 %v3582
    %4194 = vmatprep.subr.bf16.mxu0 %v3579
    %4195 = vmatpush1.bf16.msra.mxu0 %v3578
    %4196 = vmatprep.subr.bf16.mxu0 %v3575
    %4197 = vmatpush1.bf16.msra.mxu0 %v3574
    %4198 = vmatprep.subr.bf16.mxu0 %v3571
    %4199 = vmatpush1.bf16.msra.mxu0 %v3570
    %4200 = vmatprep.subr.bf16.mxu0 0
    %4201 = vmatpush2.bf16.msra.mxu0 0
    %4202 = vmatprep.subr.bf16.mxu0 0
    %4203 = vmatpush2.bf16.msra.mxu0 0
    %4204 = vmatprep.subr.bf16.mxu0 0
    %4205 = vmatpush2.bf16.msra.mxu0 0
    %4206 = vmatprep.subr.bf16.mxu0 0
    %4207 = vmatpush2.bf16.msra.mxu0 0
    %4208 = vmatprep.subr.bf16.mxu0 0
    %4209 = vmatpush2.bf16.msra.mxu0 0
    %4210 = vmatprep.subr.bf16.mxu0 0
    %4211 = vmatpush2.bf16.msra.mxu0 0
    %4212 = vmatprep.subr.bf16.mxu0 0
    %4213 = vmatpush2.bf16.msra.mxu0 0
    %4214 = vmatprep.subr.bf16.mxu0 0
    %4215 = vmatpush2.bf16.msra.mxu0 0
    %4216 = vmatprep.mubr.bf16.mxu0 0
    %4217 = vmatmul.mubr.bf16.gmra.mxu0 %v4183
    %v4218 = vpop.f32.mrf.mxu0
    %v4219 = vadd.f32 0.0, %v4218
    %v4220 = vpop.f32.mrf.mxu0
    %v4221 = vadd.f32 0.0, %v4220
    %v4222 = vpop.f32.mrf.mxu0
    %v4223 = vpop.f32.mrf.mxu0
    %4224 = vdwg.mxu0
    %4225 = vmatprep.subr.bf16.mxu0 %v3601
    %4226 = vmatpush1.bf16.msra.mxu0 %v3600
    %4227 = vmatprep.subr.bf16.mxu0 %v3597
    %4228 = vmatpush1.bf16.msra.mxu0 %v3596
    %4229 = vmatprep.subr.bf16.mxu0 %v3593
    %4230 = vmatpush1.bf16.msra.mxu0 %v3592
    %4231 = vmatprep.subr.bf16.mxu0 %v3589
    %4232 = vmatpush1.bf16.msra.mxu0 %v3588
    %4233 = vmatprep.subr.bf16.mxu0 %v3585
    %4234 = vmatpush1.bf16.msra.mxu0 %v3584
    %4235 = vmatprep.subr.bf16.mxu0 %v3581
    %4236 = vmatpush1.bf16.msra.mxu0 %v3580
    %4237 = vmatprep.subr.bf16.mxu0 %v3577
    %4238 = vmatpush1.bf16.msra.mxu0 %v3576
    %4239 = vmatprep.subr.bf16.mxu0 %v3573
    %4240 = vmatpush1.bf16.msra.mxu0 %v3572
    %4241 = vmatprep.subr.bf16.mxu0 0
    %4242 = vmatpush2.bf16.msra.mxu0 0
    %4243 = vmatprep.subr.bf16.mxu0 0
    %4244 = vmatpush2.bf16.msra.mxu0 0
    %4245 = vmatprep.subr.bf16.mxu0 0
    %4246 = vmatpush2.bf16.msra.mxu0 0
    %4247 = vmatprep.subr.bf16.mxu0 0
    %4248 = vmatpush2.bf16.msra.mxu0 0
    %4249 = vmatprep.subr.bf16.mxu0 0
    %4250 = vmatpush2.bf16.msra.mxu0 0
    %4251 = vmatprep.subr.bf16.mxu0 0
    %4252 = vmatpush2.bf16.msra.mxu0 0
    %4253 = vmatprep.subr.bf16.mxu0 0
    %4254 = vmatpush2.bf16.msra.mxu0 0
    %4255 = vmatprep.subr.bf16.mxu0 0
    %4256 = vmatpush2.bf16.msra.mxu0 0
    %4257 = vmatprep.mubr.bf16.mxu0 0
    %4258 = vmatmul.mubr.bf16.gmra.mxu0 %v4183
    %v4259 = vpop.f32.mrf.mxu0
    %v4260 = vadd.f32 0.0, %v4259
    %v4261 = vpop.f32.mrf.mxu0
    %v4262 = vadd.f32 0.0, %v4261
    %v4263 = vpop.f32.mrf.mxu0
    %v4264 = vpop.f32.mrf.mxu0
    %4265 = vdwg.mxu0
    %v4266 = vadd.f32 %v4179, %v4219
    %v4267 = vadd.f32 %v4180, %v4221
    %v4268 = vadd.f32 %v4181, %v4260
    %v4269 = vadd.f32 %v4182, %v4262
    %v4270 = vmul.f32 %v4266, 0.5
    %v4271 = vmul.f32 %v4267, 0.5
    %v4272 = vmul.f32 %v4268, 0.5
    %v4273 = vtanh.pop %v4270
    %v4274 = vtanh.pop %v4271
    %v4275 = vtanh.pop %v4272
    %v4276 = vmul.f32 %v4273, 0.5
    %v4277 = vmul.f32 %v4274, 0.5
    %v4278 = vmul.f32 %v4275, 0.5
    %v4279 = vadd.f32 %v4276, 0.5
    %v4280 = vadd.f32 %v4277, 0.5
    %v4281 = vadd.f32 %v4278, 0.5
    %v4282 = vtanh.pop %v4269
    %v4283 = vmul.f32 %v4176, %v3437
    %v4284 = vmul.f32 %v4280, %v4283
    %v4285 = vmul.f32 %v4279, %v4282
    %v4286 = vadd.f32 %v4284, %v4285
    %v4287 = vtanh.pop %v4286
    %v4288 = vmul.f32 %v4281, %v4287
    %v4289 = vld [vmem:[#allocation3 + $0xc0] sm:$0xff]
    %v4290 = vld [vmem:[#allocation3 + $0xc8] sm:$0xff]
    %v4291 = vld [vmem:[#allocation3 + $0xd0] sm:$0xff]
    %v4292 = vld [vmem:[#allocation3 + $0xd8] sm:$0xff]
    %v4293 = vpack.c.bf16 %v4288, %v4288
    %4294 = vmatprep.subr.bf16.mxu0 %v3599
    %4295 = vmatpush1.bf16.msra.mxu0 %v3598
    %4296 = vmatprep.subr.bf16.mxu0 %v3595
    %4297 = vmatpush1.bf16.msra.mxu0 %v3594
    %4298 = vmatprep.subr.bf16.mxu0 %v3591
    %4299 = vmatpush1.bf16.msra.mxu0 %v3590
    %4300 = vmatprep.subr.bf16.mxu0 %v3587
    %4301 = vmatpush1.bf16.msra.mxu0 %v3586
    %4302 = vmatprep.subr.bf16.mxu0 %v3583
    %4303 = vmatpush1.bf16.msra.mxu0 %v3582
    %4304 = vmatprep.subr.bf16.mxu0 %v3579
    %4305 = vmatpush1.bf16.msra.mxu0 %v3578
    %4306 = vmatprep.subr.bf16.mxu0 %v3575
    %4307 = vmatpush1.bf16.msra.mxu0 %v3574
    %4308 = vmatprep.subr.bf16.mxu0 %v3571
    %4309 = vmatpush1.bf16.msra.mxu0 %v3570
    %4310 = vmatprep.subr.bf16.mxu0 0
    %4311 = vmatpush2.bf16.msra.mxu0 0
    %4312 = vmatprep.subr.bf16.mxu0 0
    %4313 = vmatpush2.bf16.msra.mxu0 0
    %4314 = vmatprep.subr.bf16.mxu0 0
    %4315 = vmatpush2.bf16.msra.mxu0 0
    %4316 = vmatprep.subr.bf16.mxu0 0
    %4317 = vmatpush2.bf16.msra.mxu0 0
    %4318 = vmatprep.subr.bf16.mxu0 0
    %4319 = vmatpush2.bf16.msra.mxu0 0
    %4320 = vmatprep.subr.bf16.mxu0 0
    %4321 = vmatpush2.bf16.msra.mxu0 0
    %4322 = vmatprep.subr.bf16.mxu0 0
    %4323 = vmatpush2.bf16.msra.mxu0 0
    %4324 = vmatprep.subr.bf16.mxu0 0
    %4325 = vmatpush2.bf16.msra.mxu0 0
    %4326 = vmatprep.mubr.bf16.mxu0 0
    %4327 = vmatmul.mubr.bf16.gmra.mxu0 %v4293
    %v4328 = vpop.f32.mrf.mxu0
    %v4329 = vadd.f32 0.0, %v4328
    %v4330 = vpop.f32.mrf.mxu0
    %v4331 = vadd.f32 0.0, %v4330
    %v4332 = vpop.f32.mrf.mxu0
    %v4333 = vpop.f32.mrf.mxu0
    %4334 = vdwg.mxu0
    %4335 = vmatprep.subr.bf16.mxu0 %v3601
    %4336 = vmatpush1.bf16.msra.mxu0 %v3600
    %4337 = vmatprep.subr.bf16.mxu0 %v3597
    %4338 = vmatpush1.bf16.msra.mxu0 %v3596
    %4339 = vmatprep.subr.bf16.mxu0 %v3593
    %4340 = vmatpush1.bf16.msra.mxu0 %v3592
    %4341 = vmatprep.subr.bf16.mxu0 %v3589
    %4342 = vmatpush1.bf16.msra.mxu0 %v3588
    %4343 = vmatprep.subr.bf16.mxu0 %v3585
    %4344 = vmatpush1.bf16.msra.mxu0 %v3584
    %4345 = vmatprep.subr.bf16.mxu0 %v3581
    %4346 = vmatpush1.bf16.msra.mxu0 %v3580
    %4347 = vmatprep.subr.bf16.mxu0 %v3577
    %4348 = vmatpush1.bf16.msra.mxu0 %v3576
    %4349 = vmatprep.subr.bf16.mxu0 %v3573
    %4350 = vmatpush1.bf16.msra.mxu0 %v3572
    %4351 = vmatprep.subr.bf16.mxu0 0
    %4352 = vmatpush2.bf16.msra.mxu0 0
    %4353 = vmatprep.subr.bf16.mxu0 0
    %4354 = vmatpush2.bf16.msra.mxu0 0
    %4355 = vmatprep.subr.bf16.mxu0 0
    %4356 = vmatpush2.bf16.msra.mxu0 0
    %4357 = vmatprep.subr.bf16.mxu0 0
    %4358 = vmatpush2.bf16.msra.mxu0 0
    %4359 = vmatprep.subr.bf16.mxu0 0
    %4360 = vmatpush2.bf16.msra.mxu0 0
    %4361 = vmatprep.subr.bf16.mxu0 0
    %4362 = vmatpush2.bf16.msra.mxu0 0
    %4363 = vmatprep.subr.bf16.mxu0 0
    %4364 = vmatpush2.bf16.msra.mxu0 0
    %4365 = vmatprep.subr.bf16.mxu0 0
    %4366 = vmatpush2.bf16.msra.mxu0 0
    %4367 = vmatprep.mubr.bf16.mxu0 0
    %4368 = vmatmul.mubr.bf16.gmra.mxu0 %v4293
    %v4369 = vpop.f32.mrf.mxu0
    %v4370 = vadd.f32 0.0, %v4369
    %v4371 = vpop.f32.mrf.mxu0
    %v4372 = vadd.f32 0.0, %v4371
    %v4373 = vpop.f32.mrf.mxu0
    %v4374 = vpop.f32.mrf.mxu0
    %4375 = vdwg.mxu0
    %v4376 = vadd.f32 %v4289, %v4329
    %v4377 = vadd.f32 %v4290, %v4331
    %v4378 = vadd.f32 %v4291, %v4370
    %v4379 = vadd.f32 %v4292, %v4372
    %v4380 = vmul.f32 %v4376, 0.5
    %v4381 = vmul.f32 %v4377, 0.5
    %v4382 = vmul.f32 %v4378, 0.5
    %v4383 = vtanh.pop %v4380
    %v4384 = vtanh.pop %v4381
    %v4385 = vtanh.pop %v4382
    %v4386 = vmul.f32 %v4383, 0.5
    %v4387 = vmul.f32 %v4384, 0.5
    %v4388 = vmul.f32 %v4385, 0.5
    %v4389 = vadd.f32 %v4386, 0.5
    %v4390 = vadd.f32 %v4387, 0.5
    %v4391 = vadd.f32 %v4388, 0.5
    %v4392 = vtanh.pop %v4379
    %v4393 = vmul.f32 %v4286, %v3437
    %v4394 = vmul.f32 %v4390, %v4393
    %v4395 = vmul.f32 %v4389, %v4392
    %v4396 = vadd.f32 %v4394, %v4395
    %v4397 = vtanh.pop %v4396
    %v4398 = vmul.f32 %v4391, %v4397
    %v4399 = vld [vmem:[#allocation3 + $0xe0] sm:$0xff]
    %v4400 = vld [vmem:[#allocation3 + $0xe8] sm:$0xff]
    %v4401 = vld [vmem:[#allocation3 + $0xf0] sm:$0xff]
    %v4402 = vld [vmem:[#allocation3 + $0xf8] sm:$0xff]
    %v4403 = vpack.c.bf16 %v4398, %v4398
    %4404 = vmatprep.subr.bf16.mxu0 %v3599
    %4405 = vmatpush1.bf16.msra.mxu0 %v3598
    %4406 = vmatprep.subr.bf16.mxu0 %v3595
    %4407 = vmatpush1.bf16.msra.mxu0 %v3594
    %4408 = vmatprep.subr.bf16.mxu0 %v3591
    %4409 = vmatpush1.bf16.msra.mxu0 %v3590
    %4410 = vmatprep.subr.bf16.mxu0 %v3587
    %4411 = vmatpush1.bf16.msra.mxu0 %v3586
    %4412 = vmatprep.subr.bf16.mxu0 %v3583
    %4413 = vmatpush1.bf16.msra.mxu0 %v3582
    %4414 = vmatprep.subr.bf16.mxu0 %v3579
    %4415 = vmatpush1.bf16.msra.mxu0 %v3578
    %4416 = vmatprep.subr.bf16.mxu0 %v3575
    %4417 = vmatpush1.bf16.msra.mxu0 %v3574
    %4418 = vmatprep.subr.bf16.mxu0 %v3571
    %4419 = vmatpush1.bf16.msra.mxu0 %v3570
    %4420 = vmatprep.subr.bf16.mxu0 0
    %4421 = vmatpush2.bf16.msra.mxu0 0
    %4422 = vmatprep.subr.bf16.mxu0 0
    %4423 = vmatpush2.bf16.msra.mxu0 0
    %4424 = vmatprep.subr.bf16.mxu0 0
    %4425 = vmatpush2.bf16.msra.mxu0 0
    %4426 = vmatprep.subr.bf16.mxu0 0
    %4427 = vmatpush2.bf16.msra.mxu0 0
    %4428 = vmatprep.subr.bf16.mxu0 0
    %4429 = vmatpush2.bf16.msra.mxu0 0
    %4430 = vmatprep.subr.bf16.mxu0 0
    %4431 = vmatpush2.bf16.msra.mxu0 0
    %4432 = vmatprep.subr.bf16.mxu0 0
    %4433 = vmatpush2.bf16.msra.mxu0 0
    %4434 = vmatprep.subr.bf16.mxu0 0
    %4435 = vmatpush2.bf16.msra.mxu0 0
    %4436 = vmatprep.mubr.bf16.mxu0 0
    %4437 = vmatmul.mubr.bf16.gmra.mxu0 %v4403
    %v4438 = vpop.f32.mrf.mxu0
    %v4439 = vadd.f32 0.0, %v4438
    %v4440 = vpop.f32.mrf.mxu0
    %v4441 = vadd.f32 0.0, %v4440
    %v4442 = vpop.f32.mrf.mxu0
    %v4443 = vpop.f32.mrf.mxu0
    %4444 = vdwg.mxu0
    %4445 = vmatprep.subr.bf16.mxu0 %v3601
    %4446 = vmatpush1.bf16.msra.mxu0 %v3600
    %4447 = vmatprep.subr.bf16.mxu0 %v3597
    %4448 = vmatpush1.bf16.msra.mxu0 %v3596
    %4449 = vmatprep.subr.bf16.mxu0 %v3593
    %4450 = vmatpush1.bf16.msra.mxu0 %v3592
    %4451 = vmatprep.subr.bf16.mxu0 %v3589
    %4452 = vmatpush1.bf16.msra.mxu0 %v3588
    %4453 = vmatprep.subr.bf16.mxu0 %v3585
    %4454 = vmatpush1.bf16.msra.mxu0 %v3584
    %4455 = vmatprep.subr.bf16.mxu0 %v3581
    %4456 = vmatpush1.bf16.msra.mxu0 %v3580
    %4457 = vmatprep.subr.bf16.mxu0 %v3577
    %4458 = vmatpush1.bf16.msra.mxu0 %v3576
    %4459 = vmatprep.subr.bf16.mxu0 %v3573
    %4460 = vmatpush1.bf16.msra.mxu0 %v3572
    %4461 = vmatprep.subr.bf16.mxu0 0
    %4462 = vmatpush2.bf16.msra.mxu0 0
    %4463 = vmatprep.subr.bf16.mxu0 0
    %4464 = vmatpush2.bf16.msra.mxu0 0
    %4465 = vmatprep.subr.bf16.mxu0 0
    %4466 = vmatpush2.bf16.msra.mxu0 0
    %4467 = vmatprep.subr.bf16.mxu0 0
    %4468 = vmatpush2.bf16.msra.mxu0 0
    %4469 = vmatprep.subr.bf16.mxu0 0
    %4470 = vmatpush2.bf16.msra.mxu0 0
    %4471 = vmatprep.subr.bf16.mxu0 0
    %4472 = vmatpush2.bf16.msra.mxu0 0
    %4473 = vmatprep.subr.bf16.mxu0 0
    %4474 = vmatpush2.bf16.msra.mxu0 0
    %4475 = vmatprep.subr.bf16.mxu0 0
    %4476 = vmatpush2.bf16.msra.mxu0 0
    %4477 = vmatprep.mubr.bf16.mxu0 0
    %4478 = vmatmul.mubr.bf16.gmra.mxu0 %v4403
    %v4479 = vpop.f32.mrf.mxu0
    %v4480 = vadd.f32 0.0, %v4479
    %v4481 = vpop.f32.mrf.mxu0
    %v4482 = vadd.f32 0.0, %v4481
    %v4483 = vpop.f32.mrf.mxu0
    %v4484 = vpop.f32.mrf.mxu0
    %4485 = vdwg.mxu0
    %v4486 = vadd.f32 %v4399, %v4439
    %v4487 = vadd.f32 %v4400, %v4441
    %v4488 = vadd.f32 %v4401, %v4480
    %v4489 = vadd.f32 %v4402, %v4482
    %v4490 = vmul.f32 %v4486, 0.5
    %v4491 = vmul.f32 %v4487, 0.5
    %v4492 = vmul.f32 %v4488, 0.5
    %v4493 = vtanh.pop %v4490
    %v4494 = vtanh.pop %v4491
    %v4495 = vtanh.pop %v4492
    %v4496 = vmul.f32 %v4493, 0.5
    %v4497 = vmul.f32 %v4494, 0.5
    %v4498 = vmul.f32 %v4495, 0.5
    %v4499 = vadd.f32 %v4496, 0.5
    %v4500 = vadd.f32 %v4497, 0.5
    %v4501 = vadd.f32 %v4498, 0.5
    %v4502 = vtanh.pop %v4489
    %v4503 = vmul.f32 %v4396, %v3437
    %v4504 = vmul.f32 %v4500, %v4503
    %v4505 = vmul.f32 %v4499, %v4502
    %v4506 = vadd.f32 %v4504, %v4505
    %v4507 = vtanh.pop %v4506
    %v4508 = vmul.f32 %v4501, %v4507
    %v4509 = vpack.c.bf16 %v4508, %v4508
    %v4510 = vld [vmem:[#allocation8 + $0x400] sm:$0xff]
    %v4511 = vld [vmem:[#allocation8 + $0x410] sm:$0xff]
    %v4512 = vld [vmem:[#allocation8 + $0x420] sm:$0xff]
    %v4513 = vld [vmem:[#allocation8 + $0x430] sm:$0xff]
    %v4514 = vld [vmem:[#allocation8 + $0x440] sm:$0xff]
    %v4515 = vld [vmem:[#allocation8 + $0x450] sm:$0xff]
    %v4516 = vld [vmem:[#allocation8 + $0x460] sm:$0xff]
    %v4517 = vld [vmem:[#allocation8 + $0x470] sm:$0xff]
    %v4518 = vld [vmem:[#allocation8 + $0x480] sm:$0xff]
    %v4519 = vld [vmem:[#allocation8 + $0x490] sm:$0xff]
    %v4520 = vld [vmem:[#allocation8 + $0x4a0] sm:$0xff]
    %v4521 = vld [vmem:[#allocation8 + $0x4b0] sm:$0xff]
    %v4522 = vld [vmem:[#allocation8 + $0x4c0] sm:$0xff]
    %v4523 = vld [vmem:[#allocation8 + $0x4d0] sm:$0xff]
    %v4524 = vld [vmem:[#allocation8 + $0x4e0] sm:$0xff]
    %v4525 = vld [vmem:[#allocation8 + $0x4f0] sm:$0xff]
    %s4526 = scalar_lea.vmem %s3, 2
    %v4527 = vld [vmem:[%s4526] ss:$8 sm:$0xf]
    %v4529 = vlaneseq
    %v4530 = vshrl.u32 %v4529, 7
    %v4531 = vsub.s32 0, %v4530
    %v4532 = vrot.slane %v4527, %v4531
    %v4550 = vunpack.c.l.b16 %v4510
    %v4551 = vunpack.c.h.b16 %v4510
    %v4552 = vunpack.c.l.b16 %v4511
    %v4553 = vunpack.c.h.b16 %v4511
    %v4554 = vunpack.c.l.b16 %v4512
    %v4555 = vunpack.c.h.b16 %v4512
    %v4556 = vunpack.c.l.b16 %v4513
    %v4557 = vunpack.c.h.b16 %v4513
    %v4558 = vunpack.c.l.b16 %v4514
    %v4559 = vunpack.c.h.b16 %v4514
    %v4560 = vunpack.c.l.b16 %v4515
    %v4561 = vunpack.c.h.b16 %v4515
    %v4562 = vunpack.c.l.b16 %v4516
    %v4563 = vunpack.c.h.b16 %v4516
    %v4564 = vunpack.c.l.b16 %v4517
    %v4565 = vunpack.c.h.b16 %v4517
    %v4566 = vunpack.c.l.b16 %v4518
    %v4567 = vunpack.c.h.b16 %v4518
    %v4568 = vunpack.c.l.b16 %v4519
    %v4569 = vunpack.c.h.b16 %v4519
    %v4570 = vunpack.c.l.b16 %v4520
    %v4571 = vunpack.c.h.b16 %v4520
    %v4572 = vunpack.c.l.b16 %v4521
    %v4573 = vunpack.c.h.b16 %v4521
    %v4574 = vunpack.c.l.b16 %v4522
    %v4575 = vunpack.c.h.b16 %v4522
    %v4576 = vunpack.c.l.b16 %v4523
    %v4577 = vunpack.c.h.b16 %v4523
    %v4578 = vunpack.c.l.b16 %v4524
    %v4579 = vunpack.c.h.b16 %v4524
    %v4580 = vunpack.c.l.b16 %v4525
    %v4581 = vunpack.c.h.b16 %v4525
    %v4582 = vpack.c.b16 %v4552, %v4550
    %v4583 = vpack.c.b16 %v4553, %v4551
    %v4584 = vpack.c.b16 %v4556, %v4554
    %v4585 = vpack.c.b16 %v4557, %v4555
    %v4586 = vpack.c.b16 %v4560, %v4558
    %v4587 = vpack.c.b16 %v4561, %v4559
    %v4588 = vpack.c.b16 %v4564, %v4562
    %v4589 = vpack.c.b16 %v4565, %v4563
    %v4590 = vpack.c.b16 %v4568, %v4566
    %v4591 = vpack.c.b16 %v4569, %v4567
    %v4592 = vpack.c.b16 %v4572, %v4570
    %v4593 = vpack.c.b16 %v4573, %v4571
    %v4594 = vpack.c.b16 %v4576, %v4574
    %v4595 = vpack.c.b16 %v4577, %v4575
    %v4596 = vpack.c.b16 %v4580, %v4578
    %v4597 = vpack.c.b16 %v4581, %v4579
    %4614 = vmatprep.subr.bf16.mxu0 %v4597
    %4615 = vmatpush1.bf16.msra.mxu0 %v4596
    %4616 = vmatprep.subr.bf16.mxu0 %v4595
    %4617 = vmatpush1.bf16.msra.mxu0 %v4594
    %4618 = vmatprep.subr.bf16.mxu0 %v4593
    %4619 = vmatpush1.bf16.msra.mxu0 %v4592
    %4620 = vmatprep.subr.bf16.mxu0 %v4591
    %4621 = vmatpush1.bf16.msra.mxu0 %v4590
    %4622 = vmatprep.subr.bf16.mxu0 %v4589
    %4623 = vmatpush1.bf16.msra.mxu0 %v4588
    %4624 = vmatprep.subr.bf16.mxu0 %v4587
    %4625 = vmatpush1.bf16.msra.mxu0 %v4586
    %4626 = vmatprep.subr.bf16.mxu0 %v4585
    %4627 = vmatpush1.bf16.msra.mxu0 %v4584
    %4628 = vmatprep.subr.bf16.mxu0 %v4583
    %4629 = vmatpush1.bf16.msra.mxu0 %v4582
    %4630 = vmatprep.subr.bf16.mxu0 0
    %4631 = vmatpush2.bf16.msra.mxu0 0
    %4632 = vmatprep.subr.bf16.mxu0 0
    %4633 = vmatpush2.bf16.msra.mxu0 0
    %4634 = vmatprep.subr.bf16.mxu0 0
    %4635 = vmatpush2.bf16.msra.mxu0 0
    %4636 = vmatprep.subr.bf16.mxu0 0
    %4637 = vmatpush2.bf16.msra.mxu0 0
    %4638 = vmatprep.subr.bf16.mxu0 0
    %4639 = vmatpush2.bf16.msra.mxu0 0
    %4640 = vmatprep.subr.bf16.mxu0 0
    %4641 = vmatpush2.bf16.msra.mxu0 0
    %4642 = vmatprep.subr.bf16.mxu0 0
    %4643 = vmatpush2.bf16.msra.mxu0 0
    %4644 = vmatprep.subr.bf16.mxu0 0
    %4645 = vmatpush2.bf16.msra.mxu0 0
    %4646 = vmatprep.mubr.bf16.mxu0 0
    %4647 = vmatmul.mubr.bf16.gmra.mxu0 %v4509
    %v4648 = vpop.f32.mrf.mxu0
    %v4649 = vadd.f32 %v4532, %v4648
    %v4650 = vpop.f32.mrf.mxu0
    %v4651 = vpop.f32.mrf.mxu0
    %v4652 = vpop.f32.mrf.mxu0
    %4653 = vdwg.mxu0
    %vm4654 = vcmask 15360
    %4655 = vst.msk [vmem:[%s4] sm:$0xff] %vm4654, %v4649
    // Predicated region
    $region26: #{rnn_forward.1} parent=1 // pred_check
      _
    $region27: #{rnn_forward.1} parent=1 // pred_check_branch
      %4657 = sbr.rel (0) target = $region29
    $region28: #{rnn_forward.1} parent=1 // pred_region
      _
    $region29: #{rnn_forward.1} parent=1 // pred_fallthru
      _
    // Predicated region
    $region30: #{rnn_forward.1} parent=1 // pred_check
      _
    $region31: #{rnn_forward.1} parent=1 // pred_check_branch
      %4659 = sbr.rel (0) target = $region33
    $region32: #{rnn_forward.1} parent=1 // pred_region
      _
    $region33: #{rnn_forward.1} parent=1 // pred_fallthru
      _
    %4660 = vsyncpa [#allocation6], 1
    %4661 = vsyncpa [#allocation7], 1

</llo_original>
